<compile_context>
chip_gen: v5e
topology: v5e:2x2
jax: 0.10.0
libtpu: 0.0.40
codegen_flags: <defaults>
</compile_context>

<pallas_src>
import functools

import jax
import jax.numpy as jnp
from jax.experimental import pallas as pl
from jax.experimental.pallas import tpu as pltpu

MXU_DTYPE = jnp.bfloat16      # matmul operand dtype; accumulation stays f32


def _vmem_limit(est_bytes):
    # floor at the v6e/v7x default (32 MiB), cap at v7x physical VMEM (64 MiB)
    return int(min(max(est_bytes, 32 * 1024 * 1024), 64 * 1024 * 1024))


# ---------------------------------------------------------------------------
# Pallas kernels
# ---------------------------------------------------------------------------
def _dense_bn_relu_kernel(x_ref, w_ref, s_ref, b_ref, o_ref, *, relu):
    # y = [relu]((x @ w) * scale + shift)   for one (tile, Cin) row tile
    y = jnp.dot(x_ref[...].astype(MXU_DTYPE), w_ref[...],
                preferred_element_type=jnp.float32)
    y = y * s_ref[...] + b_ref[...]
    if relu:
        y = jnp.maximum(y, 0.0)
    o_ref[...] = y


def dense_bn_relu(x2d, w, scale, shift, relu=True, tile=256):
    """Fused Linear (+ folded eval-mode BN) (+ ReLU) over rows of x2d (N, Cin)."""
    n, cin = x2d.shape
    cout = w.shape[1]
    grid = pl.cdiv(n, tile)            # ragged last tile -> Pallas masks the store
    est = 4 * (2 * tile * (cin + cout) + cin * cout) + (4 << 20)
    return pl.pallas_call(
        functools.partial(_dense_bn_relu_kernel, relu=relu),
        out_shape=jax.ShapeDtypeStruct((n, cout), jnp.float32),
        grid=(grid,),
        in_specs=[
            pl.BlockSpec((tile, cin), lambda i: (i, 0)),
            pl.BlockSpec((cin, cout), lambda i: (0, 0)),
            pl.BlockSpec((1, cout), lambda i: (0, 0)),
            pl.BlockSpec((1, cout), lambda i: (0, 0)),
        ],
        out_specs=pl.BlockSpec((tile, cout), lambda i: (i, 0)),
        compiler_params=pltpu.CompilerParams(
            dimension_semantics=("parallel",),
            vmem_limit_bytes=_vmem_limit(est)),
    )(x2d, w.astype(MXU_DTYPE), scale.reshape(1, cout), shift.reshape(1, cout))


def _td_fused_kernel(g_ref, w_ref, s_ref, b_ref, o_ref):
    """Fused Linear + foldedBN + ReLU + neighbor max-pool (TransitionDown).

    g_ref: (tile_m, nsample, Cin) grouped neighbors; w_ref: (Cin, Cout).
    The tile is flattened into a single (tile_m*nsample, Cin) MXU matmul and
    only the pooled (tile_m, Cout) result is written back — the
    (m, nsample, Cout) intermediate never leaves VMEM.
    """
    tm, ns, cin = g_ref.shape
    cout = w_ref.shape[1]
    x = g_ref[...].reshape(tm * ns, cin)           # free relayout: ns % 8 == 0
    y = jnp.dot(x.astype(MXU_DTYPE), w_ref[...],
                preferred_element_type=jnp.float32)
    y = jnp.maximum(y * s_ref[...] + b_ref[...], 0.0)         # folded BN + ReLU
    o_ref[...] = jnp.max(y.reshape(tm, ns, cout), axis=1)     # MaxPool1d(nsample)


def td_dense_maxpool(g, w, scale, shift, tile_m=128):
    """g: (m, nsample, Cin) grouped neighbors -> (m, Cout) pooled features."""
    m, ns, cin = g.shape
    cout = w.shape[1]
    grid = pl.cdiv(m, tile_m)          # tile_m=128 keeps grid >= 2 (v7x megacore)
    est = (4 * (2 * tile_m * (ns * cin + cout) + tile_m * ns * cout + cin * cout)
           + (4 << 20))
    return pl.pallas_call(
        _td_fused_kernel,
        out_shape=jax.ShapeDtypeStruct((m, cout), jnp.float32),
        grid=(grid,),
        in_specs=[
            pl.BlockSpec((tile_m, ns, cin), lambda i: (i, 0, 0)),
            pl.BlockSpec((cin, cout), lambda i: (0, 0)),
            pl.BlockSpec((1, cout), lambda i: (0, 0)),
            pl.BlockSpec((1, cout), lambda i: (0, 0)),
        ],
        out_specs=pl.BlockSpec((tile_m, cout), lambda i: (i, 0)),
        compiler_params=pltpu.CompilerParams(
            dimension_semantics=("parallel",),
            vmem_limit_bytes=_vmem_limit(est)),
    )(g, w.astype(MXU_DTYPE), scale.reshape(1, cout), shift.reshape(1, cout))


# ---------------------------------------------------------------------------
# BatchNorm folding (eval mode: running stats -> per-channel affine)
# ---------------------------------------------------------------------------
def fold_bn(bn, eps=1e-5):
    scale = bn['gamma'] * jax.lax.rsqrt(bn['var'] + eps)
    shift = bn['beta'] - scale * bn['mean']
    return scale, shift


# ---------------------------------------------------------------------------
# pointops equivalents (plain-JAX glue; offsets are static Python ints)
# ---------------------------------------------------------------------------
def segments(o):
    out, s = [], 0
    for e in o:
        out.append((s, int(e)))
        s = int(e)
    return out


def downsample_offsets(o, stride):
    n_o = [int(o[0]) // stride]
    count = n_o[0]
    for i in range(1, len(o)):
        count += (int(o[i]) - int(o[i - 1])) // stride
        n_o.append(count)
    return tuple(n_o)


def sqdist(a, b):
    d = (jnp.sum(a * a, axis=1)[:, None] + jnp.sum(b * b, axis=1)[None, :]
         - 2.0 * a @ b.T)
    return jnp.maximum(d, 0.0)


def knn_segment(p_ref, p_query, k):
    # emulates pointops.knnquery: k nearest (ascending distance) within a segment
    r = p_ref.shape[0]
    d = sqdist(p_query, p_ref)
    if r < k:
        d = jnp.concatenate(
            [d, jnp.full((d.shape[0], k - r), 1e10, jnp.float32)], axis=1)
    _, idx = jax.lax.top_k(-d, k)
    if r < k:
        idx = jnp.where(idx >= r, 0, idx)
    return idx


def fps_segment(p_seg, m):
    # furthest point sampling; first sample is the segment's first point
    n = p_seg.shape[0]

    def body(i, carry):
        dists, idxs, last = carry
        d = jnp.sum((p_seg - p_seg[last]) ** 2, axis=1)
        dists = jnp.minimum(dists, d)
        nxt = jnp.argmax(dists).astype(jnp.int32)
        return dists, idxs.at[i].set(nxt), nxt

    dists = jnp.full((n,), 1e10, jnp.float32)
    idxs = jnp.zeros((m,), jnp.int32)
    _, idxs, _ = jax.lax.fori_loop(1, m, body, (dists, idxs, jnp.int32(0)))
    return idxs


def furthest_sampling(p, o, n_o):
    out = []
    for (s, e), (ns_, ne_) in zip(segments(o), segments(n_o)):
        out.append(fps_segment(p[s:e], ne_ - ns_) + s)
    return jnp.concatenate(out, axis=0)


def queryandgroup(nsample, p, new_p, feat, o, n_o, use_xyz=True):
    outs = []
    for (s, e), (ns_, ne_) in zip(segments(o), segments(n_o)):
        p_ref, q, f = p[s:e], new_p[ns_:ne_], feat[s:e]
        idx = knn_segment(p_ref, q, nsample)
        g_xyz = p_ref[idx] - q[:, None, :]
        g_feat = f[idx]
        outs.append(jnp.concatenate([g_xyz, g_feat], axis=-1) if use_xyz else g_feat)
    return jnp.concatenate(outs, axis=0)


# ---------------------------------------------------------------------------
# TransitionDown forward (functional mirror of the PyTorch module)
# ---------------------------------------------------------------------------
def transition_down_forward(params, p, x, o, stride, nsample):
    scale, shift = fold_bn(params['bn'])
    if stride == 1:
        return p, dense_bn_relu(x, params['w'], scale, shift, relu=True), o
    n_o = downsample_offsets(o, stride)
    idx = furthest_sampling(p, o, n_o)                            # pointops glue
    n_p = p[idx]
    g = queryandgroup(nsample, p, n_p, x, o, n_o, use_xyz=True)   # (m, ns, 3+Cin)
    y = td_dense_maxpool(g, params['w'], scale, shift)            # fused kernel
    return n_p, y, n_o


# ---------------------------------------------------------------------------
# Deterministic parameter init
# ---------------------------------------------------------------------------
def init_bn(key, c):
    k1, k2, k3, k4 = jax.random.split(key, 4)
    return {'gamma': 1.0 + 0.02 * jax.random.normal(k1, (c,), jnp.float32),
            'beta': 0.02 * jax.random.normal(k2, (c,), jnp.float32),
            'mean': 0.02 * jax.random.normal(k3, (c,), jnp.float32),
            'var': 1.0 + 0.05 * jax.random.uniform(k4, (c,), jnp.float32)}


def init_transition_down(key, in_planes, out_planes, stride):
    kw, kb = jax.random.split(key)
    cin = in_planes if stride == 1 else 3 + in_planes
    w = jax.random.normal(kw, (cin, out_planes), jnp.float32) / jnp.sqrt(float(cin))
    return {'w': w, 'bn': init_bn(kb, out_planes)}


# ---------------------------------------------------------------------------
if __name__ == "__main__":
    key = jax.random.PRNGKey(0)
    k1, k2, k3, k4 = jax.random.split(key, 4)

    # two point clouds of 500 points each (exercises ragged last-tile masking)
    N = 1000
    o0 = (500, 1000)                       # cumulative batch offsets (static)
    in_planes, out_planes = 32, 64
    stride, nsample = 4, 16

    p0 = jax.random.uniform(k1, (N, 3), jnp.float32)
    x0 = jax.random.normal(k2, (N, in_planes), jnp.float32)

    td_params = init_transition_down(k3, in_planes, out_planes, stride)  # stride 4
    td1_params = init_transition_down(k4, in_planes, out_planes, 1)      # stride 1

    fwd = jax.jit(transition_down_forward, static_argnums=(3, 4, 5))

    # stride != 1: FPS + kNN group + fused Linear/BN/ReLU/MaxPool Pallas kernel
    n_p, y, n_o = fwd(td_params, p0, x0, o0, stride, nsample)
    jax.block_until_ready((n_p, y))
    assert n_p.shape == (N // stride, 3)
    assert y.shape == (N // stride, out_planes)
    assert tuple(int(v) for v in n_o) == (125, 250)

    # stride == 1: fused Linear/BN/ReLU Pallas kernel
    _, y1, _ = fwd(td1_params, p0, x0, o0, 1, nsample)
    jax.block_until_ready(y1)
    assert y1.shape == (N, out_planes)

    # numeric sanity check: run the kernels on the SAME grouped tensor as a
    # pure-JAX f32 reference (loose tolerance: bf16 MXU operands)
    n_o_ref = downsample_offsets(o0, stride)
    idx_ref = furthest_sampling(p0, o0, n_o_ref)
    g_ref = queryandgroup(nsample, p0, p0[idx_ref], x0, o0, n_o_ref, use_xyz=True)
    scale4, shift4 = fold_bn(td_params['bn'])
    y_kern = td_dense_maxpool(g_ref, td_params['w'], scale4, shift4)
    ref = jnp.max(jnp.maximum(g_ref @ td_params['w'] * scale4 + shift4, 0.0), axis=1)
    assert float(jnp.max(jnp.abs(y_kern - ref))) < 0.1

    scale1, shift1 = fold_bn(td1_params['bn'])
    y1_kern = dense_bn_relu(x0, td1_params['w'], scale1, shift1, relu=True)
    ref1 = jnp.maximum(x0 @ td1_params['w'] * scale1 + shift1, 0.0)
    assert float(jnp.max(jnp.abs(y1_kern - ref1))) < 0.1

    print("KERNEL_OK")
</pallas_src>

<mosaic_0001>
module attributes {stable_mosaic.version = 11 : i64} {
  func.func @_td_fused_kernel(%arg0: i32, %arg1: memref<128x16x35xf32, #tpu.memory_space<vmem>>, %arg2: memref<35x64xbf16, #tpu.memory_space<vmem>>, %arg3: memref<1x64xf32, #tpu.memory_space<vmem>>, %arg4: memref<1x64xf32, #tpu.memory_space<vmem>>, %arg5: memref<128x64xf32, #tpu.memory_space<vmem>>) attributes {dimension_semantics = [#tpu.dimension_semantics<parallel>], iteration_bounds = array<i64: 2>, scalar_prefetch = 0 : i64, scratch_operands = 0 : i64, tpu.core_type = #tpu.core_type<tc>, window_params = [{transform_indices = @transform_0, window_bounds = array<i64: 128, 16, 35>}, {pipeline_mode = #tpu.pipeline_mode<synchronous>, transform_indices = @transform_1, window_bounds = array<i64: 35, 64>}, {pipeline_mode = #tpu.pipeline_mode<synchronous>, transform_indices = @transform_2, window_bounds = array<i64: 1, 64>}, {pipeline_mode = #tpu.pipeline_mode<synchronous>, transform_indices = @transform_3, window_bounds = array<i64: 1, 64>}, {transform_indices = @transform_4, window_bounds = array<i64: 128, 64>}]} {
    %c0 = arith.constant 0 : index
    %c0_0 = arith.constant 0 : index
    %c0_1 = arith.constant 0 : index
    %0 = vector.load %arg1[%c0, %c0_0, %c0_1] : memref<128x16x35xf32, #tpu.memory_space<vmem>>, vector<128x16x35xf32>
    %1 = vector.shape_cast %0 : vector<128x16x35xf32> to vector<2048x35xf32>
    %2 = arith.truncf %1 : vector<2048x35xf32> to vector<2048x35xbf16>
    %c0_2 = arith.constant 0 : index
    %c0_3 = arith.constant 0 : index
    %3 = vector.load %arg2[%c0_2, %c0_3] : memref<35x64xbf16, #tpu.memory_space<vmem>>, vector<35x64xbf16>
    %cst = arith.constant dense<0.000000e+00> : vector<2048x64xf32>
    %4 = tpu.matmul %2, %3, %cst {dimension_numbers = #tpu.dot_dimension_numbers<[1], [0], [0], [1], [0, 0, 1, 1], [], []>} : vector<2048x35xbf16>, vector<35x64xbf16>, vector<2048x64xf32> -> vector<2048x64xf32>
    %c0_4 = arith.constant 0 : index
    %c0_5 = arith.constant 0 : index
    %5 = vector.load %arg3[%c0_4, %c0_5] : memref<1x64xf32, #tpu.memory_space<vmem>>, vector<1x64xf32>
    %6 = vector.broadcast %5 : vector<1x64xf32> to vector<2048x64xf32>
    %7 = arith.mulf %4, %6 : vector<2048x64xf32>
    %c0_6 = arith.constant 0 : index
    %c0_7 = arith.constant 0 : index
    %8 = vector.load %arg4[%c0_6, %c0_7] : memref<1x64xf32, #tpu.memory_space<vmem>>, vector<1x64xf32>
    %9 = vector.broadcast %8 : vector<1x64xf32> to vector<2048x64xf32>
    %10 = arith.addf %7, %9 : vector<2048x64xf32>
    %cst_8 = arith.constant 0.000000e+00 : f32
    %11 = vector.broadcast %cst_8 : f32 to vector<2048x64xf32>
    %12 = arith.maximumf %10, %11 : vector<2048x64xf32>
    %13 = vector.shape_cast %12 : vector<2048x64xf32> to vector<128x16x64xf32>
    %cst_9 = arith.constant dense<0xFF800000> : vector<128x64xf32>
    %14 = vector.multi_reduction <maximumf>, %13, %cst_9 [1] : vector<128x16x64xf32> to vector<128x64xf32>
    %c0_10 = arith.constant 0 : index
    %c0_11 = arith.constant 0 : index
    %15 = vector.load %arg5[%c0_10, %c0_11] : memref<128x64xf32, #tpu.memory_space<vmem>>, vector<128x64xf32>
    tpu.vector_store %arg5[%c0_10, %c0_11], %14 {strides = array<i32>} : memref<128x64xf32, #tpu.memory_space<vmem>>, vector<128x64xf32>,
    return
  }
  func.func @transform_0(%arg0: i32) -> (i32, i32, i32) {
    %c0_i32 = arith.constant 0 : i32
    %c0_i32_0 = arith.constant 0 : i32
    %c0_i32_1 = arith.constant 0 : i32
    return %arg0, %c0_i32, %c0_i32_0 : i32, i32, i32
  }
  func.func @transform_1(%arg0: i32) -> (i32, i32) {
    %c0_i32 = arith.constant 0 : i32
    %c0_i32_0 = arith.constant 0 : i32
    %c0_i32_1 = arith.constant 0 : i32
    return %c0_i32, %c0_i32_0 : i32, i32
  }
  func.func @transform_2(%arg0: i32) -> (i32, i32) {
    %c0_i32 = arith.constant 0 : i32
    %c0_i32_0 = arith.constant 0 : i32
    %c0_i32_1 = arith.constant 0 : i32
    return %c0_i32, %c0_i32_0 : i32, i32
  }
  func.func @transform_3(%arg0: i32) -> (i32, i32) {
    %c0_i32 = arith.constant 0 : i32
    %c0_i32_0 = arith.constant 0 : i32
    %c0_i32_1 = arith.constant 0 : i32
    return %c0_i32, %c0_i32_0 : i32, i32
  }
  func.func @transform_4(%arg0: i32) -> (i32, i32) {
    %c0_i32 = arith.constant 0 : i32
    %c0_i32_0 = arith.constant 0 : i32
    return %arg0, %c0_i32 : i32, i32
  }
}

</mosaic_0001>

<llo_original>
// kernel: custom-call.1
$region0: #{custom-call.1}
  %s0 = inlined_call_operand.vmem [shape: f32[500], index: 0, kind: output, shape index: {}]

// kernel: transition_down_forward.1
$region0: #{transition_down_forward.1}
  #allocation0 [shape = 'u32[]', space=smem, size = 0x4, offset = 0x4, fixed_abs, tag = 'smem constant byte address 0x4 - core index']
  #allocation1 [shape = 'u32[72,128]{1,0:T(1,128)}', space=vmem, size = 0x9000, scoped, tag = 'internal scratch']
  %s0 = inlined_call_operand.vmem [shape: f32[250,16,35], index: 0, kind: input, shape index: {}]
  %s1 = inlined_call_operand.vmem [shape: bf16[35,64], index: 1, kind: input, shape index: {}]
  %s2 = inlined_call_operand.vmem [shape: f32[1,64], index: 2, kind: input, shape index: {}]
  %s3 = inlined_call_operand.vmem [shape: f32[1,64], index: 3, kind: input, shape index: {}]
  %s4 = inlined_call_operand.vmem [shape: f32[250,64], index: 4, kind: output, shape index: {}]
  %s5 = sld [smem:[#allocation0]]
  $region49: #{transition_down_forward.1} parent=0
    _
  %s7 = ssub.s32 1, %s5
  %s8 = scalar_select 0, %s7, %s5
  loop: start=0, step=1, limit=4
  $region2: #{transition_down_forward.1} parent=0 // loop_pre_header
    _
  $region3: #{transition_down_forward.1} parent=0 // loop_header
    %s10 = sphi 0, %s14
    %p11 = scmp.ge.s32.totalorder %s10, 4
    %s20 = sphi 0, %s22
    %s23 = sphi 0, %s20
    %s24 = sphi 0, %s23
    %s40 = sphi 0, %s24
    %s44 = sphi 0, %s44
    %s46 = sphi 0, %s44
    %s47 = sphi 0, %s46
    %s61 = sphi 0, %s47
    %s65 = sphi 0, %s65
    %s67 = sphi 0, %s65
    %s68 = sphi 0, %s67
    %s82 = sphi 0, %s68
    %s86 = sphi 0, %s86
    %s88 = sphi 0, %s86
    %s89 = sphi 0, %s88
    %s103 = sphi 0, %s89
    %s109 = sphi 0, %s111
    %s112 = sphi 0, %s109
    %s113 = sphi 0, %s112
    %s129 = sphi 0, %s113
  $region4: #{transition_down_forward.1} parent=0 // loop_header_branch
    %13 = sbr.rel (%p11) target = $region8
  $region5: #{transition_down_forward.1} parent=0 // loop_body
    %s15 = ssub.s32 %s10, 1
    %s16 = ssub.s32 %s10, 2
    %s17 = sadd.s32 %s10, 1
    %s18 = ssub.s32 %s10, %s17
    %p19 = scmp.eq.s32.totalorder %s18, 0
    %s21 = sadd.s32 %s20, 1
    %s22 = scalar_select %p19, %s20, %s21
    %p25 = pneg %p19
    %p26 = scmp.eq.s32.totalorder %s10, 1
    %p27 = por %p25, %p26
    %p28 = scmp.ne.s32.totalorder %s20, %s23
    %p29 = scmp.eq.s32.totalorder %s10, 0
    %p30 = por %p28, %p29
    %p31 = scmp.ne.s32.totalorder %s20, %s23
    %p32 = scmp.eq.s32.totalorder %s15, 1
    %p33 = por %p31, %p32
    %p34 = scmp.ne.s32.totalorder %s23, %s24
    %p35 = scmp.eq.s32.totalorder %s15, 0
    %p36 = por %p34, %p35
    %p37 = scmp.ne.s32.totalorder %s23, %s24
    %p38 = scmp.eq.s32.totalorder %s16, 1
    %p39 = por %p37, %p38
    %p41 = scmp.ne.s32.totalorder %s24, %s40
    %p42 = scmp.eq.s32.totalorder %s16, 0
    %p43 = por %p41, %p42
    %s45 = sadd.s32 %s44, 1
    %p48 = scmp.eq.s32.totalorder %s10, 1
    %p49 = scmp.ne.s32.totalorder %s44, %s46
    %p50 = scmp.eq.s32.totalorder %s10, 0
    %p51 = por %p49, %p50
    %p52 = scmp.ne.s32.totalorder %s44, %s46
    %p53 = scmp.eq.s32.totalorder %s15, 1
    %p54 = por %p52, %p53
    %p55 = scmp.ne.s32.totalorder %s46, %s47
    %p56 = scmp.eq.s32.totalorder %s15, 0
    %p57 = por %p55, %p56
    %p58 = scmp.ne.s32.totalorder %s46, %s47
    %p59 = scmp.eq.s32.totalorder %s16, 1
    %p60 = por %p58, %p59
    %p62 = scmp.ne.s32.totalorder %s47, %s61
    %p63 = scmp.eq.s32.totalorder %s16, 0
    %p64 = por %p62, %p63
    %s66 = sadd.s32 %s65, 1
    %p69 = scmp.eq.s32.totalorder %s10, 1
    %p70 = scmp.ne.s32.totalorder %s65, %s67
    %p71 = scmp.eq.s32.totalorder %s10, 0
    %p72 = por %p70, %p71
    %p73 = scmp.ne.s32.totalorder %s65, %s67
    %p74 = scmp.eq.s32.totalorder %s15, 1
    %p75 = por %p73, %p74
    %p76 = scmp.ne.s32.totalorder %s67, %s68
    %p77 = scmp.eq.s32.totalorder %s15, 0
    %p78 = por %p76, %p77
    %p79 = scmp.ne.s32.totalorder %s67, %s68
    %p80 = scmp.eq.s32.totalorder %s16, 1
    %p81 = por %p79, %p80
    %p83 = scmp.ne.s32.totalorder %s68, %s82
    %p84 = scmp.eq.s32.totalorder %s16, 0
    %p85 = por %p83, %p84
    %s87 = sadd.s32 %s86, 1
    %p90 = scmp.eq.s32.totalorder %s10, 1
    %p91 = scmp.ne.s32.totalorder %s86, %s88
    %p92 = scmp.eq.s32.totalorder %s10, 0
    %p93 = por %p91, %p92
    %p94 = scmp.ne.s32.totalorder %s86, %s88
    %p95 = scmp.eq.s32.totalorder %s15, 1
    %p96 = por %p94, %p95
    %p97 = scmp.ne.s32.totalorder %s88, %s89
    %p98 = scmp.eq.s32.totalorder %s15, 0
    %p99 = por %p97, %p98
    %p100 = scmp.ne.s32.totalorder %s88, %s89
    %p101 = scmp.eq.s32.totalorder %s16, 1
    %p102 = por %p100, %p101
    %p104 = scmp.ne.s32.totalorder %s89, %s103
    %p105 = scmp.eq.s32.totalorder %s16, 0
    %p106 = por %p104, %p105
    %s107 = ssub.s32 %s10, %s17
    %p108 = scmp.eq.s32.totalorder %s107, 0
    %s110 = sadd.s32 %s109, 1
    %s111 = scalar_select %p108, %s109, %s110
    %p114 = pneg %p108
    %p115 = scmp.eq.s32.totalorder %s10, 1
    %p116 = por %p114, %p115
    %p117 = scmp.ne.s32.totalorder %s109, %s112
    %p118 = scmp.eq.s32.totalorder %s10, 0
    %p119 = por %p117, %p118
    %p120 = scmp.ne.s32.totalorder %s109, %s112
    %p121 = scmp.eq.s32.totalorder %s15, 1
    %p122 = por %p120, %p121
    %p123 = scmp.ne.s32.totalorder %s112, %s113
    %p124 = scmp.eq.s32.totalorder %s15, 0
    %p125 = por %p123, %p124
    %p126 = scmp.ne.s32.totalorder %s112, %s113
    %p127 = scmp.eq.s32.totalorder %s16, 1
    %p128 = por %p126, %p127
    %p130 = scmp.ne.s32.totalorder %s113, %s129
    %p131 = scmp.eq.s32.totalorder %s16, 0
    %p132 = por %p130, %p131
    %p133 = scmp.le.s32.totalorder 1, %s10
    %p134 = scmp.lt.s32.totalorder %s10, 3
    %p135 = pnand %p133, %p134
    %p136 = pneg %p135
    // Predicated region
    $region9: #{transition_down_forward.1} parent=5 // pred_check
      _
    $region10: #{transition_down_forward.1} parent=5 // pred_check_branch
      %138 = sbr.rel (%p135) target = $region12
    $region11: #{transition_down_forward.1} parent=5 // pred_region
      %s139 = ssub.s32 %s10, 1
      // Predicated region
      $region13: #{transition_down_forward.1} parent=11 // pred_check
        %p140 = pneg %p57
      $region14: #{transition_down_forward.1} parent=11 // pred_check_branch
        %142 = sbr.rel (%p140) target = $region16
      $region15: #{transition_down_forward.1} parent=11 // pred_region
        _
      $region16: #{transition_down_forward.1} parent=11 // pred_fallthru
        _
      // Predicated region
      $region17: #{transition_down_forward.1} parent=11 // pred_check
        %p143 = pneg %p78
      $region18: #{transition_down_forward.1} parent=11 // pred_check_branch
        %145 = sbr.rel (%p143) target = $region20
      $region19: #{transition_down_forward.1} parent=11 // pred_region
        _
      $region20: #{transition_down_forward.1} parent=11 // pred_fallthru
        _
      // Predicated region
      $region21: #{transition_down_forward.1} parent=11 // pred_check
        %p146 = pneg %p99
      $region22: #{transition_down_forward.1} parent=11 // pred_check_branch
        %148 = sbr.rel (%p146) target = $region24
      $region23: #{transition_down_forward.1} parent=11 // pred_region
        _
      $region24: #{transition_down_forward.1} parent=11 // pred_fallthru
        _
    $region12: #{transition_down_forward.1} parent=5 // pred_fallthru
      _
    %p149 = scmp.lt.s32.totalorder %s10, 2
    // Predicated region
    $region25: #{transition_down_forward.1} parent=5 // pred_check
      %p150 = pneg %p149
    $region26: #{transition_down_forward.1} parent=5 // pred_check_branch
      %152 = sbr.rel (%p150) target = $region28
    $region27: #{transition_down_forward.1} parent=5 // pred_region
      // Predicated region
      $region29: #{transition_down_forward.1} parent=27 // pred_check
        %p153 = pneg %p30
      $region30: #{transition_down_forward.1} parent=27 // pred_check_branch
        %155 = sbr.rel (%p153) target = $region32
      $region31: #{transition_down_forward.1} parent=27 // pred_region
        %s156 = smul.u32 128, %s10
        %s157 = ssub.s32 250, %s156
        %p158 = scmp.lt.s32.totalorder %s157, 128
        %s159 = scalar_select %p158, %s157, 128
        %s160 = smul.u32 8, %s159
        %s161 = smul.u32 %s160, 2
        %p162 = scmp.lt.s32.totalorder %s156, 249
        %s163 = scalar_select %p162, %s156, 249
        %s164 = smul.addr %s163, 2
        %s165 = smul.addr %s164, 8
        %s166 = scalar_lea.vmem %s0, %s165
        %s167 = smul.u32 128, %s10
        %s168 = ssub.s32 250, %s167
        %p169 = scmp.lt.s32.totalorder %s168, 128
        %s170 = scalar_select %p169, %s168, 128
        %s171 = smul.u32 8, %s170
        %s172 = smul.u32 %s171, 2
      $region32: #{transition_down_forward.1} parent=27 // pred_fallthru
        _
    $region28: #{transition_down_forward.1} parent=5 // pred_fallthru
      _
    %p173 = scmp.le.s32.totalorder 1, %s10
    %p174 = scmp.lt.s32.totalorder %s10, 3
    %p175 = pnand %p173, %p174
    %p176 = pneg %p175
    // Predicated region
    $region33: #{transition_down_forward.1} parent=5 // pred_check
      _
    $region34: #{transition_down_forward.1} parent=5 // pred_check_branch
      %178 = sbr.rel (%p175) target = $region36
    $region35: #{transition_down_forward.1} parent=5 // pred_region
      %s179 = ssub.s32 %s10, 1
      %s180 = smul.u32 128, %s15
      %s181 = ssub.s32 250, %s180
      %p182 = scmp.lt.s32.totalorder %s181, 128
      %s183 = scalar_select %p182, %s181, 128
      %s184 = smul.u32 8, %s183
      %s185 = smul.u32 %s184, 2
      %p186 = scmp.lt.s32.totalorder %s180, 249
      %s187 = scalar_select %p186, %s180, 249
      %s188 = smul.addr %s187, 2
      %s189 = smul.addr %s188, 8
      %s190 = scalar_lea.vmem %s0, %s189
      %p191 = pneg %p36
      %p192 = pneg %p33
      %p193 = pneg %p57
      %p194 = pneg %p54
      %p195 = pneg %p78
      %p196 = pneg %p75
      %p197 = pneg %p99
      %p198 = pneg %p96
      %p199 = pneg %p125
      %p200 = pneg %p122
      %s201 = smul.u32 16, %s15
      %p202 = scmp.lt.s32.totalorder %s201, 31
      %s203 = scalar_select %p202, %s201, 31
      %s204 = smul.addr %s203, 8
      %s205 = scalar_lea.vmem %s4, %s204
      %s206 = smul.u32 128, %s15
      %s207 = ssub.s32 250, %s206
      %p208 = scmp.lt.s32.totalorder %s207, 128
      %s209 = scalar_select %p208, %s207, 128
      %s210 = smul.u32 8, %s209
      %s211 = smul.u32 %s210, 2
      %p212 = scmp.lt.s32.totalorder %s206, 249
      %s213 = scalar_select %p212, %s206, 249
      %s214 = smul.addr %s213, 2
      %s215 = smul.addr %s214, 8
      %s216 = scalar_lea.vmem %s0, %s215
      %s217 = smul.u32 128, %s15
      %s218 = ssub.s32 250, %s217
      %p219 = scmp.lt.s32.totalorder %s218, 128
      %s220 = scalar_select %p219, %s218, 128
      %s221 = smul.u32 8, %s220
      %s222 = smul.u32 %s221, 2
      %s223 = smul.u32 16, %s15
      %p224 = scmp.lt.s32.totalorder %s223, 31
      %s225 = scalar_select %p224, %s223, 31
      %s226 = smul.addr %s225, 8
      %s227 = scalar_lea.vmem %s4, %s226
      %s228 = smul.u32 16, %s15
      %v230 = vld [vmem:[%s216] sm:$0xff]
      %v231 = vld [vmem:[%s216 + $0x8] sm:$0xff]
      %v232 = vld [vmem:[%s216 + $0x10] sm:$0xff]
      %v233 = vld [vmem:[%s216 + $0x18] sm:$0xff]
      %v234 = vld [vmem:[%s216 + $0x20] sm:$0xff]
      %v235 = vld [vmem:[%s216 + $0x28] sm:$0xff]
      %v236 = vld [vmem:[%s216 + $0x30] sm:$0xff]
      %v237 = vld [vmem:[%s216 + $0x38] sm:$0xff]
      %v238 = vld [vmem:[%s216 + $0x40] sm:$0xff]
      %v239 = vld [vmem:[%s216 + $0x48] sm:$0xff]
      %v240 = vld [vmem:[%s216 + $0x50] sm:$0xff]
      %v241 = vld [vmem:[%s216 + $0x58] sm:$0xff]
      %v242 = vld [vmem:[%s216 + $0x60] sm:$0xff]
      %v243 = vld [vmem:[%s216 + $0x68] sm:$0xff]
      %v244 = vld [vmem:[%s216 + $0x70] sm:$0xff]
      %v245 = vld [vmem:[%s216 + $0x78] sm:$0xff]
      %v246 = vld [vmem:[%s216 + $0x80] sm:$0xff]
      %v247 = vld [vmem:[%s216 + $0x88] sm:$0xff]
      %v248 = vld [vmem:[%s216 + $0x90] sm:$0xff]
      %v249 = vld [vmem:[%s216 + $0x98] sm:$0xff]
      %v250 = vld [vmem:[%s216 + $0xa0] sm:$0xff]
      %v251 = vld [vmem:[%s216 + $0xa8] sm:$0xff]
      %v252 = vld [vmem:[%s216 + $0xb0] sm:$0xff]
      %v253 = vld [vmem:[%s216 + $0xb8] sm:$0xff]
      %v254 = vld [vmem:[%s216 + $0xc0] sm:$0xff]
      %v255 = vld [vmem:[%s216 + $0xc8] sm:$0xff]
      %v256 = vld [vmem:[%s216 + $0xd0] sm:$0xff]
      %v257 = vld [vmem:[%s216 + $0xd8] sm:$0xff]
      %v258 = vld [vmem:[%s216 + $0xe0] sm:$0xff]
      %v259 = vld [vmem:[%s216 + $0xe8] sm:$0xff]
      %v260 = vld [vmem:[%s216 + $0xf0] sm:$0xff]
      %v261 = vld [vmem:[%s216 + $0xf8] sm:$0xff]
      %v262 = vld [vmem:[%s216 + $0x100] sm:$0xff]
      %v263 = vld [vmem:[%s216 + $0x108] sm:$0xff]
      %v264 = vld [vmem:[%s216 + $0x110] sm:$0xff]
      %v265 = vld [vmem:[%s216 + $0x118] sm:$0xff]
      %v266 = vld [vmem:[%s216 + $0x120] sm:$0xff]
      %v267 = vld [vmem:[%s216 + $0x128] sm:$0xff]
      %v268 = vld [vmem:[%s216 + $0x130] sm:$0xff]
      %v269 = vld [vmem:[%s216 + $0x138] sm:$0xff]
      %v270 = vld [vmem:[%s216 + $0x140] sm:$0xff]
      %v271 = vld [vmem:[%s216 + $0x148] sm:$0xff]
      %v272 = vld [vmem:[%s216 + $0x150] sm:$0xff]
      %v273 = vld [vmem:[%s216 + $0x158] sm:$0xff]
      %v274 = vld [vmem:[%s216 + $0x160] sm:$0xff]
      %v275 = vld [vmem:[%s216 + $0x168] sm:$0xff]
      %v276 = vld [vmem:[%s216 + $0x170] sm:$0xff]
      %v277 = vld [vmem:[%s216 + $0x178] sm:$0xff]
      %v278 = vld [vmem:[%s216 + $0x180] sm:$0xff]
      %v279 = vld [vmem:[%s216 + $0x188] sm:$0xff]
      %v280 = vld [vmem:[%s216 + $0x190] sm:$0xff]
      %v281 = vld [vmem:[%s216 + $0x198] sm:$0xff]
      %v282 = vld [vmem:[%s216 + $0x1a0] sm:$0xff]
      %v283 = vld [vmem:[%s216 + $0x1a8] sm:$0xff]
      %v284 = vld [vmem:[%s216 + $0x1b0] sm:$0xff]
      %v285 = vld [vmem:[%s216 + $0x1b8] sm:$0xff]
      %v286 = vld [vmem:[%s216 + $0x1c0] sm:$0xff]
      %v287 = vld [vmem:[%s216 + $0x1c8] sm:$0xff]
      %v288 = vld [vmem:[%s216 + $0x1d0] sm:$0xff]
      %v289 = vld [vmem:[%s216 + $0x1d8] sm:$0xff]
      %v290 = vld [vmem:[%s216 + $0x1e0] sm:$0xff]
      %v291 = vld [vmem:[%s216 + $0x1e8] sm:$0xff]
      %v292 = vld [vmem:[%s216 + $0x1f0] sm:$0xff]
      %v293 = vld [vmem:[%s216 + $0x1f8] sm:$0xff]
      %v294 = vld [vmem:[%s216 + $0x200] sm:$0xff]
      %v295 = vld [vmem:[%s216 + $0x208] sm:$0xff]
      %v296 = vld [vmem:[%s216 + $0x210] sm:$0xff]
      %v297 = vld [vmem:[%s216 + $0x218] sm:$0xff]
      %v298 = vld [vmem:[%s216 + $0x220] sm:$0xff]
      %v299 = vld [vmem:[%s216 + $0x228] sm:$0xff]
      %v300 = vld [vmem:[%s216 + $0x230] sm:$0xff]
      %v301 = vld [vmem:[%s216 + $0x238] sm:$0xff]
      %v302 = vld [vmem:[%s216 + $0x240] sm:$0xff]
      %v303 = vld [vmem:[%s216 + $0x248] sm:$0xff]
      %v304 = vld [vmem:[%s216 + $0x250] sm:$0xff]
      %v305 = vld [vmem:[%s216 + $0x258] sm:$0xff]
      %v306 = vld [vmem:[%s216 + $0x260] sm:$0xff]
      %v307 = vld [vmem:[%s216 + $0x268] sm:$0xff]
      %v308 = vld [vmem:[%s216 + $0x270] sm:$0xff]
      %v309 = vld [vmem:[%s216 + $0x278] sm:$0xff]
      %v310 = vld [vmem:[%s216 + $0x280] sm:$0xff]
      %v311 = vld [vmem:[%s216 + $0x288] sm:$0xff]
      %v312 = vld [vmem:[%s216 + $0x290] sm:$0xff]
      %v313 = vld [vmem:[%s216 + $0x298] sm:$0xff]
      %v314 = vld [vmem:[%s216 + $0x2a0] sm:$0xff]
      %v315 = vld [vmem:[%s216 + $0x2a8] sm:$0xff]
      %v316 = vld [vmem:[%s216 + $0x2b0] sm:$0xff]
      %v317 = vld [vmem:[%s216 + $0x2b8] sm:$0xff]
      %v318 = vld [vmem:[%s216 + $0x2c0] sm:$0xff]
      %v319 = vld [vmem:[%s216 + $0x2c8] sm:$0xff]
      %v320 = vld [vmem:[%s216 + $0x2d0] sm:$0xff]
      %v321 = vld [vmem:[%s216 + $0x2d8] sm:$0xff]
      %v322 = vld [vmem:[%s216 + $0x2e0] sm:$0xff]
      %v323 = vld [vmem:[%s216 + $0x2e8] sm:$0xff]
      %v324 = vld [vmem:[%s216 + $0x2f0] sm:$0xff]
      %v325 = vld [vmem:[%s216 + $0x2f8] sm:$0xff]
      %v326 = vld [vmem:[%s216 + $0x300] sm:$0xff]
      %v327 = vld [vmem:[%s216 + $0x308] sm:$0xff]
      %v328 = vld [vmem:[%s216 + $0x310] sm:$0xff]
      %v329 = vld [vmem:[%s216 + $0x318] sm:$0xff]
      %v330 = vld [vmem:[%s216 + $0x320] sm:$0xff]
      %v331 = vld [vmem:[%s216 + $0x328] sm:$0xff]
      %v332 = vld [vmem:[%s216 + $0x330] sm:$0xff]
      %v333 = vld [vmem:[%s216 + $0x338] sm:$0xff]
      %v334 = vld [vmem:[%s216 + $0x340] sm:$0xff]
      %v335 = vld [vmem:[%s216 + $0x348] sm:$0xff]
      %v336 = vld [vmem:[%s216 + $0x350] sm:$0xff]
      %v337 = vld [vmem:[%s216 + $0x358] sm:$0xff]
      %v338 = vld [vmem:[%s216 + $0x360] sm:$0xff]
      %v339 = vld [vmem:[%s216 + $0x368] sm:$0xff]
      %v340 = vld [vmem:[%s216 + $0x370] sm:$0xff]
      %v341 = vld [vmem:[%s216 + $0x378] sm:$0xff]
      %v342 = vld [vmem:[%s216 + $0x380] sm:$0xff]
      %v343 = vld [vmem:[%s216 + $0x388] sm:$0xff]
      %v344 = vld [vmem:[%s216 + $0x390] sm:$0xff]
      %v345 = vld [vmem:[%s216 + $0x398] sm:$0xff]
      %v346 = vld [vmem:[%s216 + $0x3a0] sm:$0xff]
      %v347 = vld [vmem:[%s216 + $0x3a8] sm:$0xff]
      %v348 = vld [vmem:[%s216 + $0x3b0] sm:$0xff]
      %v349 = vld [vmem:[%s216 + $0x3b8] sm:$0xff]
      %v350 = vld [vmem:[%s216 + $0x3c0] sm:$0xff]
      %v351 = vld [vmem:[%s216 + $0x3c8] sm:$0xff]
      %v352 = vld [vmem:[%s216 + $0x3d0] sm:$0xff]
      %v353 = vld [vmem:[%s216 + $0x3d8] sm:$0xff]
      %v354 = vld [vmem:[%s216 + $0x3e0] sm:$0xff]
      %v355 = vld [vmem:[%s216 + $0x3e8] sm:$0xff]
      %v356 = vld [vmem:[%s216 + $0x3f0] sm:$0xff]
      %v357 = vld [vmem:[%s216 + $0x3f8] sm:$0xff]
      %v358 = vld [vmem:[%s216 + $0x400] sm:$0xff]
      %v359 = vld [vmem:[%s216 + $0x408] sm:$0xff]
      %v360 = vld [vmem:[%s216 + $0x410] sm:$0xff]
      %v361 = vld [vmem:[%s216 + $0x418] sm:$0xff]
      %v362 = vld [vmem:[%s216 + $0x420] sm:$0xff]
      %v363 = vld [vmem:[%s216 + $0x428] sm:$0xff]
      %v364 = vld [vmem:[%s216 + $0x430] sm:$0xff]
      %v365 = vld [vmem:[%s216 + $0x438] sm:$0xff]
      %v366 = vld [vmem:[%s216 + $0x440] sm:$0xff]
      %v367 = vld [vmem:[%s216 + $0x448] sm:$0xff]
      %v368 = vld [vmem:[%s216 + $0x450] sm:$0xff]
      %v369 = vld [vmem:[%s216 + $0x458] sm:$0xff]
      %v370 = vld [vmem:[%s216 + $0x460] sm:$0xff]
      %v371 = vld [vmem:[%s216 + $0x468] sm:$0xff]
      %v372 = vld [vmem:[%s216 + $0x470] sm:$0xff]
      %v373 = vld [vmem:[%s216 + $0x478] sm:$0xff]
      %v374 = vld [vmem:[%s216 + $0x480] sm:$0xff]
      %v375 = vld [vmem:[%s216 + $0x488] sm:$0xff]
      %v376 = vld [vmem:[%s216 + $0x490] sm:$0xff]
      %v377 = vld [vmem:[%s216 + $0x498] sm:$0xff]
      %v378 = vld [vmem:[%s216 + $0x4a0] sm:$0xff]
      %v379 = vld [vmem:[%s216 + $0x4a8] sm:$0xff]
      %v380 = vld [vmem:[%s216 + $0x4b0] sm:$0xff]
      %v381 = vld [vmem:[%s216 + $0x4b8] sm:$0xff]
      %v382 = vld [vmem:[%s216 + $0x4c0] sm:$0xff]
      %v383 = vld [vmem:[%s216 + $0x4c8] sm:$0xff]
      %v384 = vld [vmem:[%s216 + $0x4d0] sm:$0xff]
      %v385 = vld [vmem:[%s216 + $0x4d8] sm:$0xff]
      %v386 = vld [vmem:[%s216 + $0x4e0] sm:$0xff]
      %v387 = vld [vmem:[%s216 + $0x4e8] sm:$0xff]
      %v388 = vld [vmem:[%s216 + $0x4f0] sm:$0xff]
      %v389 = vld [vmem:[%s216 + $0x4f8] sm:$0xff]
      %v390 = vld [vmem:[%s216 + $0x500] sm:$0xff]
      %v391 = vld [vmem:[%s216 + $0x508] sm:$0xff]
      %v392 = vld [vmem:[%s216 + $0x510] sm:$0xff]
      %v393 = vld [vmem:[%s216 + $0x518] sm:$0xff]
      %v394 = vld [vmem:[%s216 + $0x520] sm:$0xff]
      %v395 = vld [vmem:[%s216 + $0x528] sm:$0xff]
      %v396 = vld [vmem:[%s216 + $0x530] sm:$0xff]
      %v397 = vld [vmem:[%s216 + $0x538] sm:$0xff]
      %v398 = vld [vmem:[%s216 + $0x540] sm:$0xff]
      %v399 = vld [vmem:[%s216 + $0x548] sm:$0xff]
      %v400 = vld [vmem:[%s216 + $0x550] sm:$0xff]
      %v401 = vld [vmem:[%s216 + $0x558] sm:$0xff]
      %v402 = vld [vmem:[%s216 + $0x560] sm:$0xff]
      %v403 = vld [vmem:[%s216 + $0x568] sm:$0xff]
      %v404 = vld [vmem:[%s216 + $0x570] sm:$0xff]
      %v405 = vld [vmem:[%s216 + $0x578] sm:$0xff]
      %v406 = vld [vmem:[%s216 + $0x580] sm:$0xff]
      %v407 = vld [vmem:[%s216 + $0x588] sm:$0xff]
      %v408 = vld [vmem:[%s216 + $0x590] sm:$0xff]
      %v409 = vld [vmem:[%s216 + $0x598] sm:$0xff]
      %v410 = vld [vmem:[%s216 + $0x5a0] sm:$0xff]
      %v411 = vld [vmem:[%s216 + $0x5a8] sm:$0xff]
      %v412 = vld [vmem:[%s216 + $0x5b0] sm:$0xff]
      %v413 = vld [vmem:[%s216 + $0x5b8] sm:$0xff]
      %v414 = vld [vmem:[%s216 + $0x5c0] sm:$0xff]
      %v415 = vld [vmem:[%s216 + $0x5c8] sm:$0xff]
      %v416 = vld [vmem:[%s216 + $0x5d0] sm:$0xff]
      %v417 = vld [vmem:[%s216 + $0x5d8] sm:$0xff]
      %v418 = vld [vmem:[%s216 + $0x5e0] sm:$0xff]
      %v419 = vld [vmem:[%s216 + $0x5e8] sm:$0xff]
      %v420 = vld [vmem:[%s216 + $0x5f0] sm:$0xff]
      %v421 = vld [vmem:[%s216 + $0x5f8] sm:$0xff]
      %v422 = vld [vmem:[%s216 + $0x600] sm:$0xff]
      %v423 = vld [vmem:[%s216 + $0x608] sm:$0xff]
      %v424 = vld [vmem:[%s216 + $0x610] sm:$0xff]
      %v425 = vld [vmem:[%s216 + $0x618] sm:$0xff]
      %v426 = vld [vmem:[%s216 + $0x620] sm:$0xff]
      %v427 = vld [vmem:[%s216 + $0x628] sm:$0xff]
      %v428 = vld [vmem:[%s216 + $0x630] sm:$0xff]
      %v429 = vld [vmem:[%s216 + $0x638] sm:$0xff]
      %v430 = vld [vmem:[%s216 + $0x640] sm:$0xff]
      %v431 = vld [vmem:[%s216 + $0x648] sm:$0xff]
      %v432 = vld [vmem:[%s216 + $0x650] sm:$0xff]
      %v433 = vld [vmem:[%s216 + $0x658] sm:$0xff]
      %v434 = vld [vmem:[%s216 + $0x660] sm:$0xff]
      %v435 = vld [vmem:[%s216 + $0x668] sm:$0xff]
      %v436 = vld [vmem:[%s216 + $0x670] sm:$0xff]
      %v437 = vld [vmem:[%s216 + $0x678] sm:$0xff]
      %v438 = vld [vmem:[%s216 + $0x680] sm:$0xff]
      %v439 = vld [vmem:[%s216 + $0x688] sm:$0xff]
      %v440 = vld [vmem:[%s216 + $0x690] sm:$0xff]
      %v441 = vld [vmem:[%s216 + $0x698] sm:$0xff]
      %v442 = vld [vmem:[%s216 + $0x6a0] sm:$0xff]
      %v443 = vld [vmem:[%s216 + $0x6a8] sm:$0xff]
      %v444 = vld [vmem:[%s216 + $0x6b0] sm:$0xff]
      %v445 = vld [vmem:[%s216 + $0x6b8] sm:$0xff]
      %v446 = vld [vmem:[%s216 + $0x6c0] sm:$0xff]
      %v447 = vld [vmem:[%s216 + $0x6c8] sm:$0xff]
      %v448 = vld [vmem:[%s216 + $0x6d0] sm:$0xff]
      %v449 = vld [vmem:[%s216 + $0x6d8] sm:$0xff]
      %v450 = vld [vmem:[%s216 + $0x6e0] sm:$0xff]
      %v451 = vld [vmem:[%s216 + $0x6e8] sm:$0xff]
      %v452 = vld [vmem:[%s216 + $0x6f0] sm:$0xff]
      %v453 = vld [vmem:[%s216 + $0x6f8] sm:$0xff]
      %v454 = vld [vmem:[%s216 + $0x700] sm:$0xff]
      %v455 = vld [vmem:[%s216 + $0x708] sm:$0xff]
      %v456 = vld [vmem:[%s216 + $0x710] sm:$0xff]
      %v457 = vld [vmem:[%s216 + $0x718] sm:$0xff]
      %v458 = vld [vmem:[%s216 + $0x720] sm:$0xff]
      %v459 = vld [vmem:[%s216 + $0x728] sm:$0xff]
      %v460 = vld [vmem:[%s216 + $0x730] sm:$0xff]
      %v461 = vld [vmem:[%s216 + $0x738] sm:$0xff]
      %v462 = vld [vmem:[%s216 + $0x740] sm:$0xff]
      %v463 = vld [vmem:[%s216 + $0x748] sm:$0xff]
      %v464 = vld [vmem:[%s216 + $0x750] sm:$0xff]
      %v465 = vld [vmem:[%s216 + $0x758] sm:$0xff]
      %v466 = vld [vmem:[%s216 + $0x760] sm:$0xff]
      %v467 = vld [vmem:[%s216 + $0x768] sm:$0xff]
      %v468 = vld [vmem:[%s216 + $0x770] sm:$0xff]
      %v469 = vld [vmem:[%s216 + $0x778] sm:$0xff]
      %v470 = vld [vmem:[%s216 + $0x780] sm:$0xff]
      %v471 = vld [vmem:[%s216 + $0x788] sm:$0xff]
      %v472 = vld [vmem:[%s216 + $0x790] sm:$0xff]
      %v473 = vld [vmem:[%s216 + $0x798] sm:$0xff]
      %v474 = vld [vmem:[%s216 + $0x7a0] sm:$0xff]
      %v475 = vld [vmem:[%s216 + $0x7a8] sm:$0xff]
      %v476 = vld [vmem:[%s216 + $0x7b0] sm:$0xff]
      %v477 = vld [vmem:[%s216 + $0x7b8] sm:$0xff]
      %v478 = vld [vmem:[%s216 + $0x7c0] sm:$0xff]
      %v479 = vld [vmem:[%s216 + $0x7c8] sm:$0xff]
      %v480 = vld [vmem:[%s216 + $0x7d0] sm:$0xff]
      %v481 = vld [vmem:[%s216 + $0x7d8] sm:$0xff]
      %v482 = vld [vmem:[%s216 + $0x7e0] sm:$0xff]
      %v483 = vld [vmem:[%s216 + $0x7e8] sm:$0xff]
      %v484 = vld [vmem:[%s216 + $0x7f0] sm:$0xff]
      %v485 = vld [vmem:[%s216 + $0x7f8] sm:$0xff]
      %v486 = vpack.c.bf16 %v231, %v230
      %v487 = vpack.c.bf16 %v233, %v232
      %v488 = vpack.c.bf16 %v235, %v234
      %v489 = vpack.c.bf16 %v237, %v236
      %v490 = vpack.c.bf16 %v239, %v238
      %v491 = vpack.c.bf16 %v241, %v240
      %v492 = vpack.c.bf16 %v243, %v242
      %v493 = vpack.c.bf16 %v245, %v244
      %v494 = vpack.c.bf16 %v247, %v246
      %v495 = vpack.c.bf16 %v249, %v248
      %v496 = vpack.c.bf16 %v251, %v250
      %v497 = vpack.c.bf16 %v253, %v252
      %v498 = vpack.c.bf16 %v255, %v254
      %v499 = vpack.c.bf16 %v257, %v256
      %v500 = vpack.c.bf16 %v259, %v258
      %v501 = vpack.c.bf16 %v261, %v260
      %v502 = vpack.c.bf16 %v263, %v262
      %v503 = vpack.c.bf16 %v265, %v264
      %v504 = vpack.c.bf16 %v267, %v266
      %v505 = vpack.c.bf16 %v269, %v268
      %v506 = vpack.c.bf16 %v271, %v270
      %v507 = vpack.c.bf16 %v273, %v272
      %v508 = vpack.c.bf16 %v275, %v274
      %v509 = vpack.c.bf16 %v277, %v276
      %v510 = vpack.c.bf16 %v279, %v278
      %v511 = vpack.c.bf16 %v281, %v280
      %v512 = vpack.c.bf16 %v283, %v282
      %v513 = vpack.c.bf16 %v285, %v284
      %v514 = vpack.c.bf16 %v287, %v286
      %v515 = vpack.c.bf16 %v289, %v288
      %v516 = vpack.c.bf16 %v291, %v290
      %v517 = vpack.c.bf16 %v293, %v292
      %v518 = vpack.c.bf16 %v295, %v294
      %v519 = vpack.c.bf16 %v297, %v296
      %v520 = vpack.c.bf16 %v299, %v298
      %v521 = vpack.c.bf16 %v301, %v300
      %v522 = vpack.c.bf16 %v303, %v302
      %v523 = vpack.c.bf16 %v305, %v304
      %v524 = vpack.c.bf16 %v307, %v306
      %v525 = vpack.c.bf16 %v309, %v308
      %v526 = vpack.c.bf16 %v311, %v310
      %v527 = vpack.c.bf16 %v313, %v312
      %v528 = vpack.c.bf16 %v315, %v314
      %v529 = vpack.c.bf16 %v317, %v316
      %v530 = vpack.c.bf16 %v319, %v318
      %v531 = vpack.c.bf16 %v321, %v320
      %v532 = vpack.c.bf16 %v323, %v322
      %v533 = vpack.c.bf16 %v325, %v324
      %v534 = vpack.c.bf16 %v327, %v326
      %v535 = vpack.c.bf16 %v329, %v328
      %v536 = vpack.c.bf16 %v331, %v330
      %v537 = vpack.c.bf16 %v333, %v332
      %v538 = vpack.c.bf16 %v335, %v334
      %v539 = vpack.c.bf16 %v337, %v336
      %v540 = vpack.c.bf16 %v339, %v338
      %v541 = vpack.c.bf16 %v341, %v340
      %v542 = vpack.c.bf16 %v343, %v342
      %v543 = vpack.c.bf16 %v345, %v344
      %v544 = vpack.c.bf16 %v347, %v346
      %v545 = vpack.c.bf16 %v349, %v348
      %v546 = vpack.c.bf16 %v351, %v350
      %v547 = vpack.c.bf16 %v353, %v352
      %v548 = vpack.c.bf16 %v355, %v354
      %v549 = vpack.c.bf16 %v357, %v356
      %v550 = vpack.c.bf16 %v359, %v358
      %v551 = vpack.c.bf16 %v361, %v360
      %v552 = vpack.c.bf16 %v363, %v362
      %v553 = vpack.c.bf16 %v365, %v364
      %v554 = vpack.c.bf16 %v367, %v366
      %v555 = vpack.c.bf16 %v369, %v368
      %v556 = vpack.c.bf16 %v371, %v370
      %v557 = vpack.c.bf16 %v373, %v372
      %v558 = vpack.c.bf16 %v375, %v374
      %v559 = vpack.c.bf16 %v377, %v376
      %v560 = vpack.c.bf16 %v379, %v378
      %v561 = vpack.c.bf16 %v381, %v380
      %v562 = vpack.c.bf16 %v383, %v382
      %v563 = vpack.c.bf16 %v385, %v384
      %v564 = vpack.c.bf16 %v387, %v386
      %v565 = vpack.c.bf16 %v389, %v388
      %v566 = vpack.c.bf16 %v391, %v390
      %v567 = vpack.c.bf16 %v393, %v392
      %v568 = vpack.c.bf16 %v395, %v394
      %v569 = vpack.c.bf16 %v397, %v396
      %v570 = vpack.c.bf16 %v399, %v398
      %v571 = vpack.c.bf16 %v401, %v400
      %v572 = vpack.c.bf16 %v403, %v402
      %v573 = vpack.c.bf16 %v405, %v404
      %v574 = vpack.c.bf16 %v407, %v406
      %v575 = vpack.c.bf16 %v409, %v408
      %v576 = vpack.c.bf16 %v411, %v410
      %v577 = vpack.c.bf16 %v413, %v412
      %v578 = vpack.c.bf16 %v415, %v414
      %v579 = vpack.c.bf16 %v417, %v416
      %v580 = vpack.c.bf16 %v419, %v418
      %v581 = vpack.c.bf16 %v421, %v420
      %v582 = vpack.c.bf16 %v423, %v422
      %v583 = vpack.c.bf16 %v425, %v424
      %v584 = vpack.c.bf16 %v427, %v426
      %v585 = vpack.c.bf16 %v429, %v428
      %v586 = vpack.c.bf16 %v431, %v430
      %v587 = vpack.c.bf16 %v433, %v432
      %v588 = vpack.c.bf16 %v435, %v434
      %v589 = vpack.c.bf16 %v437, %v436
      %v590 = vpack.c.bf16 %v439, %v438
      %v591 = vpack.c.bf16 %v441, %v440
      %v592 = vpack.c.bf16 %v443, %v442
      %v593 = vpack.c.bf16 %v445, %v444
      %v594 = vpack.c.bf16 %v447, %v446
      %v595 = vpack.c.bf16 %v449, %v448
      %v596 = vpack.c.bf16 %v451, %v450
      %v597 = vpack.c.bf16 %v453, %v452
      %v598 = vpack.c.bf16 %v455, %v454
      %v599 = vpack.c.bf16 %v457, %v456
      %v600 = vpack.c.bf16 %v459, %v458
      %v601 = vpack.c.bf16 %v461, %v460
      %v602 = vpack.c.bf16 %v463, %v462
      %v603 = vpack.c.bf16 %v465, %v464
      %v604 = vpack.c.bf16 %v467, %v466
      %v605 = vpack.c.bf16 %v469, %v468
      %v606 = vpack.c.bf16 %v471, %v470
      %v607 = vpack.c.bf16 %v473, %v472
      %v608 = vpack.c.bf16 %v475, %v474
      %v609 = vpack.c.bf16 %v477, %v476
      %v610 = vpack.c.bf16 %v479, %v478
      %v611 = vpack.c.bf16 %v481, %v480
      %v612 = vpack.c.bf16 %v483, %v482
      %v613 = vpack.c.bf16 %v485, %v484
      %v614 = vld [vmem:[%s1] sm:$0xf]
      %v615 = vld [vmem:[%s1 + $0x4] sm:$0xf]
      %v616 = vld [vmem:[%s1 + $0x8] sm:$0xf]
      %v617 = vld [vmem:[%s1 + $0xc] sm:$0xf]
      %v618 = vld [vmem:[%s1 + $0x10] sm:$0x3]
      %v624 = vunpack.c.l.b16 %v614
      %v625 = vunpack.c.l.b16 %v615
      %v626 = vunpack.c.l.b16 %v616
      %v627 = vunpack.c.l.b16 %v617
      %v628 = vunpack.c.l.b16 %v618
      %v629 = vpack.c.b16 %v625, %v624
      %v630 = vpack.c.b16 %v627, %v626
      %v631 = vpack.c.b16 %v628, %v628
      %vm634 = vcmask 285696
      %v636 = vsel %vm634, %v486, 0
      %v639 = vsel %vm634, %v487, 0
      %v642 = vsel %vm634, %v488, 0
      %v645 = vsel %vm634, %v489, 0
      %v648 = vsel %vm634, %v490, 0
      %v651 = vsel %vm634, %v491, 0
      %v654 = vsel %vm634, %v492, 0
      %v657 = vsel %vm634, %v493, 0
      %v660 = vsel %vm634, %v494, 0
      %v663 = vsel %vm634, %v495, 0
      %v666 = vsel %vm634, %v496, 0
      %v669 = vsel %vm634, %v497, 0
      %v672 = vsel %vm634, %v498, 0
      %v675 = vsel %vm634, %v499, 0
      %v678 = vsel %vm634, %v500, 0
      %v681 = vsel %vm634, %v501, 0
      %v684 = vsel %vm634, %v502, 0
      %v687 = vsel %vm634, %v503, 0
      %v690 = vsel %vm634, %v504, 0
      %v693 = vsel %vm634, %v505, 0
      %v696 = vsel %vm634, %v506, 0
      %v699 = vsel %vm634, %v507, 0
      %v702 = vsel %vm634, %v508, 0
      %v705 = vsel %vm634, %v509, 0
      %v708 = vsel %vm634, %v510, 0
      %v711 = vsel %vm634, %v511, 0
      %v714 = vsel %vm634, %v512, 0
      %v717 = vsel %vm634, %v513, 0
      %v720 = vsel %vm634, %v514, 0
      %v723 = vsel %vm634, %v515, 0
      %v726 = vsel %vm634, %v516, 0
      %v729 = vsel %vm634, %v517, 0
      %v732 = vsel %vm634, %v518, 0
      %v735 = vsel %vm634, %v519, 0
      %v738 = vsel %vm634, %v520, 0
      %v741 = vsel %vm634, %v521, 0
      %v744 = vsel %vm634, %v522, 0
      %v747 = vsel %vm634, %v523, 0
      %v750 = vsel %vm634, %v524, 0
      %v753 = vsel %vm634, %v525, 0
      %v756 = vsel %vm634, %v526, 0
      %v759 = vsel %vm634, %v527, 0
      %v762 = vsel %vm634, %v528, 0
      %v765 = vsel %vm634, %v529, 0
      %v768 = vsel %vm634, %v530, 0
      %v771 = vsel %vm634, %v531, 0
      %v774 = vsel %vm634, %v532, 0
      %v777 = vsel %vm634, %v533, 0
      %v780 = vsel %vm634, %v534, 0
      %v783 = vsel %vm634, %v535, 0
      %v786 = vsel %vm634, %v536, 0
      %v789 = vsel %vm634, %v537, 0
      %v792 = vsel %vm634, %v538, 0
      %v795 = vsel %vm634, %v539, 0
      %v798 = vsel %vm634, %v540, 0
      %v801 = vsel %vm634, %v541, 0
      %v804 = vsel %vm634, %v542, 0
      %v807 = vsel %vm634, %v543, 0
      %v810 = vsel %vm634, %v544, 0
      %v813 = vsel %vm634, %v545, 0
      %v816 = vsel %vm634, %v546, 0
      %v819 = vsel %vm634, %v547, 0
      %v822 = vsel %vm634, %v548, 0
      %v825 = vsel %vm634, %v549, 0
      %v828 = vsel %vm634, %v550, 0
      %v831 = vsel %vm634, %v551, 0
      %v834 = vsel %vm634, %v552, 0
      %v837 = vsel %vm634, %v553, 0
      %v840 = vsel %vm634, %v554, 0
      %v843 = vsel %vm634, %v555, 0
      %v846 = vsel %vm634, %v556, 0
      %v849 = vsel %vm634, %v557, 0
      %v852 = vsel %vm634, %v558, 0
      %v855 = vsel %vm634, %v559, 0
      %v858 = vsel %vm634, %v560, 0
      %v861 = vsel %vm634, %v561, 0
      %v864 = vsel %vm634, %v562, 0
      %v867 = vsel %vm634, %v563, 0
      %v870 = vsel %vm634, %v564, 0
      %v873 = vsel %vm634, %v565, 0
      %v876 = vsel %vm634, %v566, 0
      %v879 = vsel %vm634, %v567, 0
      %v882 = vsel %vm634, %v568, 0
      %v885 = vsel %vm634, %v569, 0
      %v888 = vsel %vm634, %v570, 0
      %v891 = vsel %vm634, %v571, 0
      %v894 = vsel %vm634, %v572, 0
      %v897 = vsel %vm634, %v573, 0
      %v900 = vsel %vm634, %v574, 0
      %v903 = vsel %vm634, %v575, 0
      %v906 = vsel %vm634, %v576, 0
      %v909 = vsel %vm634, %v577, 0
      %v912 = vsel %vm634, %v578, 0
      %v915 = vsel %vm634, %v579, 0
      %v918 = vsel %vm634, %v580, 0
      %v921 = vsel %vm634, %v581, 0
      %v924 = vsel %vm634, %v582, 0
      %v927 = vsel %vm634, %v583, 0
      %v930 = vsel %vm634, %v584, 0
      %v933 = vsel %vm634, %v585, 0
      %v936 = vsel %vm634, %v586, 0
      %v939 = vsel %vm634, %v587, 0
      %v942 = vsel %vm634, %v588, 0
      %v945 = vsel %vm634, %v589, 0
      %v948 = vsel %vm634, %v590, 0
      %v951 = vsel %vm634, %v591, 0
      %v954 = vsel %vm634, %v592, 0
      %v957 = vsel %vm634, %v593, 0
      %v960 = vsel %vm634, %v594, 0
      %v963 = vsel %vm634, %v595, 0
      %v966 = vsel %vm634, %v596, 0
      %v969 = vsel %vm634, %v597, 0
      %v972 = vsel %vm634, %v598, 0
      %v975 = vsel %vm634, %v599, 0
      %v978 = vsel %vm634, %v600, 0
      %v981 = vsel %vm634, %v601, 0
      %v984 = vsel %vm634, %v602, 0
      %v987 = vsel %vm634, %v603, 0
      %v990 = vsel %vm634, %v604, 0
      %v993 = vsel %vm634, %v605, 0
      %v996 = vsel %vm634, %v606, 0
      %v999 = vsel %vm634, %v607, 0
      %v1002 = vsel %vm634, %v608, 0
      %v1005 = vsel %vm634, %v609, 0
      %v1008 = vsel %vm634, %v610, 0
      %v1011 = vsel %vm634, %v611, 0
      %v1014 = vsel %vm634, %v612, 0
      %v1017 = vsel %vm634, %v613, 0
      %vm1019 = vcmask 1040384
      %vm1020 = vcmask 1041408
      %v1021 = vsel %vm1019, 4294967295, 65535
      %v1022 = vsel %vm1020, %v1021, 0
      %v1024 = vand.u32 %v631, %v1022
      %1026 = vmatpush.bf16.msra.mxu0 0
      %1027 = vmatpush.bf16.msra.mxu0 0
      %1028 = vmatpush.bf16.msra.mxu0 0
      %1029 = vmatpush.bf16.msra.mxu0 0
      %1030 = vmatpush.bf16.msra.mxu0 0
      %1031 = vmatpush.bf16.msra.mxu0 %v1024
      %1032 = vmatpush.bf16.msra.mxu0 %v630
      %1033 = vmatpush.bf16.msra.mxu0 %v629
      %1034 = vmatmul.bf16.gmra.mxu0 %v636
      %v1035 = vpop.f32.mrf.mxu0
      %v1036 = vadd.f32 0.0, %v1035
      %v1037 = vpop.f32.mrf.mxu0
      %v1038 = vadd.f32 0.0, %v1037
      %1039 = vmatmul.bf16.gmra.mxu0 %v639
      %v1040 = vpop.f32.mrf.mxu0
      %v1041 = vadd.f32 0.0, %v1040
      %v1042 = vpop.f32.mrf.mxu0
      %v1043 = vadd.f32 0.0, %v1042
      %1044 = vmatmul.bf16.gmra.mxu0 %v642
      %v1045 = vpop.f32.mrf.mxu0
      %v1046 = vadd.f32 0.0, %v1045
      %v1047 = vpop.f32.mrf.mxu0
      %v1048 = vadd.f32 0.0, %v1047
      %1049 = vmatmul.bf16.gmra.mxu0 %v645
      %v1050 = vpop.f32.mrf.mxu0
      %v1051 = vadd.f32 0.0, %v1050
      %v1052 = vpop.f32.mrf.mxu0
      %v1053 = vadd.f32 0.0, %v1052
      %1054 = vmatmul.bf16.gmra.mxu0 %v648
      %v1055 = vpop.f32.mrf.mxu0
      %v1056 = vadd.f32 0.0, %v1055
      %v1057 = vpop.f32.mrf.mxu0
      %v1058 = vadd.f32 0.0, %v1057
      %1059 = vmatmul.bf16.gmra.mxu0 %v651
      %v1060 = vpop.f32.mrf.mxu0
      %v1061 = vadd.f32 0.0, %v1060
      %v1062 = vpop.f32.mrf.mxu0
      %v1063 = vadd.f32 0.0, %v1062
      %1064 = vmatmul.bf16.gmra.mxu0 %v654
      %v1065 = vpop.f32.mrf.mxu0
      %v1066 = vadd.f32 0.0, %v1065
      %v1067 = vpop.f32.mrf.mxu0
      %v1068 = vadd.f32 0.0, %v1067
      %1069 = vmatmul.bf16.gmra.mxu0 %v657
      %v1070 = vpop.f32.mrf.mxu0
      %v1071 = vadd.f32 0.0, %v1070
      %v1072 = vpop.f32.mrf.mxu0
      %v1073 = vadd.f32 0.0, %v1072
      %1074 = vmatmul.bf16.gmra.mxu0 %v660
      %v1075 = vpop.f32.mrf.mxu0
      %v1076 = vadd.f32 0.0, %v1075
      %v1077 = vpop.f32.mrf.mxu0
      %v1078 = vadd.f32 0.0, %v1077
      %1079 = vmatmul.bf16.gmra.mxu0 %v663
      %v1080 = vpop.f32.mrf.mxu0
      %v1081 = vadd.f32 0.0, %v1080
      %v1082 = vpop.f32.mrf.mxu0
      %v1083 = vadd.f32 0.0, %v1082
      %1084 = vmatmul.bf16.gmra.mxu0 %v666
      %v1085 = vpop.f32.mrf.mxu0
      %v1086 = vadd.f32 0.0, %v1085
      %v1087 = vpop.f32.mrf.mxu0
      %v1088 = vadd.f32 0.0, %v1087
      %1089 = vmatmul.bf16.gmra.mxu0 %v669
      %v1090 = vpop.f32.mrf.mxu0
      %v1091 = vadd.f32 0.0, %v1090
      %v1092 = vpop.f32.mrf.mxu0
      %v1093 = vadd.f32 0.0, %v1092
      %1094 = vmatmul.bf16.gmra.mxu0 %v672
      %v1095 = vpop.f32.mrf.mxu0
      %v1096 = vadd.f32 0.0, %v1095
      %v1097 = vpop.f32.mrf.mxu0
      %v1098 = vadd.f32 0.0, %v1097
      %1099 = vmatmul.bf16.gmra.mxu0 %v675
      %v1100 = vpop.f32.mrf.mxu0
      %v1101 = vadd.f32 0.0, %v1100
      %v1102 = vpop.f32.mrf.mxu0
      %v1103 = vadd.f32 0.0, %v1102
      %1104 = vmatmul.bf16.gmra.mxu0 %v678
      %v1105 = vpop.f32.mrf.mxu0
      %v1106 = vadd.f32 0.0, %v1105
      %v1107 = vpop.f32.mrf.mxu0
      %v1108 = vadd.f32 0.0, %v1107
      %1109 = vmatmul.bf16.gmra.mxu0 %v681
      %v1110 = vpop.f32.mrf.mxu0
      %v1111 = vadd.f32 0.0, %v1110
      %v1112 = vpop.f32.mrf.mxu0
      %v1113 = vadd.f32 0.0, %v1112
      %1114 = vmatmul.bf16.gmra.mxu0 %v684
      %v1115 = vpop.f32.mrf.mxu0
      %v1116 = vadd.f32 0.0, %v1115
      %v1117 = vpop.f32.mrf.mxu0
      %v1118 = vadd.f32 0.0, %v1117
      %1119 = vmatmul.bf16.gmra.mxu0 %v687
      %v1120 = vpop.f32.mrf.mxu0
      %v1121 = vadd.f32 0.0, %v1120
      %v1122 = vpop.f32.mrf.mxu0
      %v1123 = vadd.f32 0.0, %v1122
      %1124 = vmatmul.bf16.gmra.mxu0 %v690
      %v1125 = vpop.f32.mrf.mxu0
      %v1126 = vadd.f32 0.0, %v1125
      %v1127 = vpop.f32.mrf.mxu0
      %v1128 = vadd.f32 0.0, %v1127
      %1129 = vmatmul.bf16.gmra.mxu0 %v693
      %v1130 = vpop.f32.mrf.mxu0
      %v1131 = vadd.f32 0.0, %v1130
      %v1132 = vpop.f32.mrf.mxu0
      %v1133 = vadd.f32 0.0, %v1132
      %1134 = vmatmul.bf16.gmra.mxu0 %v696
      %v1135 = vpop.f32.mrf.mxu0
      %v1136 = vadd.f32 0.0, %v1135
      %v1137 = vpop.f32.mrf.mxu0
      %v1138 = vadd.f32 0.0, %v1137
      %1139 = vmatmul.bf16.gmra.mxu0 %v699
      %v1140 = vpop.f32.mrf.mxu0
      %v1141 = vadd.f32 0.0, %v1140
      %v1142 = vpop.f32.mrf.mxu0
      %v1143 = vadd.f32 0.0, %v1142
      %1144 = vmatmul.bf16.gmra.mxu0 %v702
      %v1145 = vpop.f32.mrf.mxu0
      %v1146 = vadd.f32 0.0, %v1145
      %v1147 = vpop.f32.mrf.mxu0
      %v1148 = vadd.f32 0.0, %v1147
      %1149 = vmatmul.bf16.gmra.mxu0 %v705
      %v1150 = vpop.f32.mrf.mxu0
      %v1151 = vadd.f32 0.0, %v1150
      %v1152 = vpop.f32.mrf.mxu0
      %v1153 = vadd.f32 0.0, %v1152
      %1154 = vmatmul.bf16.gmra.mxu0 %v708
      %v1155 = vpop.f32.mrf.mxu0
      %v1156 = vadd.f32 0.0, %v1155
      %v1157 = vpop.f32.mrf.mxu0
      %v1158 = vadd.f32 0.0, %v1157
      %1159 = vmatmul.bf16.gmra.mxu0 %v711
      %v1160 = vpop.f32.mrf.mxu0
      %v1161 = vadd.f32 0.0, %v1160
      %v1162 = vpop.f32.mrf.mxu0
      %v1163 = vadd.f32 0.0, %v1162
      %1164 = vmatmul.bf16.gmra.mxu0 %v714
      %v1165 = vpop.f32.mrf.mxu0
      %v1166 = vadd.f32 0.0, %v1165
      %v1167 = vpop.f32.mrf.mxu0
      %v1168 = vadd.f32 0.0, %v1167
      %1169 = vmatmul.bf16.gmra.mxu0 %v717
      %v1170 = vpop.f32.mrf.mxu0
      %v1171 = vadd.f32 0.0, %v1170
      %v1172 = vpop.f32.mrf.mxu0
      %v1173 = vadd.f32 0.0, %v1172
      %1174 = vmatmul.bf16.gmra.mxu0 %v720
      %v1175 = vpop.f32.mrf.mxu0
      %v1176 = vadd.f32 0.0, %v1175
      %v1177 = vpop.f32.mrf.mxu0
      %v1178 = vadd.f32 0.0, %v1177
      %1179 = vmatmul.bf16.gmra.mxu0 %v723
      %v1180 = vpop.f32.mrf.mxu0
      %v1181 = vadd.f32 0.0, %v1180
      %v1182 = vpop.f32.mrf.mxu0
      %v1183 = vadd.f32 0.0, %v1182
      %1184 = vmatmul.bf16.gmra.mxu0 %v726
      %v1185 = vpop.f32.mrf.mxu0
      %v1186 = vadd.f32 0.0, %v1185
      %v1187 = vpop.f32.mrf.mxu0
      %v1188 = vadd.f32 0.0, %v1187
      %1189 = vmatmul.bf16.gmra.mxu0 %v729
      %v1190 = vpop.f32.mrf.mxu0
      %v1191 = vadd.f32 0.0, %v1190
      %v1192 = vpop.f32.mrf.mxu0
      %v1193 = vadd.f32 0.0, %v1192
      %1194 = vmatmul.bf16.gmra.mxu0 %v732
      %v1195 = vpop.f32.mrf.mxu0
      %v1196 = vadd.f32 0.0, %v1195
      %v1197 = vpop.f32.mrf.mxu0
      %v1198 = vadd.f32 0.0, %v1197
      %1199 = vmatmul.bf16.gmra.mxu0 %v735
      %v1200 = vpop.f32.mrf.mxu0
      %v1201 = vadd.f32 0.0, %v1200
      %v1202 = vpop.f32.mrf.mxu0
      %v1203 = vadd.f32 0.0, %v1202
      %1204 = vmatmul.bf16.gmra.mxu0 %v738
      %v1205 = vpop.f32.mrf.mxu0
      %v1206 = vadd.f32 0.0, %v1205
      %v1207 = vpop.f32.mrf.mxu0
      %v1208 = vadd.f32 0.0, %v1207
      %1209 = vmatmul.bf16.gmra.mxu0 %v741
      %v1210 = vpop.f32.mrf.mxu0
      %v1211 = vadd.f32 0.0, %v1210
      %v1212 = vpop.f32.mrf.mxu0
      %v1213 = vadd.f32 0.0, %v1212
      %1214 = vmatmul.bf16.gmra.mxu0 %v744
      %v1215 = vpop.f32.mrf.mxu0
      %v1216 = vadd.f32 0.0, %v1215
      %v1217 = vpop.f32.mrf.mxu0
      %v1218 = vadd.f32 0.0, %v1217
      %1219 = vmatmul.bf16.gmra.mxu0 %v747
      %v1220 = vpop.f32.mrf.mxu0
      %v1221 = vadd.f32 0.0, %v1220
      %v1222 = vpop.f32.mrf.mxu0
      %v1223 = vadd.f32 0.0, %v1222
      %1224 = vmatmul.bf16.gmra.mxu0 %v750
      %v1225 = vpop.f32.mrf.mxu0
      %v1226 = vadd.f32 0.0, %v1225
      %v1227 = vpop.f32.mrf.mxu0
      %v1228 = vadd.f32 0.0, %v1227
      %1229 = vmatmul.bf16.gmra.mxu0 %v753
      %v1230 = vpop.f32.mrf.mxu0
      %v1231 = vadd.f32 0.0, %v1230
      %v1232 = vpop.f32.mrf.mxu0
      %v1233 = vadd.f32 0.0, %v1232
      %1234 = vmatmul.bf16.gmra.mxu0 %v756
      %v1235 = vpop.f32.mrf.mxu0
      %v1236 = vadd.f32 0.0, %v1235
      %v1237 = vpop.f32.mrf.mxu0
      %v1238 = vadd.f32 0.0, %v1237
      %1239 = vmatmul.bf16.gmra.mxu0 %v759
      %v1240 = vpop.f32.mrf.mxu0
      %v1241 = vadd.f32 0.0, %v1240
      %v1242 = vpop.f32.mrf.mxu0
      %v1243 = vadd.f32 0.0, %v1242
      %1244 = vmatmul.bf16.gmra.mxu0 %v762
      %v1245 = vpop.f32.mrf.mxu0
      %v1246 = vadd.f32 0.0, %v1245
      %v1247 = vpop.f32.mrf.mxu0
      %v1248 = vadd.f32 0.0, %v1247
      %1249 = vmatmul.bf16.gmra.mxu0 %v765
      %v1250 = vpop.f32.mrf.mxu0
      %v1251 = vadd.f32 0.0, %v1250
      %v1252 = vpop.f32.mrf.mxu0
      %v1253 = vadd.f32 0.0, %v1252
      %1254 = vmatmul.bf16.gmra.mxu0 %v768
      %v1255 = vpop.f32.mrf.mxu0
      %v1256 = vadd.f32 0.0, %v1255
      %v1257 = vpop.f32.mrf.mxu0
      %v1258 = vadd.f32 0.0, %v1257
      %1259 = vmatmul.bf16.gmra.mxu0 %v771
      %v1260 = vpop.f32.mrf.mxu0
      %v1261 = vadd.f32 0.0, %v1260
      %v1262 = vpop.f32.mrf.mxu0
      %v1263 = vadd.f32 0.0, %v1262
      %1264 = vmatmul.bf16.gmra.mxu0 %v774
      %v1265 = vpop.f32.mrf.mxu0
      %v1266 = vadd.f32 0.0, %v1265
      %v1267 = vpop.f32.mrf.mxu0
      %v1268 = vadd.f32 0.0, %v1267
      %1269 = vmatmul.bf16.gmra.mxu0 %v777
      %v1270 = vpop.f32.mrf.mxu0
      %v1271 = vadd.f32 0.0, %v1270
      %v1272 = vpop.f32.mrf.mxu0
      %v1273 = vadd.f32 0.0, %v1272
      %1274 = vmatmul.bf16.gmra.mxu0 %v780
      %v1275 = vpop.f32.mrf.mxu0
      %v1276 = vadd.f32 0.0, %v1275
      %v1277 = vpop.f32.mrf.mxu0
      %v1278 = vadd.f32 0.0, %v1277
      %1279 = vmatmul.bf16.gmra.mxu0 %v783
      %v1280 = vpop.f32.mrf.mxu0
      %v1281 = vadd.f32 0.0, %v1280
      %v1282 = vpop.f32.mrf.mxu0
      %v1283 = vadd.f32 0.0, %v1282
      %1284 = vmatmul.bf16.gmra.mxu0 %v786
      %v1285 = vpop.f32.mrf.mxu0
      %v1286 = vadd.f32 0.0, %v1285
      %v1287 = vpop.f32.mrf.mxu0
      %v1288 = vadd.f32 0.0, %v1287
      %1289 = vmatmul.bf16.gmra.mxu0 %v789
      %v1290 = vpop.f32.mrf.mxu0
      %v1291 = vadd.f32 0.0, %v1290
      %v1292 = vpop.f32.mrf.mxu0
      %v1293 = vadd.f32 0.0, %v1292
      %1294 = vmatmul.bf16.gmra.mxu0 %v792
      %v1295 = vpop.f32.mrf.mxu0
      %v1296 = vadd.f32 0.0, %v1295
      %v1297 = vpop.f32.mrf.mxu0
      %v1298 = vadd.f32 0.0, %v1297
      %1299 = vmatmul.bf16.gmra.mxu0 %v795
      %v1300 = vpop.f32.mrf.mxu0
      %v1301 = vadd.f32 0.0, %v1300
      %v1302 = vpop.f32.mrf.mxu0
      %v1303 = vadd.f32 0.0, %v1302
      %1304 = vmatmul.bf16.gmra.mxu0 %v798
      %v1305 = vpop.f32.mrf.mxu0
      %v1306 = vadd.f32 0.0, %v1305
      %v1307 = vpop.f32.mrf.mxu0
      %v1308 = vadd.f32 0.0, %v1307
      %1309 = vmatmul.bf16.gmra.mxu0 %v801
      %v1310 = vpop.f32.mrf.mxu0
      %v1311 = vadd.f32 0.0, %v1310
      %v1312 = vpop.f32.mrf.mxu0
      %v1313 = vadd.f32 0.0, %v1312
      %1314 = vmatmul.bf16.gmra.mxu0 %v804
      %v1315 = vpop.f32.mrf.mxu0
      %v1316 = vadd.f32 0.0, %v1315
      %v1317 = vpop.f32.mrf.mxu0
      %v1318 = vadd.f32 0.0, %v1317
      %1319 = vmatmul.bf16.gmra.mxu0 %v807
      %v1320 = vpop.f32.mrf.mxu0
      %v1321 = vadd.f32 0.0, %v1320
      %v1322 = vpop.f32.mrf.mxu0
      %v1323 = vadd.f32 0.0, %v1322
      %1324 = vmatmul.bf16.gmra.mxu0 %v810
      %v1325 = vpop.f32.mrf.mxu0
      %v1326 = vadd.f32 0.0, %v1325
      %v1327 = vpop.f32.mrf.mxu0
      %v1328 = vadd.f32 0.0, %v1327
      %1329 = vmatmul.bf16.gmra.mxu0 %v813
      %v1330 = vpop.f32.mrf.mxu0
      %v1331 = vadd.f32 0.0, %v1330
      %v1332 = vpop.f32.mrf.mxu0
      %v1333 = vadd.f32 0.0, %v1332
      %1334 = vmatmul.bf16.gmra.mxu0 %v816
      %v1335 = vpop.f32.mrf.mxu0
      %v1336 = vadd.f32 0.0, %v1335
      %v1337 = vpop.f32.mrf.mxu0
      %v1338 = vadd.f32 0.0, %v1337
      %1339 = vmatmul.bf16.gmra.mxu0 %v819
      %v1340 = vpop.f32.mrf.mxu0
      %v1341 = vadd.f32 0.0, %v1340
      %v1342 = vpop.f32.mrf.mxu0
      %v1343 = vadd.f32 0.0, %v1342
      %1344 = vmatmul.bf16.gmra.mxu0 %v822
      %v1345 = vpop.f32.mrf.mxu0
      %v1346 = vadd.f32 0.0, %v1345
      %v1347 = vpop.f32.mrf.mxu0
      %v1348 = vadd.f32 0.0, %v1347
      %1349 = vmatmul.bf16.gmra.mxu0 %v825
      %v1350 = vpop.f32.mrf.mxu0
      %v1351 = vadd.f32 0.0, %v1350
      %v1352 = vpop.f32.mrf.mxu0
      %v1353 = vadd.f32 0.0, %v1352
      %1354 = vmatmul.bf16.gmra.mxu0 %v828
      %v1355 = vpop.f32.mrf.mxu0
      %v1356 = vadd.f32 0.0, %v1355
      %v1357 = vpop.f32.mrf.mxu0
      %v1358 = vadd.f32 0.0, %v1357
      %1359 = vmatmul.bf16.gmra.mxu0 %v831
      %v1360 = vpop.f32.mrf.mxu0
      %v1361 = vadd.f32 0.0, %v1360
      %v1362 = vpop.f32.mrf.mxu0
      %v1363 = vadd.f32 0.0, %v1362
      %1364 = vmatmul.bf16.gmra.mxu0 %v834
      %v1365 = vpop.f32.mrf.mxu0
      %v1366 = vadd.f32 0.0, %v1365
      %v1367 = vpop.f32.mrf.mxu0
      %v1368 = vadd.f32 0.0, %v1367
      %1369 = vmatmul.bf16.gmra.mxu0 %v837
      %v1370 = vpop.f32.mrf.mxu0
      %v1371 = vadd.f32 0.0, %v1370
      %v1372 = vpop.f32.mrf.mxu0
      %v1373 = vadd.f32 0.0, %v1372
      %1374 = vmatmul.bf16.gmra.mxu0 %v840
      %v1375 = vpop.f32.mrf.mxu0
      %v1376 = vadd.f32 0.0, %v1375
      %v1377 = vpop.f32.mrf.mxu0
      %v1378 = vadd.f32 0.0, %v1377
      %1379 = vmatmul.bf16.gmra.mxu0 %v843
      %v1380 = vpop.f32.mrf.mxu0
      %v1381 = vadd.f32 0.0, %v1380
      %v1382 = vpop.f32.mrf.mxu0
      %v1383 = vadd.f32 0.0, %v1382
      %1384 = vmatmul.bf16.gmra.mxu0 %v846
      %v1385 = vpop.f32.mrf.mxu0
      %v1386 = vadd.f32 0.0, %v1385
      %v1387 = vpop.f32.mrf.mxu0
      %v1388 = vadd.f32 0.0, %v1387
      %1389 = vmatmul.bf16.gmra.mxu0 %v849
      %v1390 = vpop.f32.mrf.mxu0
      %v1391 = vadd.f32 0.0, %v1390
      %v1392 = vpop.f32.mrf.mxu0
      %v1393 = vadd.f32 0.0, %v1392
      %1394 = vmatmul.bf16.gmra.mxu0 %v852
      %v1395 = vpop.f32.mrf.mxu0
      %v1396 = vadd.f32 0.0, %v1395
      %v1397 = vpop.f32.mrf.mxu0
      %v1398 = vadd.f32 0.0, %v1397
      %1399 = vmatmul.bf16.gmra.mxu0 %v855
      %v1400 = vpop.f32.mrf.mxu0
      %v1401 = vadd.f32 0.0, %v1400
      %v1402 = vpop.f32.mrf.mxu0
      %v1403 = vadd.f32 0.0, %v1402
      %1404 = vmatmul.bf16.gmra.mxu0 %v858
      %v1405 = vpop.f32.mrf.mxu0
      %v1406 = vadd.f32 0.0, %v1405
      %v1407 = vpop.f32.mrf.mxu0
      %v1408 = vadd.f32 0.0, %v1407
      %1409 = vmatmul.bf16.gmra.mxu0 %v861
      %v1410 = vpop.f32.mrf.mxu0
      %v1411 = vadd.f32 0.0, %v1410
      %v1412 = vpop.f32.mrf.mxu0
      %v1413 = vadd.f32 0.0, %v1412
      %1414 = vmatmul.bf16.gmra.mxu0 %v864
      %v1415 = vpop.f32.mrf.mxu0
      %v1416 = vadd.f32 0.0, %v1415
      %v1417 = vpop.f32.mrf.mxu0
      %v1418 = vadd.f32 0.0, %v1417
      %1419 = vmatmul.bf16.gmra.mxu0 %v867
      %v1420 = vpop.f32.mrf.mxu0
      %v1421 = vadd.f32 0.0, %v1420
      %v1422 = vpop.f32.mrf.mxu0
      %v1423 = vadd.f32 0.0, %v1422
      %1424 = vmatmul.bf16.gmra.mxu0 %v870
      %v1425 = vpop.f32.mrf.mxu0
      %v1426 = vadd.f32 0.0, %v1425
      %v1427 = vpop.f32.mrf.mxu0
      %v1428 = vadd.f32 0.0, %v1427
      %1429 = vmatmul.bf16.gmra.mxu0 %v873
      %v1430 = vpop.f32.mrf.mxu0
      %v1431 = vadd.f32 0.0, %v1430
      %v1432 = vpop.f32.mrf.mxu0
      %v1433 = vadd.f32 0.0, %v1432
      %1434 = vmatmul.bf16.gmra.mxu0 %v876
      %v1435 = vpop.f32.mrf.mxu0
      %v1436 = vadd.f32 0.0, %v1435
      %v1437 = vpop.f32.mrf.mxu0
      %v1438 = vadd.f32 0.0, %v1437
      %1439 = vmatmul.bf16.gmra.mxu0 %v879
      %v1440 = vpop.f32.mrf.mxu0
      %v1441 = vadd.f32 0.0, %v1440
      %v1442 = vpop.f32.mrf.mxu0
      %v1443 = vadd.f32 0.0, %v1442
      %1444 = vmatmul.bf16.gmra.mxu0 %v882
      %v1445 = vpop.f32.mrf.mxu0
      %v1446 = vadd.f32 0.0, %v1445
      %v1447 = vpop.f32.mrf.mxu0
      %v1448 = vadd.f32 0.0, %v1447
      %1449 = vmatmul.bf16.gmra.mxu0 %v885
      %v1450 = vpop.f32.mrf.mxu0
      %v1451 = vadd.f32 0.0, %v1450
      %v1452 = vpop.f32.mrf.mxu0
      %v1453 = vadd.f32 0.0, %v1452
      %1454 = vmatmul.bf16.gmra.mxu0 %v888
      %v1455 = vpop.f32.mrf.mxu0
      %v1456 = vadd.f32 0.0, %v1455
      %v1457 = vpop.f32.mrf.mxu0
      %v1458 = vadd.f32 0.0, %v1457
      %1459 = vmatmul.bf16.gmra.mxu0 %v891
      %v1460 = vpop.f32.mrf.mxu0
      %v1461 = vadd.f32 0.0, %v1460
      %v1462 = vpop.f32.mrf.mxu0
      %v1463 = vadd.f32 0.0, %v1462
      %1464 = vmatmul.bf16.gmra.mxu0 %v894
      %v1465 = vpop.f32.mrf.mxu0
      %v1466 = vadd.f32 0.0, %v1465
      %v1467 = vpop.f32.mrf.mxu0
      %v1468 = vadd.f32 0.0, %v1467
      %1469 = vmatmul.bf16.gmra.mxu0 %v897
      %v1470 = vpop.f32.mrf.mxu0
      %v1471 = vadd.f32 0.0, %v1470
      %v1472 = vpop.f32.mrf.mxu0
      %v1473 = vadd.f32 0.0, %v1472
      %1474 = vmatmul.bf16.gmra.mxu0 %v900
      %v1475 = vpop.f32.mrf.mxu0
      %v1476 = vadd.f32 0.0, %v1475
      %v1477 = vpop.f32.mrf.mxu0
      %v1478 = vadd.f32 0.0, %v1477
      %1479 = vmatmul.bf16.gmra.mxu0 %v903
      %v1480 = vpop.f32.mrf.mxu0
      %v1481 = vadd.f32 0.0, %v1480
      %v1482 = vpop.f32.mrf.mxu0
      %v1483 = vadd.f32 0.0, %v1482
      %1484 = vmatmul.bf16.gmra.mxu0 %v906
      %v1485 = vpop.f32.mrf.mxu0
      %v1486 = vadd.f32 0.0, %v1485
      %v1487 = vpop.f32.mrf.mxu0
      %v1488 = vadd.f32 0.0, %v1487
      %1489 = vmatmul.bf16.gmra.mxu0 %v909
      %v1490 = vpop.f32.mrf.mxu0
      %v1491 = vadd.f32 0.0, %v1490
      %v1492 = vpop.f32.mrf.mxu0
      %v1493 = vadd.f32 0.0, %v1492
      %1494 = vmatmul.bf16.gmra.mxu0 %v912
      %v1495 = vpop.f32.mrf.mxu0
      %v1496 = vadd.f32 0.0, %v1495
      %v1497 = vpop.f32.mrf.mxu0
      %v1498 = vadd.f32 0.0, %v1497
      %1499 = vmatmul.bf16.gmra.mxu0 %v915
      %v1500 = vpop.f32.mrf.mxu0
      %v1501 = vadd.f32 0.0, %v1500
      %v1502 = vpop.f32.mrf.mxu0
      %v1503 = vadd.f32 0.0, %v1502
      %1504 = vmatmul.bf16.gmra.mxu0 %v918
      %v1505 = vpop.f32.mrf.mxu0
      %v1506 = vadd.f32 0.0, %v1505
      %v1507 = vpop.f32.mrf.mxu0
      %v1508 = vadd.f32 0.0, %v1507
      %1509 = vmatmul.bf16.gmra.mxu0 %v921
      %v1510 = vpop.f32.mrf.mxu0
      %v1511 = vadd.f32 0.0, %v1510
      %v1512 = vpop.f32.mrf.mxu0
      %v1513 = vadd.f32 0.0, %v1512
      %1514 = vmatmul.bf16.gmra.mxu0 %v924
      %v1515 = vpop.f32.mrf.mxu0
      %v1516 = vadd.f32 0.0, %v1515
      %v1517 = vpop.f32.mrf.mxu0
      %v1518 = vadd.f32 0.0, %v1517
      %1519 = vmatmul.bf16.gmra.mxu0 %v927
      %v1520 = vpop.f32.mrf.mxu0
      %v1521 = vadd.f32 0.0, %v1520
      %v1522 = vpop.f32.mrf.mxu0
      %v1523 = vadd.f32 0.0, %v1522
      %1524 = vmatmul.bf16.gmra.mxu0 %v930
      %v1525 = vpop.f32.mrf.mxu0
      %v1526 = vadd.f32 0.0, %v1525
      %v1527 = vpop.f32.mrf.mxu0
      %v1528 = vadd.f32 0.0, %v1527
      %1529 = vmatmul.bf16.gmra.mxu0 %v933
      %v1530 = vpop.f32.mrf.mxu0
      %v1531 = vadd.f32 0.0, %v1530
      %v1532 = vpop.f32.mrf.mxu0
      %v1533 = vadd.f32 0.0, %v1532
      %1534 = vmatmul.bf16.gmra.mxu0 %v936
      %v1535 = vpop.f32.mrf.mxu0
      %v1536 = vadd.f32 0.0, %v1535
      %v1537 = vpop.f32.mrf.mxu0
      %v1538 = vadd.f32 0.0, %v1537
      %1539 = vmatmul.bf16.gmra.mxu0 %v939
      %v1540 = vpop.f32.mrf.mxu0
      %v1541 = vadd.f32 0.0, %v1540
      %v1542 = vpop.f32.mrf.mxu0
      %v1543 = vadd.f32 0.0, %v1542
      %1544 = vmatmul.bf16.gmra.mxu0 %v942
      %v1545 = vpop.f32.mrf.mxu0
      %v1546 = vadd.f32 0.0, %v1545
      %v1547 = vpop.f32.mrf.mxu0
      %v1548 = vadd.f32 0.0, %v1547
      %1549 = vmatmul.bf16.gmra.mxu0 %v945
      %v1550 = vpop.f32.mrf.mxu0
      %v1551 = vadd.f32 0.0, %v1550
      %v1552 = vpop.f32.mrf.mxu0
      %v1553 = vadd.f32 0.0, %v1552
      %1554 = vmatmul.bf16.gmra.mxu0 %v948
      %v1555 = vpop.f32.mrf.mxu0
      %v1556 = vadd.f32 0.0, %v1555
      %v1557 = vpop.f32.mrf.mxu0
      %v1558 = vadd.f32 0.0, %v1557
      %1559 = vmatmul.bf16.gmra.mxu0 %v951
      %v1560 = vpop.f32.mrf.mxu0
      %v1561 = vadd.f32 0.0, %v1560
      %v1562 = vpop.f32.mrf.mxu0
      %v1563 = vadd.f32 0.0, %v1562
      %1564 = vmatmul.bf16.gmra.mxu0 %v954
      %v1565 = vpop.f32.mrf.mxu0
      %v1566 = vadd.f32 0.0, %v1565
      %v1567 = vpop.f32.mrf.mxu0
      %v1568 = vadd.f32 0.0, %v1567
      %1569 = vmatmul.bf16.gmra.mxu0 %v957
      %v1570 = vpop.f32.mrf.mxu0
      %v1571 = vadd.f32 0.0, %v1570
      %v1572 = vpop.f32.mrf.mxu0
      %v1573 = vadd.f32 0.0, %v1572
      %1574 = vmatmul.bf16.gmra.mxu0 %v960
      %v1575 = vpop.f32.mrf.mxu0
      %v1576 = vadd.f32 0.0, %v1575
      %v1577 = vpop.f32.mrf.mxu0
      %v1578 = vadd.f32 0.0, %v1577
      %1579 = vmatmul.bf16.gmra.mxu0 %v963
      %v1580 = vpop.f32.mrf.mxu0
      %v1581 = vadd.f32 0.0, %v1580
      %v1582 = vpop.f32.mrf.mxu0
      %v1583 = vadd.f32 0.0, %v1582
      %1584 = vmatmul.bf16.gmra.mxu0 %v966
      %v1585 = vpop.f32.mrf.mxu0
      %v1586 = vadd.f32 0.0, %v1585
      %v1587 = vpop.f32.mrf.mxu0
      %v1588 = vadd.f32 0.0, %v1587
      %1589 = vmatmul.bf16.gmra.mxu0 %v969
      %v1590 = vpop.f32.mrf.mxu0
      %v1591 = vadd.f32 0.0, %v1590
      %v1592 = vpop.f32.mrf.mxu0
      %v1593 = vadd.f32 0.0, %v1592
      %1594 = vmatmul.bf16.gmra.mxu0 %v972
      %v1595 = vpop.f32.mrf.mxu0
      %v1596 = vadd.f32 0.0, %v1595
      %v1597 = vpop.f32.mrf.mxu0
      %v1598 = vadd.f32 0.0, %v1597
      %1599 = vmatmul.bf16.gmra.mxu0 %v975
      %v1600 = vpop.f32.mrf.mxu0
      %v1601 = vadd.f32 0.0, %v1600
      %v1602 = vpop.f32.mrf.mxu0
      %v1603 = vadd.f32 0.0, %v1602
      %1604 = vmatmul.bf16.gmra.mxu0 %v978
      %v1605 = vpop.f32.mrf.mxu0
      %v1606 = vadd.f32 0.0, %v1605
      %v1607 = vpop.f32.mrf.mxu0
      %v1608 = vadd.f32 0.0, %v1607
      %1609 = vmatmul.bf16.gmra.mxu0 %v981
      %v1610 = vpop.f32.mrf.mxu0
      %v1611 = vadd.f32 0.0, %v1610
      %v1612 = vpop.f32.mrf.mxu0
      %v1613 = vadd.f32 0.0, %v1612
      %1614 = vmatmul.bf16.gmra.mxu0 %v984
      %v1615 = vpop.f32.mrf.mxu0
      %v1616 = vadd.f32 0.0, %v1615
      %v1617 = vpop.f32.mrf.mxu0
      %v1618 = vadd.f32 0.0, %v1617
      %1619 = vmatmul.bf16.gmra.mxu0 %v987
      %v1620 = vpop.f32.mrf.mxu0
      %v1621 = vadd.f32 0.0, %v1620
      %v1622 = vpop.f32.mrf.mxu0
      %v1623 = vadd.f32 0.0, %v1622
      %1624 = vmatmul.bf16.gmra.mxu0 %v990
      %v1625 = vpop.f32.mrf.mxu0
      %v1626 = vadd.f32 0.0, %v1625
      %v1627 = vpop.f32.mrf.mxu0
      %v1628 = vadd.f32 0.0, %v1627
      %1629 = vmatmul.bf16.gmra.mxu0 %v993
      %v1630 = vpop.f32.mrf.mxu0
      %v1631 = vadd.f32 0.0, %v1630
      %v1632 = vpop.f32.mrf.mxu0
      %v1633 = vadd.f32 0.0, %v1632
      %1634 = vmatmul.bf16.gmra.mxu0 %v996
      %v1635 = vpop.f32.mrf.mxu0
      %v1636 = vadd.f32 0.0, %v1635
      %v1637 = vpop.f32.mrf.mxu0
      %v1638 = vadd.f32 0.0, %v1637
      %1639 = vmatmul.bf16.gmra.mxu0 %v999
      %v1640 = vpop.f32.mrf.mxu0
      %v1641 = vadd.f32 0.0, %v1640
      %v1642 = vpop.f32.mrf.mxu0
      %v1643 = vadd.f32 0.0, %v1642
      %1644 = vmatmul.bf16.gmra.mxu0 %v1002
      %v1645 = vpop.f32.mrf.mxu0
      %v1646 = vadd.f32 0.0, %v1645
      %v1647 = vpop.f32.mrf.mxu0
      %v1648 = vadd.f32 0.0, %v1647
      %1649 = vmatmul.bf16.gmra.mxu0 %v1005
      %v1650 = vpop.f32.mrf.mxu0
      %v1651 = vadd.f32 0.0, %v1650
      %v1652 = vpop.f32.mrf.mxu0
      %v1653 = vadd.f32 0.0, %v1652
      %1654 = vmatmul.bf16.gmra.mxu0 %v1008
      %v1655 = vpop.f32.mrf.mxu0
      %v1656 = vadd.f32 0.0, %v1655
      %v1657 = vpop.f32.mrf.mxu0
      %v1658 = vadd.f32 0.0, %v1657
      %1659 = vmatmul.bf16.gmra.mxu0 %v1011
      %v1660 = vpop.f32.mrf.mxu0
      %v1661 = vadd.f32 0.0, %v1660
      %v1662 = vpop.f32.mrf.mxu0
      %v1663 = vadd.f32 0.0, %v1662
      %1664 = vmatmul.bf16.gmra.mxu0 %v1014
      %v1665 = vpop.f32.mrf.mxu0
      %v1666 = vadd.f32 0.0, %v1665
      %v1667 = vpop.f32.mrf.mxu0
      %v1668 = vadd.f32 0.0, %v1667
      %1669 = vmatmul.bf16.gmra.mxu0 %v1017
      %v1670 = vpop.f32.mrf.mxu0
      %v1671 = vadd.f32 0.0, %v1670
      %v1672 = vpop.f32.mrf.mxu0
      %v1673 = vadd.f32 0.0, %v1672
      %1674 = vdwg.mxu0
      %v1675 = vld [vmem:[%s2] sm:$0x1]
      %v1677 = vperm.slane %v1675, 0
      %v1679 = vmul.f32 %v1036, %v1677
      %v1680 = vmul.f32 %v1038, %v1677
      %v1681 = vmul.f32 %v1041, %v1677
      %v1682 = vmul.f32 %v1043, %v1677
      %v1683 = vmul.f32 %v1046, %v1677
      %v1684 = vmul.f32 %v1048, %v1677
      %v1685 = vmul.f32 %v1051, %v1677
      %v1686 = vmul.f32 %v1053, %v1677
      %v1687 = vmul.f32 %v1056, %v1677
      %v1688 = vmul.f32 %v1058, %v1677
      %v1689 = vmul.f32 %v1061, %v1677
      %v1690 = vmul.f32 %v1063, %v1677
      %v1691 = vmul.f32 %v1066, %v1677
      %v1692 = vmul.f32 %v1068, %v1677
      %v1693 = vmul.f32 %v1071, %v1677
      %v1694 = vmul.f32 %v1073, %v1677
      %v1695 = vmul.f32 %v1076, %v1677
      %v1696 = vmul.f32 %v1078, %v1677
      %v1697 = vmul.f32 %v1081, %v1677
      %v1698 = vmul.f32 %v1083, %v1677
      %v1699 = vmul.f32 %v1086, %v1677
      %v1700 = vmul.f32 %v1088, %v1677
      %v1701 = vmul.f32 %v1091, %v1677
      %v1702 = vmul.f32 %v1093, %v1677
      %v1703 = vmul.f32 %v1096, %v1677
      %v1704 = vmul.f32 %v1098, %v1677
      %v1705 = vmul.f32 %v1101, %v1677
      %v1706 = vmul.f32 %v1103, %v1677
      %v1707 = vmul.f32 %v1106, %v1677
      %v1708 = vmul.f32 %v1108, %v1677
      %v1709 = vmul.f32 %v1111, %v1677
      %v1710 = vmul.f32 %v1113, %v1677
      %v1711 = vmul.f32 %v1116, %v1677
      %v1712 = vmul.f32 %v1118, %v1677
      %v1713 = vmul.f32 %v1121, %v1677
      %v1714 = vmul.f32 %v1123, %v1677
      %v1715 = vmul.f32 %v1126, %v1677
      %v1716 = vmul.f32 %v1128, %v1677
      %v1717 = vmul.f32 %v1131, %v1677
      %v1718 = vmul.f32 %v1133, %v1677
      %v1719 = vmul.f32 %v1136, %v1677
      %v1720 = vmul.f32 %v1138, %v1677
      %v1721 = vmul.f32 %v1141, %v1677
      %v1722 = vmul.f32 %v1143, %v1677
      %v1723 = vmul.f32 %v1146, %v1677
      %v1724 = vmul.f32 %v1148, %v1677
      %v1725 = vmul.f32 %v1151, %v1677
      %v1726 = vmul.f32 %v1153, %v1677
      %v1727 = vmul.f32 %v1156, %v1677
      %v1728 = vmul.f32 %v1158, %v1677
      %v1729 = vmul.f32 %v1161, %v1677
      %v1730 = vmul.f32 %v1163, %v1677
      %v1731 = vmul.f32 %v1166, %v1677
      %v1732 = vmul.f32 %v1168, %v1677
      %v1733 = vmul.f32 %v1171, %v1677
      %v1734 = vmul.f32 %v1173, %v1677
      %v1735 = vmul.f32 %v1176, %v1677
      %v1736 = vmul.f32 %v1178, %v1677
      %v1737 = vmul.f32 %v1181, %v1677
      %v1738 = vmul.f32 %v1183, %v1677
      %v1739 = vmul.f32 %v1186, %v1677
      %v1740 = vmul.f32 %v1188, %v1677
      %v1741 = vmul.f32 %v1191, %v1677
      %v1742 = vmul.f32 %v1193, %v1677
      %v1743 = vmul.f32 %v1196, %v1677
      %v1744 = vmul.f32 %v1198, %v1677
      %v1745 = vmul.f32 %v1201, %v1677
      %v1746 = vmul.f32 %v1203, %v1677
      %v1747 = vmul.f32 %v1206, %v1677
      %v1748 = vmul.f32 %v1208, %v1677
      %v1749 = vmul.f32 %v1211, %v1677
      %v1750 = vmul.f32 %v1213, %v1677
      %v1751 = vmul.f32 %v1216, %v1677
      %v1752 = vmul.f32 %v1218, %v1677
      %v1753 = vmul.f32 %v1221, %v1677
      %v1754 = vmul.f32 %v1223, %v1677
      %v1755 = vmul.f32 %v1226, %v1677
      %v1756 = vmul.f32 %v1228, %v1677
      %v1757 = vmul.f32 %v1231, %v1677
      %v1758 = vmul.f32 %v1233, %v1677
      %v1759 = vmul.f32 %v1236, %v1677
      %v1760 = vmul.f32 %v1238, %v1677
      %v1761 = vmul.f32 %v1241, %v1677
      %v1762 = vmul.f32 %v1243, %v1677
      %v1763 = vmul.f32 %v1246, %v1677
      %v1764 = vmul.f32 %v1248, %v1677
      %v1765 = vmul.f32 %v1251, %v1677
      %v1766 = vmul.f32 %v1253, %v1677
      %v1767 = vmul.f32 %v1256, %v1677
      %v1768 = vmul.f32 %v1258, %v1677
      %v1769 = vmul.f32 %v1261, %v1677
      %v1770 = vmul.f32 %v1263, %v1677
      %v1771 = vmul.f32 %v1266, %v1677
      %v1772 = vmul.f32 %v1268, %v1677
      %v1773 = vmul.f32 %v1271, %v1677
      %v1774 = vmul.f32 %v1273, %v1677
      %v1775 = vmul.f32 %v1276, %v1677
      %v1776 = vmul.f32 %v1278, %v1677
      %v1777 = vmul.f32 %v1281, %v1677
      %v1778 = vmul.f32 %v1283, %v1677
      %v1779 = vmul.f32 %v1286, %v1677
      %v1780 = vmul.f32 %v1288, %v1677
      %v1781 = vmul.f32 %v1291, %v1677
      %v1782 = vmul.f32 %v1293, %v1677
      %v1783 = vmul.f32 %v1296, %v1677
      %v1784 = vmul.f32 %v1298, %v1677
      %v1785 = vmul.f32 %v1301, %v1677
      %v1786 = vmul.f32 %v1303, %v1677
      %v1787 = vmul.f32 %v1306, %v1677
      %v1788 = vmul.f32 %v1308, %v1677
      %v1789 = vmul.f32 %v1311, %v1677
      %v1790 = vmul.f32 %v1313, %v1677
      %v1791 = vmul.f32 %v1316, %v1677
      %v1792 = vmul.f32 %v1318, %v1677
      %v1793 = vmul.f32 %v1321, %v1677
      %v1794 = vmul.f32 %v1323, %v1677
      %v1795 = vmul.f32 %v1326, %v1677
      %v1796 = vmul.f32 %v1328, %v1677
      %v1797 = vmul.f32 %v1331, %v1677
      %v1798 = vmul.f32 %v1333, %v1677
      %v1799 = vmul.f32 %v1336, %v1677
      %v1800 = vmul.f32 %v1338, %v1677
      %v1801 = vmul.f32 %v1341, %v1677
      %v1802 = vmul.f32 %v1343, %v1677
      %v1803 = vmul.f32 %v1346, %v1677
      %v1804 = vmul.f32 %v1348, %v1677
      %v1805 = vmul.f32 %v1351, %v1677
      %v1806 = vmul.f32 %v1353, %v1677
      %v1807 = vmul.f32 %v1356, %v1677
      %v1808 = vmul.f32 %v1358, %v1677
      %v1809 = vmul.f32 %v1361, %v1677
      %v1810 = vmul.f32 %v1363, %v1677
      %v1811 = vmul.f32 %v1366, %v1677
      %v1812 = vmul.f32 %v1368, %v1677
      %v1813 = vmul.f32 %v1371, %v1677
      %v1814 = vmul.f32 %v1373, %v1677
      %v1815 = vmul.f32 %v1376, %v1677
      %v1816 = vmul.f32 %v1378, %v1677
      %v1817 = vmul.f32 %v1381, %v1677
      %v1818 = vmul.f32 %v1383, %v1677
      %v1819 = vmul.f32 %v1386, %v1677
      %v1820 = vmul.f32 %v1388, %v1677
      %v1821 = vmul.f32 %v1391, %v1677
      %v1822 = vmul.f32 %v1393, %v1677
      %v1823 = vmul.f32 %v1396, %v1677
      %v1824 = vmul.f32 %v1398, %v1677
      %v1825 = vmul.f32 %v1401, %v1677
      %v1826 = vmul.f32 %v1403, %v1677
      %v1827 = vmul.f32 %v1406, %v1677
      %v1828 = vmul.f32 %v1408, %v1677
      %v1829 = vmul.f32 %v1411, %v1677
      %v1830 = vmul.f32 %v1413, %v1677
      %v1831 = vmul.f32 %v1416, %v1677
      %v1832 = vmul.f32 %v1418, %v1677
      %v1833 = vmul.f32 %v1421, %v1677
      %v1834 = vmul.f32 %v1423, %v1677
      %v1835 = vmul.f32 %v1426, %v1677
      %v1836 = vmul.f32 %v1428, %v1677
      %v1837 = vmul.f32 %v1431, %v1677
      %v1838 = vmul.f32 %v1433, %v1677
      %v1839 = vmul.f32 %v1436, %v1677
      %v1840 = vmul.f32 %v1438, %v1677
      %v1841 = vmul.f32 %v1441, %v1677
      %v1842 = vmul.f32 %v1443, %v1677
      %v1843 = vmul.f32 %v1446, %v1677
      %v1844 = vmul.f32 %v1448, %v1677
      %v1845 = vmul.f32 %v1451, %v1677
      %v1846 = vmul.f32 %v1453, %v1677
      %v1847 = vmul.f32 %v1456, %v1677
      %v1848 = vmul.f32 %v1458, %v1677
      %v1849 = vmul.f32 %v1461, %v1677
      %v1850 = vmul.f32 %v1463, %v1677
      %v1851 = vmul.f32 %v1466, %v1677
      %v1852 = vmul.f32 %v1468, %v1677
      %v1853 = vmul.f32 %v1471, %v1677
      %v1854 = vmul.f32 %v1473, %v1677
      %v1855 = vmul.f32 %v1476, %v1677
      %v1856 = vmul.f32 %v1478, %v1677
      %v1857 = vmul.f32 %v1481, %v1677
      %v1858 = vmul.f32 %v1483, %v1677
      %v1859 = vmul.f32 %v1486, %v1677
      %v1860 = vmul.f32 %v1488, %v1677
      %v1861 = vmul.f32 %v1491, %v1677
      %v1862 = vmul.f32 %v1493, %v1677
      %v1863 = vmul.f32 %v1496, %v1677
      %v1864 = vmul.f32 %v1498, %v1677
      %v1865 = vmul.f32 %v1501, %v1677
      %v1866 = vmul.f32 %v1503, %v1677
      %v1867 = vmul.f32 %v1506, %v1677
      %v1868 = vmul.f32 %v1508, %v1677
      %v1869 = vmul.f32 %v1511, %v1677
      %v1870 = vmul.f32 %v1513, %v1677
      %v1871 = vmul.f32 %v1516, %v1677
      %v1872 = vmul.f32 %v1518, %v1677
      %v1873 = vmul.f32 %v1521, %v1677
      %v1874 = vmul.f32 %v1523, %v1677
      %v1875 = vmul.f32 %v1526, %v1677
      %v1876 = vmul.f32 %v1528, %v1677
      %v1877 = vmul.f32 %v1531, %v1677
      %v1878 = vmul.f32 %v1533, %v1677
      %v1879 = vmul.f32 %v1536, %v1677
      %v1880 = vmul.f32 %v1538, %v1677
      %v1881 = vmul.f32 %v1541, %v1677
      %v1882 = vmul.f32 %v1543, %v1677
      %v1883 = vmul.f32 %v1546, %v1677
      %v1884 = vmul.f32 %v1548, %v1677
      %v1885 = vmul.f32 %v1551, %v1677
      %v1886 = vmul.f32 %v1553, %v1677
      %v1887 = vmul.f32 %v1556, %v1677
      %v1888 = vmul.f32 %v1558, %v1677
      %v1889 = vmul.f32 %v1561, %v1677
      %v1890 = vmul.f32 %v1563, %v1677
      %v1891 = vmul.f32 %v1566, %v1677
      %v1892 = vmul.f32 %v1568, %v1677
      %v1893 = vmul.f32 %v1571, %v1677
      %v1894 = vmul.f32 %v1573, %v1677
      %v1895 = vmul.f32 %v1576, %v1677
      %v1896 = vmul.f32 %v1578, %v1677
      %v1897 = vmul.f32 %v1581, %v1677
      %v1898 = vmul.f32 %v1583, %v1677
      %v1899 = vmul.f32 %v1586, %v1677
      %v1900 = vmul.f32 %v1588, %v1677
      %v1901 = vmul.f32 %v1591, %v1677
      %v1902 = vmul.f32 %v1593, %v1677
      %v1903 = vmul.f32 %v1596, %v1677
      %v1904 = vmul.f32 %v1598, %v1677
      %v1905 = vmul.f32 %v1601, %v1677
      %v1906 = vmul.f32 %v1603, %v1677
      %v1907 = vmul.f32 %v1606, %v1677
      %v1908 = vmul.f32 %v1608, %v1677
      %v1909 = vmul.f32 %v1611, %v1677
      %v1910 = vmul.f32 %v1613, %v1677
      %v1911 = vmul.f32 %v1616, %v1677
      %v1912 = vmul.f32 %v1618, %v1677
      %v1913 = vmul.f32 %v1621, %v1677
      %v1914 = vmul.f32 %v1623, %v1677
      %v1915 = vmul.f32 %v1626, %v1677
      %v1916 = vmul.f32 %v1628, %v1677
      %v1917 = vmul.f32 %v1631, %v1677
      %v1918 = vmul.f32 %v1633, %v1677
      %v1919 = vmul.f32 %v1636, %v1677
      %v1920 = vmul.f32 %v1638, %v1677
      %v1921 = vmul.f32 %v1641, %v1677
      %v1922 = vmul.f32 %v1643, %v1677
      %v1923 = vmul.f32 %v1646, %v1677
      %v1924 = vmul.f32 %v1648, %v1677
      %v1925 = vmul.f32 %v1651, %v1677
      %v1926 = vmul.f32 %v1653, %v1677
      %v1927 = vmul.f32 %v1656, %v1677
      %v1928 = vmul.f32 %v1658, %v1677
      %v1929 = vmul.f32 %v1661, %v1677
      %v1930 = vmul.f32 %v1663, %v1677
      %v1931 = vmul.f32 %v1666, %v1677
      %v1932 = vmul.f32 %v1668, %v1677
      %v1933 = vmul.f32 %v1671, %v1677
      %v1934 = vmul.f32 %v1673, %v1677
      %v1935 = vld [vmem:[%s3] sm:$0x1]
      %v1937 = vperm.slane %v1935, 0
      %v1939 = vadd.f32 %v1679, %v1937
      %v1940 = vadd.f32 %v1680, %v1937
      %v1941 = vadd.f32 %v1681, %v1937
      %v1942 = vadd.f32 %v1682, %v1937
      %v1943 = vadd.f32 %v1683, %v1937
      %v1944 = vadd.f32 %v1684, %v1937
      %v1945 = vadd.f32 %v1685, %v1937
      %v1946 = vadd.f32 %v1686, %v1937
      %v1947 = vadd.f32 %v1687, %v1937
      %v1948 = vadd.f32 %v1688, %v1937
      %v1949 = vadd.f32 %v1689, %v1937
      %v1950 = vadd.f32 %v1690, %v1937
      %v1951 = vadd.f32 %v1691, %v1937
      %v1952 = vadd.f32 %v1692, %v1937
      %v1953 = vadd.f32 %v1693, %v1937
      %v1954 = vadd.f32 %v1694, %v1937
      %v1955 = vadd.f32 %v1695, %v1937
      %v1956 = vadd.f32 %v1696, %v1937
      %v1957 = vadd.f32 %v1697, %v1937
      %v1958 = vadd.f32 %v1698, %v1937
      %v1959 = vadd.f32 %v1699, %v1937
      %v1960 = vadd.f32 %v1700, %v1937
      %v1961 = vadd.f32 %v1701, %v1937
      %v1962 = vadd.f32 %v1702, %v1937
      %v1963 = vadd.f32 %v1703, %v1937
      %v1964 = vadd.f32 %v1704, %v1937
      %v1965 = vadd.f32 %v1705, %v1937
      %v1966 = vadd.f32 %v1706, %v1937
      %v1967 = vadd.f32 %v1707, %v1937
      %v1968 = vadd.f32 %v1708, %v1937
      %v1969 = vadd.f32 %v1709, %v1937
      %v1970 = vadd.f32 %v1710, %v1937
      %v1971 = vadd.f32 %v1711, %v1937
      %v1972 = vadd.f32 %v1712, %v1937
      %v1973 = vadd.f32 %v1713, %v1937
      %v1974 = vadd.f32 %v1714, %v1937
      %v1975 = vadd.f32 %v1715, %v1937
      %v1976 = vadd.f32 %v1716, %v1937
      %v1977 = vadd.f32 %v1717, %v1937
      %v1978 = vadd.f32 %v1718, %v1937
      %v1979 = vadd.f32 %v1719, %v1937
      %v1980 = vadd.f32 %v1720, %v1937
      %v1981 = vadd.f32 %v1721, %v1937
      %v1982 = vadd.f32 %v1722, %v1937
      %v1983 = vadd.f32 %v1723, %v1937
      %v1984 = vadd.f32 %v1724, %v1937
      %v1985 = vadd.f32 %v1725, %v1937
      %v1986 = vadd.f32 %v1726, %v1937
      %v1987 = vadd.f32 %v1727, %v1937
      %v1988 = vadd.f32 %v1728, %v1937
      %v1989 = vadd.f32 %v1729, %v1937
      %v1990 = vadd.f32 %v1730, %v1937
      %v1991 = vadd.f32 %v1731, %v1937
      %v1992 = vadd.f32 %v1732, %v1937
      %v1993 = vadd.f32 %v1733, %v1937
      %v1994 = vadd.f32 %v1734, %v1937
      %v1995 = vadd.f32 %v1735, %v1937
      %v1996 = vadd.f32 %v1736, %v1937
      %v1997 = vadd.f32 %v1737, %v1937
      %v1998 = vadd.f32 %v1738, %v1937
      %v1999 = vadd.f32 %v1739, %v1937
      %v2000 = vadd.f32 %v1740, %v1937
      %v2001 = vadd.f32 %v1741, %v1937
      %v2002 = vadd.f32 %v1742, %v1937
      %v2003 = vadd.f32 %v1743, %v1937
      %v2004 = vadd.f32 %v1744, %v1937
      %v2005 = vadd.f32 %v1745, %v1937
      %v2006 = vadd.f32 %v1746, %v1937
      %v2007 = vadd.f32 %v1747, %v1937
      %v2008 = vadd.f32 %v1748, %v1937
      %v2009 = vadd.f32 %v1749, %v1937
      %v2010 = vadd.f32 %v1750, %v1937
      %v2011 = vadd.f32 %v1751, %v1937
      %v2012 = vadd.f32 %v1752, %v1937
      %v2013 = vadd.f32 %v1753, %v1937
      %v2014 = vadd.f32 %v1754, %v1937
      %v2015 = vadd.f32 %v1755, %v1937
      %v2016 = vadd.f32 %v1756, %v1937
      %v2017 = vadd.f32 %v1757, %v1937
      %v2018 = vadd.f32 %v1758, %v1937
      %v2019 = vadd.f32 %v1759, %v1937
      %v2020 = vadd.f32 %v1760, %v1937
      %v2021 = vadd.f32 %v1761, %v1937
      %v2022 = vadd.f32 %v1762, %v1937
      %v2023 = vadd.f32 %v1763, %v1937
      %v2024 = vadd.f32 %v1764, %v1937
      %v2025 = vadd.f32 %v1765, %v1937
      %v2026 = vadd.f32 %v1766, %v1937
      %v2027 = vadd.f32 %v1767, %v1937
      %v2028 = vadd.f32 %v1768, %v1937
      %v2029 = vadd.f32 %v1769, %v1937
      %v2030 = vadd.f32 %v1770, %v1937
      %v2031 = vadd.f32 %v1771, %v1937
      %v2032 = vadd.f32 %v1772, %v1937
      %v2033 = vadd.f32 %v1773, %v1937
      %v2034 = vadd.f32 %v1774, %v1937
      %v2035 = vadd.f32 %v1775, %v1937
      %v2036 = vadd.f32 %v1776, %v1937
      %v2037 = vadd.f32 %v1777, %v1937
      %v2038 = vadd.f32 %v1778, %v1937
      %v2039 = vadd.f32 %v1779, %v1937
      %v2040 = vadd.f32 %v1780, %v1937
      %v2041 = vadd.f32 %v1781, %v1937
      %v2042 = vadd.f32 %v1782, %v1937
      %v2043 = vadd.f32 %v1783, %v1937
      %v2044 = vadd.f32 %v1784, %v1937
      %v2045 = vadd.f32 %v1785, %v1937
      %v2046 = vadd.f32 %v1786, %v1937
      %v2047 = vadd.f32 %v1787, %v1937
      %v2048 = vadd.f32 %v1788, %v1937
      %v2049 = vadd.f32 %v1789, %v1937
      %v2050 = vadd.f32 %v1790, %v1937
      %v2051 = vadd.f32 %v1791, %v1937
      %v2052 = vadd.f32 %v1792, %v1937
      %v2053 = vadd.f32 %v1793, %v1937
      %v2054 = vadd.f32 %v1794, %v1937
      %v2055 = vadd.f32 %v1795, %v1937
      %v2056 = vadd.f32 %v1796, %v1937
      %v2057 = vadd.f32 %v1797, %v1937
      %v2058 = vadd.f32 %v1798, %v1937
      %v2059 = vadd.f32 %v1799, %v1937
      %v2060 = vadd.f32 %v1800, %v1937
      %v2061 = vadd.f32 %v1801, %v1937
      %v2062 = vadd.f32 %v1802, %v1937
      %v2063 = vadd.f32 %v1803, %v1937
      %v2064 = vadd.f32 %v1804, %v1937
      %v2065 = vadd.f32 %v1805, %v1937
      %v2066 = vadd.f32 %v1806, %v1937
      %v2067 = vadd.f32 %v1807, %v1937
      %v2068 = vadd.f32 %v1808, %v1937
      %v2069 = vadd.f32 %v1809, %v1937
      %v2070 = vadd.f32 %v1810, %v1937
      %v2071 = vadd.f32 %v1811, %v1937
      %v2072 = vadd.f32 %v1812, %v1937
      %v2073 = vadd.f32 %v1813, %v1937
      %v2074 = vadd.f32 %v1814, %v1937
      %v2075 = vadd.f32 %v1815, %v1937
      %v2076 = vadd.f32 %v1816, %v1937
      %v2077 = vadd.f32 %v1817, %v1937
      %v2078 = vadd.f32 %v1818, %v1937
      %v2079 = vadd.f32 %v1819, %v1937
      %v2080 = vadd.f32 %v1820, %v1937
      %v2081 = vadd.f32 %v1821, %v1937
      %v2082 = vadd.f32 %v1822, %v1937
      %v2083 = vadd.f32 %v1823, %v1937
      %v2084 = vadd.f32 %v1824, %v1937
      %v2085 = vadd.f32 %v1825, %v1937
      %v2086 = vadd.f32 %v1826, %v1937
      %v2087 = vadd.f32 %v1827, %v1937
      %v2088 = vadd.f32 %v1828, %v1937
      %v2089 = vadd.f32 %v1829, %v1937
      %v2090 = vadd.f32 %v1830, %v1937
      %v2091 = vadd.f32 %v1831, %v1937
      %v2092 = vadd.f32 %v1832, %v1937
      %v2093 = vadd.f32 %v1833, %v1937
      %v2094 = vadd.f32 %v1834, %v1937
      %v2095 = vadd.f32 %v1835, %v1937
      %v2096 = vadd.f32 %v1836, %v1937
      %v2097 = vadd.f32 %v1837, %v1937
      %v2098 = vadd.f32 %v1838, %v1937
      %v2099 = vadd.f32 %v1839, %v1937
      %v2100 = vadd.f32 %v1840, %v1937
      %v2101 = vadd.f32 %v1841, %v1937
      %v2102 = vadd.f32 %v1842, %v1937
      %v2103 = vadd.f32 %v1843, %v1937
      %v2104 = vadd.f32 %v1844, %v1937
      %v2105 = vadd.f32 %v1845, %v1937
      %v2106 = vadd.f32 %v1846, %v1937
      %v2107 = vadd.f32 %v1847, %v1937
      %v2108 = vadd.f32 %v1848, %v1937
      %v2109 = vadd.f32 %v1849, %v1937
      %v2110 = vadd.f32 %v1850, %v1937
      %v2111 = vadd.f32 %v1851, %v1937
      %v2112 = vadd.f32 %v1852, %v1937
      %v2113 = vadd.f32 %v1853, %v1937
      %v2114 = vadd.f32 %v1854, %v1937
      %v2115 = vadd.f32 %v1855, %v1937
      %v2116 = vadd.f32 %v1856, %v1937
      %v2117 = vadd.f32 %v1857, %v1937
      %v2118 = vadd.f32 %v1858, %v1937
      %v2119 = vadd.f32 %v1859, %v1937
      %v2120 = vadd.f32 %v1860, %v1937
      %v2121 = vadd.f32 %v1861, %v1937
      %v2122 = vadd.f32 %v1862, %v1937
      %v2123 = vadd.f32 %v1863, %v1937
      %v2124 = vadd.f32 %v1864, %v1937
      %v2125 = vadd.f32 %v1865, %v1937
      %v2126 = vadd.f32 %v1866, %v1937
      %v2127 = vadd.f32 %v1867, %v1937
      %v2128 = vadd.f32 %v1868, %v1937
      %v2129 = vadd.f32 %v1869, %v1937
      %v2130 = vadd.f32 %v1870, %v1937
      %v2131 = vadd.f32 %v1871, %v1937
      %v2132 = vadd.f32 %v1872, %v1937
      %v2133 = vadd.f32 %v1873, %v1937
      %v2134 = vadd.f32 %v1874, %v1937
      %v2135 = vadd.f32 %v1875, %v1937
      %v2136 = vadd.f32 %v1876, %v1937
      %v2137 = vadd.f32 %v1877, %v1937
      %v2138 = vadd.f32 %v1878, %v1937
      %v2139 = vadd.f32 %v1879, %v1937
      %v2140 = vadd.f32 %v1880, %v1937
      %v2141 = vadd.f32 %v1881, %v1937
      %v2142 = vadd.f32 %v1882, %v1937
      %v2143 = vadd.f32 %v1883, %v1937
      %v2144 = vadd.f32 %v1884, %v1937
      %v2145 = vadd.f32 %v1885, %v1937
      %v2146 = vadd.f32 %v1886, %v1937
      %v2147 = vadd.f32 %v1887, %v1937
      %v2148 = vadd.f32 %v1888, %v1937
      %v2149 = vadd.f32 %v1889, %v1937
      %v2150 = vadd.f32 %v1890, %v1937
      %v2151 = vadd.f32 %v1891, %v1937
      %v2152 = vadd.f32 %v1892, %v1937
      %v2153 = vadd.f32 %v1893, %v1937
      %v2154 = vadd.f32 %v1894, %v1937
      %v2155 = vadd.f32 %v1895, %v1937
      %v2156 = vadd.f32 %v1896, %v1937
      %v2157 = vadd.f32 %v1897, %v1937
      %v2158 = vadd.f32 %v1898, %v1937
      %v2159 = vadd.f32 %v1899, %v1937
      %v2160 = vadd.f32 %v1900, %v1937
      %v2161 = vadd.f32 %v1901, %v1937
      %v2162 = vadd.f32 %v1902, %v1937
      %v2163 = vadd.f32 %v1903, %v1937
      %v2164 = vadd.f32 %v1904, %v1937
      %v2165 = vadd.f32 %v1905, %v1937
      %v2166 = vadd.f32 %v1906, %v1937
      %v2167 = vadd.f32 %v1907, %v1937
      %v2168 = vadd.f32 %v1908, %v1937
      %v2169 = vadd.f32 %v1909, %v1937
      %v2170 = vadd.f32 %v1910, %v1937
      %v2171 = vadd.f32 %v1911, %v1937
      %v2172 = vadd.f32 %v1912, %v1937
      %v2173 = vadd.f32 %v1913, %v1937
      %v2174 = vadd.f32 %v1914, %v1937
      %v2175 = vadd.f32 %v1915, %v1937
      %v2176 = vadd.f32 %v1916, %v1937
      %v2177 = vadd.f32 %v1917, %v1937
      %v2178 = vadd.f32 %v1918, %v1937
      %v2179 = vadd.f32 %v1919, %v1937
      %v2180 = vadd.f32 %v1920, %v1937
      %v2181 = vadd.f32 %v1921, %v1937
      %v2182 = vadd.f32 %v1922, %v1937
      %v2183 = vadd.f32 %v1923, %v1937
      %v2184 = vadd.f32 %v1924, %v1937
      %v2185 = vadd.f32 %v1925, %v1937
      %v2186 = vadd.f32 %v1926, %v1937
      %v2187 = vadd.f32 %v1927, %v1937
      %v2188 = vadd.f32 %v1928, %v1937
      %v2189 = vadd.f32 %v1929, %v1937
      %v2190 = vadd.f32 %v1930, %v1937
      %v2191 = vadd.f32 %v1931, %v1937
      %v2192 = vadd.f32 %v1932, %v1937
      %v2193 = vadd.f32 %v1933, %v1937
      %v2194 = vadd.f32 %v1934, %v1937
      %v2195 = vmax.f32 %v1939, 0.0
      %v2196 = vmax.f32 %v1940, 0.0
      %v2197 = vmax.f32 %v1941, 0.0
      %v2198 = vmax.f32 %v1942, 0.0
      %v2199 = vmax.f32 %v1943, 0.0
      %v2200 = vmax.f32 %v1944, 0.0
      %v2201 = vmax.f32 %v1945, 0.0
      %v2202 = vmax.f32 %v1946, 0.0
      %v2203 = vmax.f32 %v1947, 0.0
      %v2204 = vmax.f32 %v1948, 0.0
      %v2205 = vmax.f32 %v1949, 0.0
      %v2206 = vmax.f32 %v1950, 0.0
      %v2207 = vmax.f32 %v1951, 0.0
      %v2208 = vmax.f32 %v1952, 0.0
      %v2209 = vmax.f32 %v1953, 0.0
      %v2210 = vmax.f32 %v1954, 0.0
      %v2211 = vmax.f32 %v1955, 0.0
      %v2212 = vmax.f32 %v1956, 0.0
      %v2213 = vmax.f32 %v1957, 0.0
      %v2214 = vmax.f32 %v1958, 0.0
      %v2215 = vmax.f32 %v1959, 0.0
      %v2216 = vmax.f32 %v1960, 0.0
      %v2217 = vmax.f32 %v1961, 0.0
      %v2218 = vmax.f32 %v1962, 0.0
      %v2219 = vmax.f32 %v1963, 0.0
      %v2220 = vmax.f32 %v1964, 0.0
      %v2221 = vmax.f32 %v1965, 0.0
      %v2222 = vmax.f32 %v1966, 0.0
      %v2223 = vmax.f32 %v1967, 0.0
      %v2224 = vmax.f32 %v1968, 0.0
      %v2225 = vmax.f32 %v1969, 0.0
      %v2226 = vmax.f32 %v1970, 0.0
      %v2227 = vmax.f32 %v1971, 0.0
      %v2228 = vmax.f32 %v1972, 0.0
      %v2229 = vmax.f32 %v1973, 0.0
      %v2230 = vmax.f32 %v1974, 0.0
      %v2231 = vmax.f32 %v1975, 0.0
      %v2232 = vmax.f32 %v1976, 0.0
      %v2233 = vmax.f32 %v1977, 0.0
      %v2234 = vmax.f32 %v1978, 0.0
      %v2235 = vmax.f32 %v1979, 0.0
      %v2236 = vmax.f32 %v1980, 0.0
      %v2237 = vmax.f32 %v1981, 0.0
      %v2238 = vmax.f32 %v1982, 0.0
      %v2239 = vmax.f32 %v1983, 0.0
      %v2240 = vmax.f32 %v1984, 0.0
      %v2241 = vmax.f32 %v1985, 0.0
      %v2242 = vmax.f32 %v1986, 0.0
      %v2243 = vmax.f32 %v1987, 0.0
      %v2244 = vmax.f32 %v1988, 0.0
      %v2245 = vmax.f32 %v1989, 0.0
      %v2246 = vmax.f32 %v1990, 0.0
      %v2247 = vmax.f32 %v1991, 0.0
      %v2248 = vmax.f32 %v1992, 0.0
      %v2249 = vmax.f32 %v1993, 0.0
      %v2250 = vmax.f32 %v1994, 0.0
      %v2251 = vmax.f32 %v1995, 0.0
      %v2252 = vmax.f32 %v1996, 0.0
      %v2253 = vmax.f32 %v1997, 0.0
      %v2254 = vmax.f32 %v1998, 0.0
      %v2255 = vmax.f32 %v1999, 0.0
      %v2256 = vmax.f32 %v2000, 0.0
      %v2257 = vmax.f32 %v2001, 0.0
      %v2258 = vmax.f32 %v2002, 0.0
      %v2259 = vmax.f32 %v2003, 0.0
      %v2260 = vmax.f32 %v2004, 0.0
      %v2261 = vmax.f32 %v2005, 0.0
      %v2262 = vmax.f32 %v2006, 0.0
      %v2263 = vmax.f32 %v2007, 0.0
      %v2264 = vmax.f32 %v2008, 0.0
      %v2265 = vmax.f32 %v2009, 0.0
      %v2266 = vmax.f32 %v2010, 0.0
      %v2267 = vmax.f32 %v2011, 0.0
      %v2268 = vmax.f32 %v2012, 0.0
      %v2269 = vmax.f32 %v2013, 0.0
      %v2270 = vmax.f32 %v2014, 0.0
      %v2271 = vmax.f32 %v2015, 0.0
      %v2272 = vmax.f32 %v2016, 0.0
      %v2273 = vmax.f32 %v2017, 0.0
      %v2274 = vmax.f32 %v2018, 0.0
      %v2275 = vmax.f32 %v2019, 0.0
      %v2276 = vmax.f32 %v2020, 0.0
      %v2277 = vmax.f32 %v2021, 0.0
      %v2278 = vmax.f32 %v2022, 0.0
      %v2279 = vmax.f32 %v2023, 0.0
      %v2280 = vmax.f32 %v2024, 0.0
      %v2281 = vmax.f32 %v2025, 0.0
      %v2282 = vmax.f32 %v2026, 0.0
      %v2283 = vmax.f32 %v2027, 0.0
      %v2284 = vmax.f32 %v2028, 0.0
      %v2285 = vmax.f32 %v2029, 0.0
      %v2286 = vmax.f32 %v2030, 0.0
      %v2287 = vmax.f32 %v2031, 0.0
      %v2288 = vmax.f32 %v2032, 0.0
      %v2289 = vmax.f32 %v2033, 0.0
      %v2290 = vmax.f32 %v2034, 0.0
      %v2291 = vmax.f32 %v2035, 0.0
      %v2292 = vmax.f32 %v2036, 0.0
      %v2293 = vmax.f32 %v2037, 0.0
      %v2294 = vmax.f32 %v2038, 0.0
      %v2295 = vmax.f32 %v2039, 0.0
      %v2296 = vmax.f32 %v2040, 0.0
      %v2297 = vmax.f32 %v2041, 0.0
      %v2298 = vmax.f32 %v2042, 0.0
      %v2299 = vmax.f32 %v2043, 0.0
      %v2300 = vmax.f32 %v2044, 0.0
      %v2301 = vmax.f32 %v2045, 0.0
      %v2302 = vmax.f32 %v2046, 0.0
      %v2303 = vmax.f32 %v2047, 0.0
      %v2304 = vmax.f32 %v2048, 0.0
      %v2305 = vmax.f32 %v2049, 0.0
      %v2306 = vmax.f32 %v2050, 0.0
      %v2307 = vmax.f32 %v2051, 0.0
      %v2308 = vmax.f32 %v2052, 0.0
      %v2309 = vmax.f32 %v2053, 0.0
      %v2310 = vmax.f32 %v2054, 0.0
      %v2311 = vmax.f32 %v2055, 0.0
      %v2312 = vmax.f32 %v2056, 0.0
      %v2313 = vmax.f32 %v2057, 0.0
      %v2314 = vmax.f32 %v2058, 0.0
      %v2315 = vmax.f32 %v2059, 0.0
      %v2316 = vmax.f32 %v2060, 0.0
      %v2317 = vmax.f32 %v2061, 0.0
      %v2318 = vmax.f32 %v2062, 0.0
      %v2319 = vmax.f32 %v2063, 0.0
      %v2320 = vmax.f32 %v2064, 0.0
      %v2321 = vmax.f32 %v2065, 0.0
      %v2322 = vmax.f32 %v2066, 0.0
      %v2323 = vmax.f32 %v2067, 0.0
      %v2324 = vmax.f32 %v2068, 0.0
      %v2325 = vmax.f32 %v2069, 0.0
      %v2326 = vmax.f32 %v2070, 0.0
      %v2327 = vmax.f32 %v2071, 0.0
      %v2328 = vmax.f32 %v2072, 0.0
      %v2329 = vmax.f32 %v2073, 0.0
      %v2330 = vmax.f32 %v2074, 0.0
      %v2331 = vmax.f32 %v2075, 0.0
      %v2332 = vmax.f32 %v2076, 0.0
      %v2333 = vmax.f32 %v2077, 0.0
      %v2334 = vmax.f32 %v2078, 0.0
      %v2335 = vmax.f32 %v2079, 0.0
      %v2336 = vmax.f32 %v2080, 0.0
      %v2337 = vmax.f32 %v2081, 0.0
      %v2338 = vmax.f32 %v2082, 0.0
      %v2339 = vmax.f32 %v2083, 0.0
      %v2340 = vmax.f32 %v2084, 0.0
      %v2341 = vmax.f32 %v2085, 0.0
      %v2342 = vmax.f32 %v2086, 0.0
      %v2343 = vmax.f32 %v2087, 0.0
      %v2344 = vmax.f32 %v2088, 0.0
      %v2345 = vmax.f32 %v2089, 0.0
      %v2346 = vmax.f32 %v2090, 0.0
      %v2347 = vmax.f32 %v2091, 0.0
      %v2348 = vmax.f32 %v2092, 0.0
      %v2349 = vmax.f32 %v2093, 0.0
      %v2350 = vmax.f32 %v2094, 0.0
      %v2351 = vmax.f32 %v2095, 0.0
      %v2352 = vmax.f32 %v2096, 0.0
      %v2353 = vmax.f32 %v2097, 0.0
      %v2354 = vmax.f32 %v2098, 0.0
      %v2355 = vmax.f32 %v2099, 0.0
      %v2356 = vmax.f32 %v2100, 0.0
      %v2357 = vmax.f32 %v2101, 0.0
      %v2358 = vmax.f32 %v2102, 0.0
      %v2359 = vmax.f32 %v2103, 0.0
      %v2360 = vmax.f32 %v2104, 0.0
      %v2361 = vmax.f32 %v2105, 0.0
      %v2362 = vmax.f32 %v2106, 0.0
      %v2363 = vmax.f32 %v2107, 0.0
      %v2364 = vmax.f32 %v2108, 0.0
      %v2365 = vmax.f32 %v2109, 0.0
      %v2366 = vmax.f32 %v2110, 0.0
      %v2367 = vmax.f32 %v2111, 0.0
      %v2368 = vmax.f32 %v2112, 0.0
      %v2369 = vmax.f32 %v2113, 0.0
      %v2370 = vmax.f32 %v2114, 0.0
      %v2371 = vmax.f32 %v2115, 0.0
      %v2372 = vmax.f32 %v2116, 0.0
      %v2373 = vmax.f32 %v2117, 0.0
      %v2374 = vmax.f32 %v2118, 0.0
      %v2375 = vmax.f32 %v2119, 0.0
      %v2376 = vmax.f32 %v2120, 0.0
      %v2377 = vmax.f32 %v2121, 0.0
      %v2378 = vmax.f32 %v2122, 0.0
      %v2379 = vmax.f32 %v2123, 0.0
      %v2380 = vmax.f32 %v2124, 0.0
      %v2381 = vmax.f32 %v2125, 0.0
      %v2382 = vmax.f32 %v2126, 0.0
      %v2383 = vmax.f32 %v2127, 0.0
      %v2384 = vmax.f32 %v2128, 0.0
      %v2385 = vmax.f32 %v2129, 0.0
      %v2386 = vmax.f32 %v2130, 0.0
      %v2387 = vmax.f32 %v2131, 0.0
      %v2388 = vmax.f32 %v2132, 0.0
      %v2389 = vmax.f32 %v2133, 0.0
      %v2390 = vmax.f32 %v2134, 0.0
      %v2391 = vmax.f32 %v2135, 0.0
      %v2392 = vmax.f32 %v2136, 0.0
      %v2393 = vmax.f32 %v2137, 0.0
      %v2394 = vmax.f32 %v2138, 0.0
      %v2395 = vmax.f32 %v2139, 0.0
      %v2396 = vmax.f32 %v2140, 0.0
      %v2397 = vmax.f32 %v2141, 0.0
      %v2398 = vmax.f32 %v2142, 0.0
      %v2399 = vmax.f32 %v2143, 0.0
      %v2400 = vmax.f32 %v2144, 0.0
      %v2401 = vmax.f32 %v2145, 0.0
      %v2402 = vmax.f32 %v2146, 0.0
      %v2403 = vmax.f32 %v2147, 0.0
      %v2404 = vmax.f32 %v2148, 0.0
      %v2405 = vmax.f32 %v2149, 0.0
      %v2406 = vmax.f32 %v2150, 0.0
      %v2407 = vmax.f32 %v2151, 0.0
      %v2408 = vmax.f32 %v2152, 0.0
      %v2409 = vmax.f32 %v2153, 0.0
      %v2410 = vmax.f32 %v2154, 0.0
      %v2411 = vmax.f32 %v2155, 0.0
      %v2412 = vmax.f32 %v2156, 0.0
      %v2413 = vmax.f32 %v2157, 0.0
      %v2414 = vmax.f32 %v2158, 0.0
      %v2415 = vmax.f32 %v2159, 0.0
      %v2416 = vmax.f32 %v2160, 0.0
      %v2417 = vmax.f32 %v2161, 0.0
      %v2418 = vmax.f32 %v2162, 0.0
      %v2419 = vmax.f32 %v2163, 0.0
      %v2420 = vmax.f32 %v2164, 0.0
      %v2421 = vmax.f32 %v2165, 0.0
      %v2422 = vmax.f32 %v2166, 0.0
      %v2423 = vmax.f32 %v2167, 0.0
      %v2424 = vmax.f32 %v2168, 0.0
      %v2425 = vmax.f32 %v2169, 0.0
      %v2426 = vmax.f32 %v2170, 0.0
      %v2427 = vmax.f32 %v2171, 0.0
      %v2428 = vmax.f32 %v2172, 0.0
      %v2429 = vmax.f32 %v2173, 0.0
      %v2430 = vmax.f32 %v2174, 0.0
      %v2431 = vmax.f32 %v2175, 0.0
      %v2432 = vmax.f32 %v2176, 0.0
      %v2433 = vmax.f32 %v2177, 0.0
      %v2434 = vmax.f32 %v2178, 0.0
      %v2435 = vmax.f32 %v2179, 0.0
      %v2436 = vmax.f32 %v2180, 0.0
      %v2437 = vmax.f32 %v2181, 0.0
      %v2438 = vmax.f32 %v2182, 0.0
      %v2439 = vmax.f32 %v2183, 0.0
      %v2440 = vmax.f32 %v2184, 0.0
      %v2441 = vmax.f32 %v2185, 0.0
      %v2442 = vmax.f32 %v2186, 0.0
      %v2443 = vmax.f32 %v2187, 0.0
      %v2444 = vmax.f32 %v2188, 0.0
      %v2445 = vmax.f32 %v2189, 0.0
      %v2446 = vmax.f32 %v2190, 0.0
      %v2447 = vmax.f32 %v2191, 0.0
      %v2448 = vmax.f32 %v2192, 0.0
      %v2449 = vmax.f32 %v2193, 0.0
      %v2450 = vmax.f32 %v2194, 0.0
      %vm2451 = vcmask 523264
      %v2452 = vsel %vm2451, %v2195, -inf
      %v2453 = vsel %vm2451, %v2196, -inf
      %v2454 = vmax.f32 %v2452, %v2453
      %v2455 = vrot.slane %v2454, 4
      %v2456 = vmax.f32 %v2454, %v2455
      %v2457 = vrot.slane %v2456, 2
      %v2458 = vmax.f32 %v2456, %v2457
      %v2459 = vrot.slane %v2458, 1
      %v2460 = vmax.f32 %v2458, %v2459
      %v2461 = vsel %vm2451, %v2197, -inf
      %v2462 = vsel %vm2451, %v2198, -inf
      %v2463 = vmax.f32 %v2461, %v2462
      %v2464 = vrot.slane %v2463, 4
      %v2465 = vmax.f32 %v2463, %v2464
      %v2466 = vrot.slane %v2465, 2
      %v2467 = vmax.f32 %v2465, %v2466
      %v2468 = vrot.slane %v2467, 1
      %v2469 = vmax.f32 %v2467, %v2468
      %v2470 = vsel %vm2451, %v2199, -inf
      %v2471 = vsel %vm2451, %v2200, -inf
      %v2472 = vmax.f32 %v2470, %v2471
      %v2473 = vrot.slane %v2472, 4
      %v2474 = vmax.f32 %v2472, %v2473
      %v2475 = vrot.slane %v2474, 2
      %v2476 = vmax.f32 %v2474, %v2475
      %v2477 = vrot.slane %v2476, 1
      %v2478 = vmax.f32 %v2476, %v2477
      %v2479 = vsel %vm2451, %v2201, -inf
      %v2480 = vsel %vm2451, %v2202, -inf
      %v2481 = vmax.f32 %v2479, %v2480
      %v2482 = vrot.slane %v2481, 4
      %v2483 = vmax.f32 %v2481, %v2482
      %v2484 = vrot.slane %v2483, 2
      %v2485 = vmax.f32 %v2483, %v2484
      %v2486 = vrot.slane %v2485, 1
      %v2487 = vmax.f32 %v2485, %v2486
      %v2488 = vsel %vm2451, %v2203, -inf
      %v2489 = vsel %vm2451, %v2204, -inf
      %v2490 = vmax.f32 %v2488, %v2489
      %v2491 = vrot.slane %v2490, 4
      %v2492 = vmax.f32 %v2490, %v2491
      %v2493 = vrot.slane %v2492, 2
      %v2494 = vmax.f32 %v2492, %v2493
      %v2495 = vrot.slane %v2494, 1
      %v2496 = vmax.f32 %v2494, %v2495
      %v2497 = vsel %vm2451, %v2205, -inf
      %v2498 = vsel %vm2451, %v2206, -inf
      %v2499 = vmax.f32 %v2497, %v2498
      %v2500 = vrot.slane %v2499, 4
      %v2501 = vmax.f32 %v2499, %v2500
      %v2502 = vrot.slane %v2501, 2
      %v2503 = vmax.f32 %v2501, %v2502
      %v2504 = vrot.slane %v2503, 1
      %v2505 = vmax.f32 %v2503, %v2504
      %v2506 = vsel %vm2451, %v2207, -inf
      %v2507 = vsel %vm2451, %v2208, -inf
      %v2508 = vmax.f32 %v2506, %v2507
      %v2509 = vrot.slane %v2508, 4
      %v2510 = vmax.f32 %v2508, %v2509
      %v2511 = vrot.slane %v2510, 2
      %v2512 = vmax.f32 %v2510, %v2511
      %v2513 = vrot.slane %v2512, 1
      %v2514 = vmax.f32 %v2512, %v2513
      %v2515 = vsel %vm2451, %v2209, -inf
      %v2516 = vsel %vm2451, %v2210, -inf
      %v2517 = vmax.f32 %v2515, %v2516
      %v2518 = vrot.slane %v2517, 4
      %v2519 = vmax.f32 %v2517, %v2518
      %v2520 = vrot.slane %v2519, 2
      %v2521 = vmax.f32 %v2519, %v2520
      %v2522 = vrot.slane %v2521, 1
      %v2523 = vmax.f32 %v2521, %v2522
      %v2524 = vsel %vm2451, %v2211, -inf
      %v2525 = vsel %vm2451, %v2212, -inf
      %v2526 = vmax.f32 %v2524, %v2525
      %v2527 = vrot.slane %v2526, 4
      %v2528 = vmax.f32 %v2526, %v2527
      %v2529 = vrot.slane %v2528, 2
      %v2530 = vmax.f32 %v2528, %v2529
      %v2531 = vrot.slane %v2530, 1
      %v2532 = vmax.f32 %v2530, %v2531
      %v2533 = vsel %vm2451, %v2213, -inf
      %v2534 = vsel %vm2451, %v2214, -inf
      %v2535 = vmax.f32 %v2533, %v2534
      %v2536 = vrot.slane %v2535, 4
      %v2537 = vmax.f32 %v2535, %v2536
      %v2538 = vrot.slane %v2537, 2
      %v2539 = vmax.f32 %v2537, %v2538
      %v2540 = vrot.slane %v2539, 1
      %v2541 = vmax.f32 %v2539, %v2540
      %v2542 = vsel %vm2451, %v2215, -inf
      %v2543 = vsel %vm2451, %v2216, -inf
      %v2544 = vmax.f32 %v2542, %v2543
      %v2545 = vrot.slane %v2544, 4
      %v2546 = vmax.f32 %v2544, %v2545
      %v2547 = vrot.slane %v2546, 2
      %v2548 = vmax.f32 %v2546, %v2547
      %v2549 = vrot.slane %v2548, 1
      %v2550 = vmax.f32 %v2548, %v2549
      %v2551 = vsel %vm2451, %v2217, -inf
      %v2552 = vsel %vm2451, %v2218, -inf
      %v2553 = vmax.f32 %v2551, %v2552
      %v2554 = vrot.slane %v2553, 4
      %v2555 = vmax.f32 %v2553, %v2554
      %v2556 = vrot.slane %v2555, 2
      %v2557 = vmax.f32 %v2555, %v2556
      %v2558 = vrot.slane %v2557, 1
      %v2559 = vmax.f32 %v2557, %v2558
      %v2560 = vsel %vm2451, %v2219, -inf
      %v2561 = vsel %vm2451, %v2220, -inf
      %v2562 = vmax.f32 %v2560, %v2561
      %v2563 = vrot.slane %v2562, 4
      %v2564 = vmax.f32 %v2562, %v2563
      %v2565 = vrot.slane %v2564, 2
      %v2566 = vmax.f32 %v2564, %v2565
      %v2567 = vrot.slane %v2566, 1
      %v2568 = vmax.f32 %v2566, %v2567
      %v2569 = vsel %vm2451, %v2221, -inf
      %v2570 = vsel %vm2451, %v2222, -inf
      %v2571 = vmax.f32 %v2569, %v2570
      %v2572 = vrot.slane %v2571, 4
      %v2573 = vmax.f32 %v2571, %v2572
      %v2574 = vrot.slane %v2573, 2
      %v2575 = vmax.f32 %v2573, %v2574
      %v2576 = vrot.slane %v2575, 1
      %v2577 = vmax.f32 %v2575, %v2576
      %v2578 = vsel %vm2451, %v2223, -inf
      %v2579 = vsel %vm2451, %v2224, -inf
      %v2580 = vmax.f32 %v2578, %v2579
      %v2581 = vrot.slane %v2580, 4
      %v2582 = vmax.f32 %v2580, %v2581
      %v2583 = vrot.slane %v2582, 2
      %v2584 = vmax.f32 %v2582, %v2583
      %v2585 = vrot.slane %v2584, 1
      %v2586 = vmax.f32 %v2584, %v2585
      %v2587 = vsel %vm2451, %v2225, -inf
      %v2588 = vsel %vm2451, %v2226, -inf
      %v2589 = vmax.f32 %v2587, %v2588
      %v2590 = vrot.slane %v2589, 4
      %v2591 = vmax.f32 %v2589, %v2590
      %v2592 = vrot.slane %v2591, 2
      %v2593 = vmax.f32 %v2591, %v2592
      %v2594 = vrot.slane %v2593, 1
      %v2595 = vmax.f32 %v2593, %v2594
      %v2596 = vsel %vm2451, %v2227, -inf
      %v2597 = vsel %vm2451, %v2228, -inf
      %v2598 = vmax.f32 %v2596, %v2597
      %v2599 = vrot.slane %v2598, 4
      %v2600 = vmax.f32 %v2598, %v2599
      %v2601 = vrot.slane %v2600, 2
      %v2602 = vmax.f32 %v2600, %v2601
      %v2603 = vrot.slane %v2602, 1
      %v2604 = vmax.f32 %v2602, %v2603
      %v2605 = vsel %vm2451, %v2229, -inf
      %v2606 = vsel %vm2451, %v2230, -inf
      %v2607 = vmax.f32 %v2605, %v2606
      %v2608 = vrot.slane %v2607, 4
      %v2609 = vmax.f32 %v2607, %v2608
      %v2610 = vrot.slane %v2609, 2
      %v2611 = vmax.f32 %v2609, %v2610
      %v2612 = vrot.slane %v2611, 1
      %v2613 = vmax.f32 %v2611, %v2612
      %v2614 = vsel %vm2451, %v2231, -inf
      %v2615 = vsel %vm2451, %v2232, -inf
      %v2616 = vmax.f32 %v2614, %v2615
      %v2617 = vrot.slane %v2616, 4
      %v2618 = vmax.f32 %v2616, %v2617
      %v2619 = vrot.slane %v2618, 2
      %v2620 = vmax.f32 %v2618, %v2619
      %v2621 = vrot.slane %v2620, 1
      %v2622 = vmax.f32 %v2620, %v2621
      %v2623 = vsel %vm2451, %v2233, -inf
      %v2624 = vsel %vm2451, %v2234, -inf
      %v2625 = vmax.f32 %v2623, %v2624
      %v2626 = vrot.slane %v2625, 4
      %v2627 = vmax.f32 %v2625, %v2626
      %v2628 = vrot.slane %v2627, 2
      %v2629 = vmax.f32 %v2627, %v2628
      %v2630 = vrot.slane %v2629, 1
      %v2631 = vmax.f32 %v2629, %v2630
      %v2632 = vsel %vm2451, %v2235, -inf
      %v2633 = vsel %vm2451, %v2236, -inf
      %v2634 = vmax.f32 %v2632, %v2633
      %v2635 = vrot.slane %v2634, 4
      %v2636 = vmax.f32 %v2634, %v2635
      %v2637 = vrot.slane %v2636, 2
      %v2638 = vmax.f32 %v2636, %v2637
      %v2639 = vrot.slane %v2638, 1
      %v2640 = vmax.f32 %v2638, %v2639
      %v2641 = vsel %vm2451, %v2237, -inf
      %v2642 = vsel %vm2451, %v2238, -inf
      %v2643 = vmax.f32 %v2641, %v2642
      %v2644 = vrot.slane %v2643, 4
      %v2645 = vmax.f32 %v2643, %v2644
      %v2646 = vrot.slane %v2645, 2
      %v2647 = vmax.f32 %v2645, %v2646
      %v2648 = vrot.slane %v2647, 1
      %v2649 = vmax.f32 %v2647, %v2648
      %v2650 = vsel %vm2451, %v2239, -inf
      %v2651 = vsel %vm2451, %v2240, -inf
      %v2652 = vmax.f32 %v2650, %v2651
      %v2653 = vrot.slane %v2652, 4
      %v2654 = vmax.f32 %v2652, %v2653
      %v2655 = vrot.slane %v2654, 2
      %v2656 = vmax.f32 %v2654, %v2655
      %v2657 = vrot.slane %v2656, 1
      %v2658 = vmax.f32 %v2656, %v2657
      %v2659 = vsel %vm2451, %v2241, -inf
      %v2660 = vsel %vm2451, %v2242, -inf
      %v2661 = vmax.f32 %v2659, %v2660
      %v2662 = vrot.slane %v2661, 4
      %v2663 = vmax.f32 %v2661, %v2662
      %v2664 = vrot.slane %v2663, 2
      %v2665 = vmax.f32 %v2663, %v2664
      %v2666 = vrot.slane %v2665, 1
      %v2667 = vmax.f32 %v2665, %v2666
      %v2668 = vsel %vm2451, %v2243, -inf
      %v2669 = vsel %vm2451, %v2244, -inf
      %v2670 = vmax.f32 %v2668, %v2669
      %v2671 = vrot.slane %v2670, 4
      %v2672 = vmax.f32 %v2670, %v2671
      %v2673 = vrot.slane %v2672, 2
      %v2674 = vmax.f32 %v2672, %v2673
      %v2675 = vrot.slane %v2674, 1
      %v2676 = vmax.f32 %v2674, %v2675
      %v2677 = vsel %vm2451, %v2245, -inf
      %v2678 = vsel %vm2451, %v2246, -inf
      %v2679 = vmax.f32 %v2677, %v2678
      %v2680 = vrot.slane %v2679, 4
      %v2681 = vmax.f32 %v2679, %v2680
      %v2682 = vrot.slane %v2681, 2
      %v2683 = vmax.f32 %v2681, %v2682
      %v2684 = vrot.slane %v2683, 1
      %v2685 = vmax.f32 %v2683, %v2684
      %v2686 = vsel %vm2451, %v2247, -inf
      %v2687 = vsel %vm2451, %v2248, -inf
      %v2688 = vmax.f32 %v2686, %v2687
      %v2689 = vrot.slane %v2688, 4
      %v2690 = vmax.f32 %v2688, %v2689
      %v2691 = vrot.slane %v2690, 2
      %v2692 = vmax.f32 %v2690, %v2691
      %v2693 = vrot.slane %v2692, 1
      %v2694 = vmax.f32 %v2692, %v2693
      %v2695 = vsel %vm2451, %v2249, -inf
      %v2696 = vsel %vm2451, %v2250, -inf
      %v2697 = vmax.f32 %v2695, %v2696
      %v2698 = vrot.slane %v2697, 4
      %v2699 = vmax.f32 %v2697, %v2698
      %v2700 = vrot.slane %v2699, 2
      %v2701 = vmax.f32 %v2699, %v2700
      %v2702 = vrot.slane %v2701, 1
      %v2703 = vmax.f32 %v2701, %v2702
      %v2704 = vsel %vm2451, %v2251, -inf
      %v2705 = vsel %vm2451, %v2252, -inf
      %v2706 = vmax.f32 %v2704, %v2705
      %v2707 = vrot.slane %v2706, 4
      %v2708 = vmax.f32 %v2706, %v2707
      %v2709 = vrot.slane %v2708, 2
      %v2710 = vmax.f32 %v2708, %v2709
      %v2711 = vrot.slane %v2710, 1
      %v2712 = vmax.f32 %v2710, %v2711
      %v2713 = vsel %vm2451, %v2253, -inf
      %v2714 = vsel %vm2451, %v2254, -inf
      %v2715 = vmax.f32 %v2713, %v2714
      %v2716 = vrot.slane %v2715, 4
      %v2717 = vmax.f32 %v2715, %v2716
      %v2718 = vrot.slane %v2717, 2
      %v2719 = vmax.f32 %v2717, %v2718
      %v2720 = vrot.slane %v2719, 1
      %v2721 = vmax.f32 %v2719, %v2720
      %v2722 = vsel %vm2451, %v2255, -inf
      %v2723 = vsel %vm2451, %v2256, -inf
      %v2724 = vmax.f32 %v2722, %v2723
      %v2725 = vrot.slane %v2724, 4
      %v2726 = vmax.f32 %v2724, %v2725
      %v2727 = vrot.slane %v2726, 2
      %v2728 = vmax.f32 %v2726, %v2727
      %v2729 = vrot.slane %v2728, 1
      %v2730 = vmax.f32 %v2728, %v2729
      %v2731 = vsel %vm2451, %v2257, -inf
      %v2732 = vsel %vm2451, %v2258, -inf
      %v2733 = vmax.f32 %v2731, %v2732
      %v2734 = vrot.slane %v2733, 4
      %v2735 = vmax.f32 %v2733, %v2734
      %v2736 = vrot.slane %v2735, 2
      %v2737 = vmax.f32 %v2735, %v2736
      %v2738 = vrot.slane %v2737, 1
      %v2739 = vmax.f32 %v2737, %v2738
      %v2740 = vsel %vm2451, %v2259, -inf
      %v2741 = vsel %vm2451, %v2260, -inf
      %v2742 = vmax.f32 %v2740, %v2741
      %v2743 = vrot.slane %v2742, 4
      %v2744 = vmax.f32 %v2742, %v2743
      %v2745 = vrot.slane %v2744, 2
      %v2746 = vmax.f32 %v2744, %v2745
      %v2747 = vrot.slane %v2746, 1
      %v2748 = vmax.f32 %v2746, %v2747
      %v2749 = vsel %vm2451, %v2261, -inf
      %v2750 = vsel %vm2451, %v2262, -inf
      %v2751 = vmax.f32 %v2749, %v2750
      %v2752 = vrot.slane %v2751, 4
      %v2753 = vmax.f32 %v2751, %v2752
      %v2754 = vrot.slane %v2753, 2
      %v2755 = vmax.f32 %v2753, %v2754
      %v2756 = vrot.slane %v2755, 1
      %v2757 = vmax.f32 %v2755, %v2756
      %v2758 = vsel %vm2451, %v2263, -inf
      %v2759 = vsel %vm2451, %v2264, -inf
      %v2760 = vmax.f32 %v2758, %v2759
      %v2761 = vrot.slane %v2760, 4
      %v2762 = vmax.f32 %v2760, %v2761
      %v2763 = vrot.slane %v2762, 2
      %v2764 = vmax.f32 %v2762, %v2763
      %v2765 = vrot.slane %v2764, 1
      %v2766 = vmax.f32 %v2764, %v2765
      %v2767 = vsel %vm2451, %v2265, -inf
      %v2768 = vsel %vm2451, %v2266, -inf
      %v2769 = vmax.f32 %v2767, %v2768
      %v2770 = vrot.slane %v2769, 4
      %v2771 = vmax.f32 %v2769, %v2770
      %v2772 = vrot.slane %v2771, 2
      %v2773 = vmax.f32 %v2771, %v2772
      %v2774 = vrot.slane %v2773, 1
      %v2775 = vmax.f32 %v2773, %v2774
      %v2776 = vsel %vm2451, %v2267, -inf
      %v2777 = vsel %vm2451, %v2268, -inf
      %v2778 = vmax.f32 %v2776, %v2777
      %v2779 = vrot.slane %v2778, 4
      %v2780 = vmax.f32 %v2778, %v2779
      %v2781 = vrot.slane %v2780, 2
      %v2782 = vmax.f32 %v2780, %v2781
      %v2783 = vrot.slane %v2782, 1
      %v2784 = vmax.f32 %v2782, %v2783
      %v2785 = vsel %vm2451, %v2269, -inf
      %v2786 = vsel %vm2451, %v2270, -inf
      %v2787 = vmax.f32 %v2785, %v2786
      %v2788 = vrot.slane %v2787, 4
      %v2789 = vmax.f32 %v2787, %v2788
      %v2790 = vrot.slane %v2789, 2
      %v2791 = vmax.f32 %v2789, %v2790
      %v2792 = vrot.slane %v2791, 1
      %v2793 = vmax.f32 %v2791, %v2792
      %v2794 = vsel %vm2451, %v2271, -inf
      %v2795 = vsel %vm2451, %v2272, -inf
      %v2796 = vmax.f32 %v2794, %v2795
      %v2797 = vrot.slane %v2796, 4
      %v2798 = vmax.f32 %v2796, %v2797
      %v2799 = vrot.slane %v2798, 2
      %v2800 = vmax.f32 %v2798, %v2799
      %v2801 = vrot.slane %v2800, 1
      %v2802 = vmax.f32 %v2800, %v2801
      %v2803 = vsel %vm2451, %v2273, -inf
      %v2804 = vsel %vm2451, %v2274, -inf
      %v2805 = vmax.f32 %v2803, %v2804
      %v2806 = vrot.slane %v2805, 4
      %v2807 = vmax.f32 %v2805, %v2806
      %v2808 = vrot.slane %v2807, 2
      %v2809 = vmax.f32 %v2807, %v2808
      %v2810 = vrot.slane %v2809, 1
      %v2811 = vmax.f32 %v2809, %v2810
      %v2812 = vsel %vm2451, %v2275, -inf
      %v2813 = vsel %vm2451, %v2276, -inf
      %v2814 = vmax.f32 %v2812, %v2813
      %v2815 = vrot.slane %v2814, 4
      %v2816 = vmax.f32 %v2814, %v2815
      %v2817 = vrot.slane %v2816, 2
      %v2818 = vmax.f32 %v2816, %v2817
      %v2819 = vrot.slane %v2818, 1
      %v2820 = vmax.f32 %v2818, %v2819
      %v2821 = vsel %vm2451, %v2277, -inf
      %v2822 = vsel %vm2451, %v2278, -inf
      %v2823 = vmax.f32 %v2821, %v2822
      %v2824 = vrot.slane %v2823, 4
      %v2825 = vmax.f32 %v2823, %v2824
      %v2826 = vrot.slane %v2825, 2
      %v2827 = vmax.f32 %v2825, %v2826
      %v2828 = vrot.slane %v2827, 1
      %v2829 = vmax.f32 %v2827, %v2828
      %v2830 = vsel %vm2451, %v2279, -inf
      %v2831 = vsel %vm2451, %v2280, -inf
      %v2832 = vmax.f32 %v2830, %v2831
      %v2833 = vrot.slane %v2832, 4
      %v2834 = vmax.f32 %v2832, %v2833
      %v2835 = vrot.slane %v2834, 2
      %v2836 = vmax.f32 %v2834, %v2835
      %v2837 = vrot.slane %v2836, 1
      %v2838 = vmax.f32 %v2836, %v2837
      %v2839 = vsel %vm2451, %v2281, -inf
      %v2840 = vsel %vm2451, %v2282, -inf
      %v2841 = vmax.f32 %v2839, %v2840
      %v2842 = vrot.slane %v2841, 4
      %v2843 = vmax.f32 %v2841, %v2842
      %v2844 = vrot.slane %v2843, 2
      %v2845 = vmax.f32 %v2843, %v2844
      %v2846 = vrot.slane %v2845, 1
      %v2847 = vmax.f32 %v2845, %v2846
      %v2848 = vsel %vm2451, %v2283, -inf
      %v2849 = vsel %vm2451, %v2284, -inf
      %v2850 = vmax.f32 %v2848, %v2849
      %v2851 = vrot.slane %v2850, 4
      %v2852 = vmax.f32 %v2850, %v2851
      %v2853 = vrot.slane %v2852, 2
      %v2854 = vmax.f32 %v2852, %v2853
      %v2855 = vrot.slane %v2854, 1
      %v2856 = vmax.f32 %v2854, %v2855
      %v2857 = vsel %vm2451, %v2285, -inf
      %v2858 = vsel %vm2451, %v2286, -inf
      %v2859 = vmax.f32 %v2857, %v2858
      %v2860 = vrot.slane %v2859, 4
      %v2861 = vmax.f32 %v2859, %v2860
      %v2862 = vrot.slane %v2861, 2
      %v2863 = vmax.f32 %v2861, %v2862
      %v2864 = vrot.slane %v2863, 1
      %v2865 = vmax.f32 %v2863, %v2864
      %v2866 = vsel %vm2451, %v2287, -inf
      %v2867 = vsel %vm2451, %v2288, -inf
      %v2868 = vmax.f32 %v2866, %v2867
      %v2869 = vrot.slane %v2868, 4
      %v2870 = vmax.f32 %v2868, %v2869
      %v2871 = vrot.slane %v2870, 2
      %v2872 = vmax.f32 %v2870, %v2871
      %v2873 = vrot.slane %v2872, 1
      %v2874 = vmax.f32 %v2872, %v2873
      %v2875 = vsel %vm2451, %v2289, -inf
      %v2876 = vsel %vm2451, %v2290, -inf
      %v2877 = vmax.f32 %v2875, %v2876
      %v2878 = vrot.slane %v2877, 4
      %v2879 = vmax.f32 %v2877, %v2878
      %v2880 = vrot.slane %v2879, 2
      %v2881 = vmax.f32 %v2879, %v2880
      %v2882 = vrot.slane %v2881, 1
      %v2883 = vmax.f32 %v2881, %v2882
      %v2884 = vsel %vm2451, %v2291, -inf
      %v2885 = vsel %vm2451, %v2292, -inf
      %v2886 = vmax.f32 %v2884, %v2885
      %v2887 = vrot.slane %v2886, 4
      %v2888 = vmax.f32 %v2886, %v2887
      %v2889 = vrot.slane %v2888, 2
      %v2890 = vmax.f32 %v2888, %v2889
      %v2891 = vrot.slane %v2890, 1
      %v2892 = vmax.f32 %v2890, %v2891
      %v2893 = vsel %vm2451, %v2293, -inf
      %v2894 = vsel %vm2451, %v2294, -inf
      %v2895 = vmax.f32 %v2893, %v2894
      %v2896 = vrot.slane %v2895, 4
      %v2897 = vmax.f32 %v2895, %v2896
      %v2898 = vrot.slane %v2897, 2
      %v2899 = vmax.f32 %v2897, %v2898
      %v2900 = vrot.slane %v2899, 1
      %v2901 = vmax.f32 %v2899, %v2900
      %v2902 = vsel %vm2451, %v2295, -inf
      %v2903 = vsel %vm2451, %v2296, -inf
      %v2904 = vmax.f32 %v2902, %v2903
      %v2905 = vrot.slane %v2904, 4
      %v2906 = vmax.f32 %v2904, %v2905
      %v2907 = vrot.slane %v2906, 2
      %v2908 = vmax.f32 %v2906, %v2907
      %v2909 = vrot.slane %v2908, 1
      %v2910 = vmax.f32 %v2908, %v2909
      %v2911 = vsel %vm2451, %v2297, -inf
      %v2912 = vsel %vm2451, %v2298, -inf
      %v2913 = vmax.f32 %v2911, %v2912
      %v2914 = vrot.slane %v2913, 4
      %v2915 = vmax.f32 %v2913, %v2914
      %v2916 = vrot.slane %v2915, 2
      %v2917 = vmax.f32 %v2915, %v2916
      %v2918 = vrot.slane %v2917, 1
      %v2919 = vmax.f32 %v2917, %v2918
      %v2920 = vsel %vm2451, %v2299, -inf
      %v2921 = vsel %vm2451, %v2300, -inf
      %v2922 = vmax.f32 %v2920, %v2921
      %v2923 = vrot.slane %v2922, 4
      %v2924 = vmax.f32 %v2922, %v2923
      %v2925 = vrot.slane %v2924, 2
      %v2926 = vmax.f32 %v2924, %v2925
      %v2927 = vrot.slane %v2926, 1
      %v2928 = vmax.f32 %v2926, %v2927
      %v2929 = vsel %vm2451, %v2301, -inf
      %v2930 = vsel %vm2451, %v2302, -inf
      %v2931 = vmax.f32 %v2929, %v2930
      %v2932 = vrot.slane %v2931, 4
      %v2933 = vmax.f32 %v2931, %v2932
      %v2934 = vrot.slane %v2933, 2
      %v2935 = vmax.f32 %v2933, %v2934
      %v2936 = vrot.slane %v2935, 1
      %v2937 = vmax.f32 %v2935, %v2936
      %v2938 = vsel %vm2451, %v2303, -inf
      %v2939 = vsel %vm2451, %v2304, -inf
      %v2940 = vmax.f32 %v2938, %v2939
      %v2941 = vrot.slane %v2940, 4
      %v2942 = vmax.f32 %v2940, %v2941
      %v2943 = vrot.slane %v2942, 2
      %v2944 = vmax.f32 %v2942, %v2943
      %v2945 = vrot.slane %v2944, 1
      %v2946 = vmax.f32 %v2944, %v2945
      %v2947 = vsel %vm2451, %v2305, -inf
      %v2948 = vsel %vm2451, %v2306, -inf
      %v2949 = vmax.f32 %v2947, %v2948
      %v2950 = vrot.slane %v2949, 4
      %v2951 = vmax.f32 %v2949, %v2950
      %v2952 = vrot.slane %v2951, 2
      %v2953 = vmax.f32 %v2951, %v2952
      %v2954 = vrot.slane %v2953, 1
      %v2955 = vmax.f32 %v2953, %v2954
      %v2956 = vsel %vm2451, %v2307, -inf
      %v2957 = vsel %vm2451, %v2308, -inf
      %v2958 = vmax.f32 %v2956, %v2957
      %v2959 = vrot.slane %v2958, 4
      %v2960 = vmax.f32 %v2958, %v2959
      %v2961 = vrot.slane %v2960, 2
      %v2962 = vmax.f32 %v2960, %v2961
      %v2963 = vrot.slane %v2962, 1
      %v2964 = vmax.f32 %v2962, %v2963
      %v2965 = vsel %vm2451, %v2309, -inf
      %v2966 = vsel %vm2451, %v2310, -inf
      %v2967 = vmax.f32 %v2965, %v2966
      %v2968 = vrot.slane %v2967, 4
      %v2969 = vmax.f32 %v2967, %v2968
      %v2970 = vrot.slane %v2969, 2
      %v2971 = vmax.f32 %v2969, %v2970
      %v2972 = vrot.slane %v2971, 1
      %v2973 = vmax.f32 %v2971, %v2972
      %v2974 = vsel %vm2451, %v2311, -inf
      %v2975 = vsel %vm2451, %v2312, -inf
      %v2976 = vmax.f32 %v2974, %v2975
      %v2977 = vrot.slane %v2976, 4
      %v2978 = vmax.f32 %v2976, %v2977
      %v2979 = vrot.slane %v2978, 2
      %v2980 = vmax.f32 %v2978, %v2979
      %v2981 = vrot.slane %v2980, 1
      %v2982 = vmax.f32 %v2980, %v2981
      %v2983 = vsel %vm2451, %v2313, -inf
      %v2984 = vsel %vm2451, %v2314, -inf
      %v2985 = vmax.f32 %v2983, %v2984
      %v2986 = vrot.slane %v2985, 4
      %v2987 = vmax.f32 %v2985, %v2986
      %v2988 = vrot.slane %v2987, 2
      %v2989 = vmax.f32 %v2987, %v2988
      %v2990 = vrot.slane %v2989, 1
      %v2991 = vmax.f32 %v2989, %v2990
      %v2992 = vsel %vm2451, %v2315, -inf
      %v2993 = vsel %vm2451, %v2316, -inf
      %v2994 = vmax.f32 %v2992, %v2993
      %v2995 = vrot.slane %v2994, 4
      %v2996 = vmax.f32 %v2994, %v2995
      %v2997 = vrot.slane %v2996, 2
      %v2998 = vmax.f32 %v2996, %v2997
      %v2999 = vrot.slane %v2998, 1
      %v3000 = vmax.f32 %v2998, %v2999
      %v3001 = vsel %vm2451, %v2317, -inf
      %v3002 = vsel %vm2451, %v2318, -inf
      %v3003 = vmax.f32 %v3001, %v3002
      %v3004 = vrot.slane %v3003, 4
      %v3005 = vmax.f32 %v3003, %v3004
      %v3006 = vrot.slane %v3005, 2
      %v3007 = vmax.f32 %v3005, %v3006
      %v3008 = vrot.slane %v3007, 1
      %v3009 = vmax.f32 %v3007, %v3008
      %v3010 = vsel %vm2451, %v2319, -inf
      %v3011 = vsel %vm2451, %v2320, -inf
      %v3012 = vmax.f32 %v3010, %v3011
      %v3013 = vrot.slane %v3012, 4
      %v3014 = vmax.f32 %v3012, %v3013
      %v3015 = vrot.slane %v3014, 2
      %v3016 = vmax.f32 %v3014, %v3015
      %v3017 = vrot.slane %v3016, 1
      %v3018 = vmax.f32 %v3016, %v3017
      %v3019 = vsel %vm2451, %v2321, -inf
      %v3020 = vsel %vm2451, %v2322, -inf
      %v3021 = vmax.f32 %v3019, %v3020
      %v3022 = vrot.slane %v3021, 4
      %v3023 = vmax.f32 %v3021, %v3022
      %v3024 = vrot.slane %v3023, 2
      %v3025 = vmax.f32 %v3023, %v3024
      %v3026 = vrot.slane %v3025, 1
      %v3027 = vmax.f32 %v3025, %v3026
      %v3028 = vsel %vm2451, %v2323, -inf
      %v3029 = vsel %vm2451, %v2324, -inf
      %v3030 = vmax.f32 %v3028, %v3029
      %v3031 = vrot.slane %v3030, 4
      %v3032 = vmax.f32 %v3030, %v3031
      %v3033 = vrot.slane %v3032, 2
      %v3034 = vmax.f32 %v3032, %v3033
      %v3035 = vrot.slane %v3034, 1
      %v3036 = vmax.f32 %v3034, %v3035
      %v3037 = vsel %vm2451, %v2325, -inf
      %v3038 = vsel %vm2451, %v2326, -inf
      %v3039 = vmax.f32 %v3037, %v3038
      %v3040 = vrot.slane %v3039, 4
      %v3041 = vmax.f32 %v3039, %v3040
      %v3042 = vrot.slane %v3041, 2
      %v3043 = vmax.f32 %v3041, %v3042
      %v3044 = vrot.slane %v3043, 1
      %v3045 = vmax.f32 %v3043, %v3044
      %v3046 = vsel %vm2451, %v2327, -inf
      %v3047 = vsel %vm2451, %v2328, -inf
      %v3048 = vmax.f32 %v3046, %v3047
      %v3049 = vrot.slane %v3048, 4
      %v3050 = vmax.f32 %v3048, %v3049
      %v3051 = vrot.slane %v3050, 2
      %v3052 = vmax.f32 %v3050, %v3051
      %v3053 = vrot.slane %v3052, 1
      %v3054 = vmax.f32 %v3052, %v3053
      %v3055 = vsel %vm2451, %v2329, -inf
      %v3056 = vsel %vm2451, %v2330, -inf
      %v3057 = vmax.f32 %v3055, %v3056
      %v3058 = vrot.slane %v3057, 4
      %v3059 = vmax.f32 %v3057, %v3058
      %v3060 = vrot.slane %v3059, 2
      %v3061 = vmax.f32 %v3059, %v3060
      %v3062 = vrot.slane %v3061, 1
      %v3063 = vmax.f32 %v3061, %v3062
      %v3064 = vsel %vm2451, %v2331, -inf
      %v3065 = vsel %vm2451, %v2332, -inf
      %v3066 = vmax.f32 %v3064, %v3065
      %v3067 = vrot.slane %v3066, 4
      %v3068 = vmax.f32 %v3066, %v3067
      %v3069 = vrot.slane %v3068, 2
      %v3070 = vmax.f32 %v3068, %v3069
      %v3071 = vrot.slane %v3070, 1
      %v3072 = vmax.f32 %v3070, %v3071
      %v3073 = vsel %vm2451, %v2333, -inf
      %v3074 = vsel %vm2451, %v2334, -inf
      %v3075 = vmax.f32 %v3073, %v3074
      %v3076 = vrot.slane %v3075, 4
      %v3077 = vmax.f32 %v3075, %v3076
      %v3078 = vrot.slane %v3077, 2
      %v3079 = vmax.f32 %v3077, %v3078
      %v3080 = vrot.slane %v3079, 1
      %v3081 = vmax.f32 %v3079, %v3080
      %v3082 = vsel %vm2451, %v2335, -inf
      %v3083 = vsel %vm2451, %v2336, -inf
      %v3084 = vmax.f32 %v3082, %v3083
      %v3085 = vrot.slane %v3084, 4
      %v3086 = vmax.f32 %v3084, %v3085
      %v3087 = vrot.slane %v3086, 2
      %v3088 = vmax.f32 %v3086, %v3087
      %v3089 = vrot.slane %v3088, 1
      %v3090 = vmax.f32 %v3088, %v3089
      %v3091 = vsel %vm2451, %v2337, -inf
      %v3092 = vsel %vm2451, %v2338, -inf
      %v3093 = vmax.f32 %v3091, %v3092
      %v3094 = vrot.slane %v3093, 4
      %v3095 = vmax.f32 %v3093, %v3094
      %v3096 = vrot.slane %v3095, 2
      %v3097 = vmax.f32 %v3095, %v3096
      %v3098 = vrot.slane %v3097, 1
      %v3099 = vmax.f32 %v3097, %v3098
      %v3100 = vsel %vm2451, %v2339, -inf
      %v3101 = vsel %vm2451, %v2340, -inf
      %v3102 = vmax.f32 %v3100, %v3101
      %v3103 = vrot.slane %v3102, 4
      %v3104 = vmax.f32 %v3102, %v3103
      %v3105 = vrot.slane %v3104, 2
      %v3106 = vmax.f32 %v3104, %v3105
      %v3107 = vrot.slane %v3106, 1
      %v3108 = vmax.f32 %v3106, %v3107
      %v3109 = vsel %vm2451, %v2341, -inf
      %v3110 = vsel %vm2451, %v2342, -inf
      %v3111 = vmax.f32 %v3109, %v3110
      %v3112 = vrot.slane %v3111, 4
      %v3113 = vmax.f32 %v3111, %v3112
      %v3114 = vrot.slane %v3113, 2
      %v3115 = vmax.f32 %v3113, %v3114
      %v3116 = vrot.slane %v3115, 1
      %v3117 = vmax.f32 %v3115, %v3116
      %v3118 = vsel %vm2451, %v2343, -inf
      %v3119 = vsel %vm2451, %v2344, -inf
      %v3120 = vmax.f32 %v3118, %v3119
      %v3121 = vrot.slane %v3120, 4
      %v3122 = vmax.f32 %v3120, %v3121
      %v3123 = vrot.slane %v3122, 2
      %v3124 = vmax.f32 %v3122, %v3123
      %v3125 = vrot.slane %v3124, 1
      %v3126 = vmax.f32 %v3124, %v3125
      %v3127 = vsel %vm2451, %v2345, -inf
      %v3128 = vsel %vm2451, %v2346, -inf
      %v3129 = vmax.f32 %v3127, %v3128
      %v3130 = vrot.slane %v3129, 4
      %v3131 = vmax.f32 %v3129, %v3130
      %v3132 = vrot.slane %v3131, 2
      %v3133 = vmax.f32 %v3131, %v3132
      %v3134 = vrot.slane %v3133, 1
      %v3135 = vmax.f32 %v3133, %v3134
      %v3136 = vsel %vm2451, %v2347, -inf
      %v3137 = vsel %vm2451, %v2348, -inf
      %v3138 = vmax.f32 %v3136, %v3137
      %v3139 = vrot.slane %v3138, 4
      %v3140 = vmax.f32 %v3138, %v3139
      %v3141 = vrot.slane %v3140, 2
      %v3142 = vmax.f32 %v3140, %v3141
      %v3143 = vrot.slane %v3142, 1
      %v3144 = vmax.f32 %v3142, %v3143
      %v3145 = vsel %vm2451, %v2349, -inf
      %v3146 = vsel %vm2451, %v2350, -inf
      %v3147 = vmax.f32 %v3145, %v3146
      %v3148 = vrot.slane %v3147, 4
      %v3149 = vmax.f32 %v3147, %v3148
      %v3150 = vrot.slane %v3149, 2
      %v3151 = vmax.f32 %v3149, %v3150
      %v3152 = vrot.slane %v3151, 1
      %v3153 = vmax.f32 %v3151, %v3152
      %v3154 = vsel %vm2451, %v2351, -inf
      %v3155 = vsel %vm2451, %v2352, -inf
      %v3156 = vmax.f32 %v3154, %v3155
      %v3157 = vrot.slane %v3156, 4
      %v3158 = vmax.f32 %v3156, %v3157
      %v3159 = vrot.slane %v3158, 2
      %v3160 = vmax.f32 %v3158, %v3159
      %v3161 = vrot.slane %v3160, 1
      %v3162 = vmax.f32 %v3160, %v3161
      %v3163 = vsel %vm2451, %v2353, -inf
      %v3164 = vsel %vm2451, %v2354, -inf
      %v3165 = vmax.f32 %v3163, %v3164
      %v3166 = vrot.slane %v3165, 4
      %v3167 = vmax.f32 %v3165, %v3166
      %v3168 = vrot.slane %v3167, 2
      %v3169 = vmax.f32 %v3167, %v3168
      %v3170 = vrot.slane %v3169, 1
      %v3171 = vmax.f32 %v3169, %v3170
      %v3172 = vsel %vm2451, %v2355, -inf
      %v3173 = vsel %vm2451, %v2356, -inf
      %v3174 = vmax.f32 %v3172, %v3173
      %v3175 = vrot.slane %v3174, 4
      %v3176 = vmax.f32 %v3174, %v3175
      %v3177 = vrot.slane %v3176, 2
      %v3178 = vmax.f32 %v3176, %v3177
      %v3179 = vrot.slane %v3178, 1
      %v3180 = vmax.f32 %v3178, %v3179
      %v3181 = vsel %vm2451, %v2357, -inf
      %v3182 = vsel %vm2451, %v2358, -inf
      %v3183 = vmax.f32 %v3181, %v3182
      %v3184 = vrot.slane %v3183, 4
      %v3185 = vmax.f32 %v3183, %v3184
      %v3186 = vrot.slane %v3185, 2
      %v3187 = vmax.f32 %v3185, %v3186
      %v3188 = vrot.slane %v3187, 1
      %v3189 = vmax.f32 %v3187, %v3188
      %v3190 = vsel %vm2451, %v2359, -inf
      %v3191 = vsel %vm2451, %v2360, -inf
      %v3192 = vmax.f32 %v3190, %v3191
      %v3193 = vrot.slane %v3192, 4
      %v3194 = vmax.f32 %v3192, %v3193
      %v3195 = vrot.slane %v3194, 2
      %v3196 = vmax.f32 %v3194, %v3195
      %v3197 = vrot.slane %v3196, 1
      %v3198 = vmax.f32 %v3196, %v3197
      %v3199 = vsel %vm2451, %v2361, -inf
      %v3200 = vsel %vm2451, %v2362, -inf
      %v3201 = vmax.f32 %v3199, %v3200
      %v3202 = vrot.slane %v3201, 4
      %v3203 = vmax.f32 %v3201, %v3202
      %v3204 = vrot.slane %v3203, 2
      %v3205 = vmax.f32 %v3203, %v3204
      %v3206 = vrot.slane %v3205, 1
      %v3207 = vmax.f32 %v3205, %v3206
      %v3208 = vsel %vm2451, %v2363, -inf
      %v3209 = vsel %vm2451, %v2364, -inf
      %v3210 = vmax.f32 %v3208, %v3209
      %v3211 = vrot.slane %v3210, 4
      %v3212 = vmax.f32 %v3210, %v3211
      %v3213 = vrot.slane %v3212, 2
      %v3214 = vmax.f32 %v3212, %v3213
      %v3215 = vrot.slane %v3214, 1
      %v3216 = vmax.f32 %v3214, %v3215
      %v3217 = vsel %vm2451, %v2365, -inf
      %v3218 = vsel %vm2451, %v2366, -inf
      %v3219 = vmax.f32 %v3217, %v3218
      %v3220 = vrot.slane %v3219, 4
      %v3221 = vmax.f32 %v3219, %v3220
      %v3222 = vrot.slane %v3221, 2
      %v3223 = vmax.f32 %v3221, %v3222
      %v3224 = vrot.slane %v3223, 1
      %v3225 = vmax.f32 %v3223, %v3224
      %v3226 = vsel %vm2451, %v2367, -inf
      %v3227 = vsel %vm2451, %v2368, -inf
      %v3228 = vmax.f32 %v3226, %v3227
      %v3229 = vrot.slane %v3228, 4
      %v3230 = vmax.f32 %v3228, %v3229
      %v3231 = vrot.slane %v3230, 2
      %v3232 = vmax.f32 %v3230, %v3231
      %v3233 = vrot.slane %v3232, 1
      %v3234 = vmax.f32 %v3232, %v3233
      %v3235 = vsel %vm2451, %v2369, -inf
      %v3236 = vsel %vm2451, %v2370, -inf
      %v3237 = vmax.f32 %v3235, %v3236
      %v3238 = vrot.slane %v3237, 4
      %v3239 = vmax.f32 %v3237, %v3238
      %v3240 = vrot.slane %v3239, 2
      %v3241 = vmax.f32 %v3239, %v3240
      %v3242 = vrot.slane %v3241, 1
      %v3243 = vmax.f32 %v3241, %v3242
      %v3244 = vsel %vm2451, %v2371, -inf
      %v3245 = vsel %vm2451, %v2372, -inf
      %v3246 = vmax.f32 %v3244, %v3245
      %v3247 = vrot.slane %v3246, 4
      %v3248 = vmax.f32 %v3246, %v3247
      %v3249 = vrot.slane %v3248, 2
      %v3250 = vmax.f32 %v3248, %v3249
      %v3251 = vrot.slane %v3250, 1
      %v3252 = vmax.f32 %v3250, %v3251
      %v3253 = vsel %vm2451, %v2373, -inf
      %v3254 = vsel %vm2451, %v2374, -inf
      %v3255 = vmax.f32 %v3253, %v3254
      %v3256 = vrot.slane %v3255, 4
      %v3257 = vmax.f32 %v3255, %v3256
      %v3258 = vrot.slane %v3257, 2
      %v3259 = vmax.f32 %v3257, %v3258
      %v3260 = vrot.slane %v3259, 1
      %v3261 = vmax.f32 %v3259, %v3260
      %v3262 = vsel %vm2451, %v2375, -inf
      %v3263 = vsel %vm2451, %v2376, -inf
      %v3264 = vmax.f32 %v3262, %v3263
      %v3265 = vrot.slane %v3264, 4
      %v3266 = vmax.f32 %v3264, %v3265
      %v3267 = vrot.slane %v3266, 2
      %v3268 = vmax.f32 %v3266, %v3267
      %v3269 = vrot.slane %v3268, 1
      %v3270 = vmax.f32 %v3268, %v3269
      %v3271 = vsel %vm2451, %v2377, -inf
      %v3272 = vsel %vm2451, %v2378, -inf
      %v3273 = vmax.f32 %v3271, %v3272
      %v3274 = vrot.slane %v3273, 4
      %v3275 = vmax.f32 %v3273, %v3274
      %v3276 = vrot.slane %v3275, 2
      %v3277 = vmax.f32 %v3275, %v3276
      %v3278 = vrot.slane %v3277, 1
      %v3279 = vmax.f32 %v3277, %v3278
      %v3280 = vsel %vm2451, %v2379, -inf
      %v3281 = vsel %vm2451, %v2380, -inf
      %v3282 = vmax.f32 %v3280, %v3281
      %v3283 = vrot.slane %v3282, 4
      %v3284 = vmax.f32 %v3282, %v3283
      %v3285 = vrot.slane %v3284, 2
      %v3286 = vmax.f32 %v3284, %v3285
      %v3287 = vrot.slane %v3286, 1
      %v3288 = vmax.f32 %v3286, %v3287
      %v3289 = vsel %vm2451, %v2381, -inf
      %v3290 = vsel %vm2451, %v2382, -inf
      %v3291 = vmax.f32 %v3289, %v3290
      %v3292 = vrot.slane %v3291, 4
      %v3293 = vmax.f32 %v3291, %v3292
      %v3294 = vrot.slane %v3293, 2
      %v3295 = vmax.f32 %v3293, %v3294
      %v3296 = vrot.slane %v3295, 1
      %v3297 = vmax.f32 %v3295, %v3296
      %v3298 = vsel %vm2451, %v2383, -inf
      %v3299 = vsel %vm2451, %v2384, -inf
      %v3300 = vmax.f32 %v3298, %v3299
      %v3301 = vrot.slane %v3300, 4
      %v3302 = vmax.f32 %v3300, %v3301
      %v3303 = vrot.slane %v3302, 2
      %v3304 = vmax.f32 %v3302, %v3303
      %v3305 = vrot.slane %v3304, 1
      %v3306 = vmax.f32 %v3304, %v3305
      %v3307 = vsel %vm2451, %v2385, -inf
      %v3308 = vsel %vm2451, %v2386, -inf
      %v3309 = vmax.f32 %v3307, %v3308
      %v3310 = vrot.slane %v3309, 4
      %v3311 = vmax.f32 %v3309, %v3310
      %v3312 = vrot.slane %v3311, 2
      %v3313 = vmax.f32 %v3311, %v3312
      %v3314 = vrot.slane %v3313, 1
      %v3315 = vmax.f32 %v3313, %v3314
      %v3316 = vsel %vm2451, %v2387, -inf
      %v3317 = vsel %vm2451, %v2388, -inf
      %v3318 = vmax.f32 %v3316, %v3317
      %v3319 = vrot.slane %v3318, 4
      %v3320 = vmax.f32 %v3318, %v3319
      %v3321 = vrot.slane %v3320, 2
      %v3322 = vmax.f32 %v3320, %v3321
      %v3323 = vrot.slane %v3322, 1
      %v3324 = vmax.f32 %v3322, %v3323
      %v3325 = vsel %vm2451, %v2389, -inf
      %v3326 = vsel %vm2451, %v2390, -inf
      %v3327 = vmax.f32 %v3325, %v3326
      %v3328 = vrot.slane %v3327, 4
      %v3329 = vmax.f32 %v3327, %v3328
      %v3330 = vrot.slane %v3329, 2
      %v3331 = vmax.f32 %v3329, %v3330
      %v3332 = vrot.slane %v3331, 1
      %v3333 = vmax.f32 %v3331, %v3332
      %v3334 = vsel %vm2451, %v2391, -inf
      %v3335 = vsel %vm2451, %v2392, -inf
      %v3336 = vmax.f32 %v3334, %v3335
      %v3337 = vrot.slane %v3336, 4
      %v3338 = vmax.f32 %v3336, %v3337
      %v3339 = vrot.slane %v3338, 2
      %v3340 = vmax.f32 %v3338, %v3339
      %v3341 = vrot.slane %v3340, 1
      %v3342 = vmax.f32 %v3340, %v3341
      %v3343 = vsel %vm2451, %v2393, -inf
      %v3344 = vsel %vm2451, %v2394, -inf
      %v3345 = vmax.f32 %v3343, %v3344
      %v3346 = vrot.slane %v3345, 4
      %v3347 = vmax.f32 %v3345, %v3346
      %v3348 = vrot.slane %v3347, 2
      %v3349 = vmax.f32 %v3347, %v3348
      %v3350 = vrot.slane %v3349, 1
      %v3351 = vmax.f32 %v3349, %v3350
      %v3352 = vsel %vm2451, %v2395, -inf
      %v3353 = vsel %vm2451, %v2396, -inf
      %v3354 = vmax.f32 %v3352, %v3353
      %v3355 = vrot.slane %v3354, 4
      %v3356 = vmax.f32 %v3354, %v3355
      %v3357 = vrot.slane %v3356, 2
      %v3358 = vmax.f32 %v3356, %v3357
      %v3359 = vrot.slane %v3358, 1
      %v3360 = vmax.f32 %v3358, %v3359
      %v3361 = vsel %vm2451, %v2397, -inf
      %v3362 = vsel %vm2451, %v2398, -inf
      %v3363 = vmax.f32 %v3361, %v3362
      %v3364 = vrot.slane %v3363, 4
      %v3365 = vmax.f32 %v3363, %v3364
      %v3366 = vrot.slane %v3365, 2
      %v3367 = vmax.f32 %v3365, %v3366
      %v3368 = vrot.slane %v3367, 1
      %v3369 = vmax.f32 %v3367, %v3368
      %v3370 = vsel %vm2451, %v2399, -inf
      %v3371 = vsel %vm2451, %v2400, -inf
      %v3372 = vmax.f32 %v3370, %v3371
      %v3373 = vrot.slane %v3372, 4
      %v3374 = vmax.f32 %v3372, %v3373
      %v3375 = vrot.slane %v3374, 2
      %v3376 = vmax.f32 %v3374, %v3375
      %v3377 = vrot.slane %v3376, 1
      %v3378 = vmax.f32 %v3376, %v3377
      %v3379 = vsel %vm2451, %v2401, -inf
      %v3380 = vsel %vm2451, %v2402, -inf
      %v3381 = vmax.f32 %v3379, %v3380
      %v3382 = vrot.slane %v3381, 4
      %v3383 = vmax.f32 %v3381, %v3382
      %v3384 = vrot.slane %v3383, 2
      %v3385 = vmax.f32 %v3383, %v3384
      %v3386 = vrot.slane %v3385, 1
      %v3387 = vmax.f32 %v3385, %v3386
      %v3388 = vsel %vm2451, %v2403, -inf
      %v3389 = vsel %vm2451, %v2404, -inf
      %v3390 = vmax.f32 %v3388, %v3389
      %v3391 = vrot.slane %v3390, 4
      %v3392 = vmax.f32 %v3390, %v3391
      %v3393 = vrot.slane %v3392, 2
      %v3394 = vmax.f32 %v3392, %v3393
      %v3395 = vrot.slane %v3394, 1
      %v3396 = vmax.f32 %v3394, %v3395
      %v3397 = vsel %vm2451, %v2405, -inf
      %v3398 = vsel %vm2451, %v2406, -inf
      %v3399 = vmax.f32 %v3397, %v3398
      %v3400 = vrot.slane %v3399, 4
      %v3401 = vmax.f32 %v3399, %v3400
      %v3402 = vrot.slane %v3401, 2
      %v3403 = vmax.f32 %v3401, %v3402
      %v3404 = vrot.slane %v3403, 1
      %v3405 = vmax.f32 %v3403, %v3404
      %v3406 = vsel %vm2451, %v2407, -inf
      %v3407 = vsel %vm2451, %v2408, -inf
      %v3408 = vmax.f32 %v3406, %v3407
      %v3409 = vrot.slane %v3408, 4
      %v3410 = vmax.f32 %v3408, %v3409
      %v3411 = vrot.slane %v3410, 2
      %v3412 = vmax.f32 %v3410, %v3411
      %v3413 = vrot.slane %v3412, 1
      %v3414 = vmax.f32 %v3412, %v3413
      %v3415 = vsel %vm2451, %v2409, -inf
      %v3416 = vsel %vm2451, %v2410, -inf
      %v3417 = vmax.f32 %v3415, %v3416
      %v3418 = vrot.slane %v3417, 4
      %v3419 = vmax.f32 %v3417, %v3418
      %v3420 = vrot.slane %v3419, 2
      %v3421 = vmax.f32 %v3419, %v3420
      %v3422 = vrot.slane %v3421, 1
      %v3423 = vmax.f32 %v3421, %v3422
      %v3424 = vsel %vm2451, %v2411, -inf
      %v3425 = vsel %vm2451, %v2412, -inf
      %v3426 = vmax.f32 %v3424, %v3425
      %v3427 = vrot.slane %v3426, 4
      %v3428 = vmax.f32 %v3426, %v3427
      %v3429 = vrot.slane %v3428, 2
      %v3430 = vmax.f32 %v3428, %v3429
      %v3431 = vrot.slane %v3430, 1
      %v3432 = vmax.f32 %v3430, %v3431
      %v3433 = vsel %vm2451, %v2413, -inf
      %v3434 = vsel %vm2451, %v2414, -inf
      %v3435 = vmax.f32 %v3433, %v3434
      %v3436 = vrot.slane %v3435, 4
      %v3437 = vmax.f32 %v3435, %v3436
      %v3438 = vrot.slane %v3437, 2
      %v3439 = vmax.f32 %v3437, %v3438
      %v3440 = vrot.slane %v3439, 1
      %v3441 = vmax.f32 %v3439, %v3440
      %v3442 = vsel %vm2451, %v2415, -inf
      %v3443 = vsel %vm2451, %v2416, -inf
      %v3444 = vmax.f32 %v3442, %v3443
      %v3445 = vrot.slane %v3444, 4
      %v3446 = vmax.f32 %v3444, %v3445
      %v3447 = vrot.slane %v3446, 2
      %v3448 = vmax.f32 %v3446, %v3447
      %v3449 = vrot.slane %v3448, 1
      %v3450 = vmax.f32 %v3448, %v3449
      %v3451 = vsel %vm2451, %v2417, -inf
      %v3452 = vsel %vm2451, %v2418, -inf
      %v3453 = vmax.f32 %v3451, %v3452
      %v3454 = vrot.slane %v3453, 4
      %v3455 = vmax.f32 %v3453, %v3454
      %v3456 = vrot.slane %v3455, 2
      %v3457 = vmax.f32 %v3455, %v3456
      %v3458 = vrot.slane %v3457, 1
      %v3459 = vmax.f32 %v3457, %v3458
      %v3460 = vsel %vm2451, %v2419, -inf
      %v3461 = vsel %vm2451, %v2420, -inf
      %v3462 = vmax.f32 %v3460, %v3461
      %v3463 = vrot.slane %v3462, 4
      %v3464 = vmax.f32 %v3462, %v3463
      %v3465 = vrot.slane %v3464, 2
      %v3466 = vmax.f32 %v3464, %v3465
      %v3467 = vrot.slane %v3466, 1
      %v3468 = vmax.f32 %v3466, %v3467
      %v3469 = vsel %vm2451, %v2421, -inf
      %v3470 = vsel %vm2451, %v2422, -inf
      %v3471 = vmax.f32 %v3469, %v3470
      %v3472 = vrot.slane %v3471, 4
      %v3473 = vmax.f32 %v3471, %v3472
      %v3474 = vrot.slane %v3473, 2
      %v3475 = vmax.f32 %v3473, %v3474
      %v3476 = vrot.slane %v3475, 1
      %v3477 = vmax.f32 %v3475, %v3476
      %v3478 = vsel %vm2451, %v2423, -inf
      %v3479 = vsel %vm2451, %v2424, -inf
      %v3480 = vmax.f32 %v3478, %v3479
      %v3481 = vrot.slane %v3480, 4
      %v3482 = vmax.f32 %v3480, %v3481
      %v3483 = vrot.slane %v3482, 2
      %v3484 = vmax.f32 %v3482, %v3483
      %v3485 = vrot.slane %v3484, 1
      %v3486 = vmax.f32 %v3484, %v3485
      %v3487 = vsel %vm2451, %v2425, -inf
      %v3488 = vsel %vm2451, %v2426, -inf
      %v3489 = vmax.f32 %v3487, %v3488
      %v3490 = vrot.slane %v3489, 4
      %v3491 = vmax.f32 %v3489, %v3490
      %v3492 = vrot.slane %v3491, 2
      %v3493 = vmax.f32 %v3491, %v3492
      %v3494 = vrot.slane %v3493, 1
      %v3495 = vmax.f32 %v3493, %v3494
      %v3496 = vsel %vm2451, %v2427, -inf
      %v3497 = vsel %vm2451, %v2428, -inf
      %v3498 = vmax.f32 %v3496, %v3497
      %v3499 = vrot.slane %v3498, 4
      %v3500 = vmax.f32 %v3498, %v3499
      %v3501 = vrot.slane %v3500, 2
      %v3502 = vmax.f32 %v3500, %v3501
      %v3503 = vrot.slane %v3502, 1
      %v3504 = vmax.f32 %v3502, %v3503
      %v3505 = vsel %vm2451, %v2429, -inf
      %v3506 = vsel %vm2451, %v2430, -inf
      %v3507 = vmax.f32 %v3505, %v3506
      %v3508 = vrot.slane %v3507, 4
      %v3509 = vmax.f32 %v3507, %v3508
      %v3510 = vrot.slane %v3509, 2
      %v3511 = vmax.f32 %v3509, %v3510
      %v3512 = vrot.slane %v3511, 1
      %v3513 = vmax.f32 %v3511, %v3512
      %v3514 = vsel %vm2451, %v2431, -inf
      %v3515 = vsel %vm2451, %v2432, -inf
      %v3516 = vmax.f32 %v3514, %v3515
      %v3517 = vrot.slane %v3516, 4
      %v3518 = vmax.f32 %v3516, %v3517
      %v3519 = vrot.slane %v3518, 2
      %v3520 = vmax.f32 %v3518, %v3519
      %v3521 = vrot.slane %v3520, 1
      %v3522 = vmax.f32 %v3520, %v3521
      %v3523 = vsel %vm2451, %v2433, -inf
      %v3524 = vsel %vm2451, %v2434, -inf
      %v3525 = vmax.f32 %v3523, %v3524
      %v3526 = vrot.slane %v3525, 4
      %v3527 = vmax.f32 %v3525, %v3526
      %v3528 = vrot.slane %v3527, 2
      %v3529 = vmax.f32 %v3527, %v3528
      %v3530 = vrot.slane %v3529, 1
      %v3531 = vmax.f32 %v3529, %v3530
      %v3532 = vsel %vm2451, %v2435, -inf
      %v3533 = vsel %vm2451, %v2436, -inf
      %v3534 = vmax.f32 %v3532, %v3533
      %v3535 = vrot.slane %v3534, 4
      %v3536 = vmax.f32 %v3534, %v3535
      %v3537 = vrot.slane %v3536, 2
      %v3538 = vmax.f32 %v3536, %v3537
      %v3539 = vrot.slane %v3538, 1
      %v3540 = vmax.f32 %v3538, %v3539
      %v3541 = vsel %vm2451, %v2437, -inf
      %v3542 = vsel %vm2451, %v2438, -inf
      %v3543 = vmax.f32 %v3541, %v3542
      %v3544 = vrot.slane %v3543, 4
      %v3545 = vmax.f32 %v3543, %v3544
      %v3546 = vrot.slane %v3545, 2
      %v3547 = vmax.f32 %v3545, %v3546
      %v3548 = vrot.slane %v3547, 1
      %v3549 = vmax.f32 %v3547, %v3548
      %v3550 = vsel %vm2451, %v2439, -inf
      %v3551 = vsel %vm2451, %v2440, -inf
      %v3552 = vmax.f32 %v3550, %v3551
      %v3553 = vrot.slane %v3552, 4
      %v3554 = vmax.f32 %v3552, %v3553
      %v3555 = vrot.slane %v3554, 2
      %v3556 = vmax.f32 %v3554, %v3555
      %v3557 = vrot.slane %v3556, 1
      %v3558 = vmax.f32 %v3556, %v3557
      %v3559 = vsel %vm2451, %v2441, -inf
      %v3560 = vsel %vm2451, %v2442, -inf
      %v3561 = vmax.f32 %v3559, %v3560
      %v3562 = vrot.slane %v3561, 4
      %v3563 = vmax.f32 %v3561, %v3562
      %v3564 = vrot.slane %v3563, 2
      %v3565 = vmax.f32 %v3563, %v3564
      %v3566 = vrot.slane %v3565, 1
      %v3567 = vmax.f32 %v3565, %v3566
      %v3568 = vsel %vm2451, %v2443, -inf
      %v3569 = vsel %vm2451, %v2444, -inf
      %v3570 = vmax.f32 %v3568, %v3569
      %v3571 = vrot.slane %v3570, 4
      %v3572 = vmax.f32 %v3570, %v3571
      %v3573 = vrot.slane %v3572, 2
      %v3574 = vmax.f32 %v3572, %v3573
      %v3575 = vrot.slane %v3574, 1
      %v3576 = vmax.f32 %v3574, %v3575
      %v3577 = vsel %vm2451, %v2445, -inf
      %v3578 = vsel %vm2451, %v2446, -inf
      %v3579 = vmax.f32 %v3577, %v3578
      %v3580 = vrot.slane %v3579, 4
      %v3581 = vmax.f32 %v3579, %v3580
      %v3582 = vrot.slane %v3581, 2
      %v3583 = vmax.f32 %v3581, %v3582
      %v3584 = vrot.slane %v3583, 1
      %v3585 = vmax.f32 %v3583, %v3584
      %v3586 = vsel %vm2451, %v2447, -inf
      %v3587 = vsel %vm2451, %v2448, -inf
      %v3588 = vmax.f32 %v3586, %v3587
      %v3589 = vrot.slane %v3588, 4
      %v3590 = vmax.f32 %v3588, %v3589
      %v3591 = vrot.slane %v3590, 2
      %v3592 = vmax.f32 %v3590, %v3591
      %v3593 = vrot.slane %v3592, 1
      %v3594 = vmax.f32 %v3592, %v3593
      %v3595 = vsel %vm2451, %v2449, -inf
      %v3596 = vsel %vm2451, %v2450, -inf
      %v3597 = vmax.f32 %v3595, %v3596
      %v3598 = vrot.slane %v3597, 4
      %v3599 = vmax.f32 %v3597, %v3598
      %v3600 = vrot.slane %v3599, 2
      %v3601 = vmax.f32 %v3599, %v3600
      %v3602 = vrot.slane %v3601, 1
      %v3603 = vmax.f32 %v3601, %v3602
      %vm3732 = vcmask 1041409
      %v3733 = vsel %vm3732, %v2469, %v2460
      %vm3734 = vcmask 1042434
      %v3735 = vsel %vm3734, %v2478, %v3733
      %vm3736 = vcmask 1043459
      %v3737 = vsel %vm3736, %v2487, %v3735
      %vm3738 = vcmask 1044484
      %v3739 = vsel %vm3738, %v2496, %v3737
      %vm3740 = vcmask 1045509
      %v3741 = vsel %vm3740, %v2505, %v3739
      %vm3742 = vcmask 1046534
      %v3743 = vsel %vm3742, %v2514, %v3741
      %vm3744 = vcmask 1047559
      %v3745 = vsel %vm3744, %v2523, %v3743
      %v3746 = vsel %vm3732, %v2541, %v2532
      %v3747 = vsel %vm3734, %v2550, %v3746
      %v3748 = vsel %vm3736, %v2559, %v3747
      %v3749 = vsel %vm3738, %v2568, %v3748
      %v3750 = vsel %vm3740, %v2577, %v3749
      %v3751 = vsel %vm3742, %v2586, %v3750
      %v3752 = vsel %vm3744, %v2595, %v3751
      %v3753 = vsel %vm3732, %v2613, %v2604
      %v3754 = vsel %vm3734, %v2622, %v3753
      %v3755 = vsel %vm3736, %v2631, %v3754
      %v3756 = vsel %vm3738, %v2640, %v3755
      %v3757 = vsel %vm3740, %v2649, %v3756
      %v3758 = vsel %vm3742, %v2658, %v3757
      %v3759 = vsel %vm3744, %v2667, %v3758
      %v3760 = vsel %vm3732, %v2685, %v2676
      %v3761 = vsel %vm3734, %v2694, %v3760
      %v3762 = vsel %vm3736, %v2703, %v3761
      %v3763 = vsel %vm3738, %v2712, %v3762
      %v3764 = vsel %vm3740, %v2721, %v3763
      %v3765 = vsel %vm3742, %v2730, %v3764
      %v3766 = vsel %vm3744, %v2739, %v3765
      %v3767 = vsel %vm3732, %v2757, %v2748
      %v3768 = vsel %vm3734, %v2766, %v3767
      %v3769 = vsel %vm3736, %v2775, %v3768
      %v3770 = vsel %vm3738, %v2784, %v3769
      %v3771 = vsel %vm3740, %v2793, %v3770
      %v3772 = vsel %vm3742, %v2802, %v3771
      %v3773 = vsel %vm3744, %v2811, %v3772
      %v3774 = vsel %vm3732, %v2829, %v2820
      %v3775 = vsel %vm3734, %v2838, %v3774
      %v3776 = vsel %vm3736, %v2847, %v3775
      %v3777 = vsel %vm3738, %v2856, %v3776
      %v3778 = vsel %vm3740, %v2865, %v3777
      %v3779 = vsel %vm3742, %v2874, %v3778
      %v3780 = vsel %vm3744, %v2883, %v3779
      %v3781 = vsel %vm3732, %v2901, %v2892
      %v3782 = vsel %vm3734, %v2910, %v3781
      %v3783 = vsel %vm3736, %v2919, %v3782
      %v3784 = vsel %vm3738, %v2928, %v3783
      %v3785 = vsel %vm3740, %v2937, %v3784
      %v3786 = vsel %vm3742, %v2946, %v3785
      %v3787 = vsel %vm3744, %v2955, %v3786
      %v3788 = vsel %vm3732, %v2973, %v2964
      %v3789 = vsel %vm3734, %v2982, %v3788
      %v3790 = vsel %vm3736, %v2991, %v3789
      %v3791 = vsel %vm3738, %v3000, %v3790
      %v3792 = vsel %vm3740, %v3009, %v3791
      %v3793 = vsel %vm3742, %v3018, %v3792
      %v3794 = vsel %vm3744, %v3027, %v3793
      %v3795 = vsel %vm3732, %v3045, %v3036
      %v3796 = vsel %vm3734, %v3054, %v3795
      %v3797 = vsel %vm3736, %v3063, %v3796
      %v3798 = vsel %vm3738, %v3072, %v3797
      %v3799 = vsel %vm3740, %v3081, %v3798
      %v3800 = vsel %vm3742, %v3090, %v3799
      %v3801 = vsel %vm3744, %v3099, %v3800
      %v3802 = vsel %vm3732, %v3117, %v3108
      %v3803 = vsel %vm3734, %v3126, %v3802
      %v3804 = vsel %vm3736, %v3135, %v3803
      %v3805 = vsel %vm3738, %v3144, %v3804
      %v3806 = vsel %vm3740, %v3153, %v3805
      %v3807 = vsel %vm3742, %v3162, %v3806
      %v3808 = vsel %vm3744, %v3171, %v3807
      %v3809 = vsel %vm3732, %v3189, %v3180
      %v3810 = vsel %vm3734, %v3198, %v3809
      %v3811 = vsel %vm3736, %v3207, %v3810
      %v3812 = vsel %vm3738, %v3216, %v3811
      %v3813 = vsel %vm3740, %v3225, %v3812
      %v3814 = vsel %vm3742, %v3234, %v3813
      %v3815 = vsel %vm3744, %v3243, %v3814
      %v3816 = vsel %vm3732, %v3261, %v3252
      %v3817 = vsel %vm3734, %v3270, %v3816
      %v3818 = vsel %vm3736, %v3279, %v3817
      %v3819 = vsel %vm3738, %v3288, %v3818
      %v3820 = vsel %vm3740, %v3297, %v3819
      %v3821 = vsel %vm3742, %v3306, %v3820
      %v3822 = vsel %vm3744, %v3315, %v3821
      %v3823 = vsel %vm3732, %v3333, %v3324
      %v3824 = vsel %vm3734, %v3342, %v3823
      %v3825 = vsel %vm3736, %v3351, %v3824
      %v3826 = vsel %vm3738, %v3360, %v3825
      %v3827 = vsel %vm3740, %v3369, %v3826
      %v3828 = vsel %vm3742, %v3378, %v3827
      %v3829 = vsel %vm3744, %v3387, %v3828
      %v3830 = vsel %vm3732, %v3405, %v3396
      %v3831 = vsel %vm3734, %v3414, %v3830
      %v3832 = vsel %vm3736, %v3423, %v3831
      %v3833 = vsel %vm3738, %v3432, %v3832
      %v3834 = vsel %vm3740, %v3441, %v3833
      %v3835 = vsel %vm3742, %v3450, %v3834
      %v3836 = vsel %vm3744, %v3459, %v3835
      %v3837 = vsel %vm3732, %v3477, %v3468
      %v3838 = vsel %vm3734, %v3486, %v3837
      %v3839 = vsel %vm3736, %v3495, %v3838
      %v3840 = vsel %vm3738, %v3504, %v3839
      %v3841 = vsel %vm3740, %v3513, %v3840
      %v3842 = vsel %vm3742, %v3522, %v3841
      %v3843 = vsel %vm3744, %v3531, %v3842
      %v3844 = vsel %vm3732, %v3549, %v3540
      %v3845 = vsel %vm3734, %v3558, %v3844
      %v3846 = vsel %vm3736, %v3567, %v3845
      %v3847 = vsel %vm3738, %v3576, %v3846
      %v3848 = vsel %vm3740, %v3585, %v3847
      %v3849 = vsel %vm3742, %v3594, %v3848
      %v3850 = vsel %vm3744, %v3603, %v3849
      %3867 = vst.msk [vmem:[%s227] sm:$0xff] %vm2451, %v3745
      %3868 = vst.msk [vmem:[%s227 + $0x8] sm:$0xff] %vm2451, %v3752
      %3869 = vst.msk [vmem:[%s227 + $0x10] sm:$0xff] %vm2451, %v3759
      %3870 = vst.msk [vmem:[%s227 + $0x18] sm:$0xff] %vm2451, %v3766
      %3871 = vst.msk [vmem:[%s227 + $0x20] sm:$0xff] %vm2451, %v3773
      %3872 = vst.msk [vmem:[%s227 + $0x28] sm:$0xff] %vm2451, %v3780
      %3873 = vst.msk [vmem:[%s227 + $0x30] sm:$0xff] %vm2451, %v3787
      %3874 = vst.msk [vmem:[%s227 + $0x38] sm:$0xff] %vm2451, %v3794
      %3875 = vst.msk [vmem:[%s227 + $0x40] sm:$0xff] %vm2451, %v3801
      %3876 = vst.msk [vmem:[%s227 + $0x48] sm:$0xff] %vm2451, %v3808
      %3877 = vst.msk [vmem:[%s227 + $0x50] sm:$0xff] %vm2451, %v3815
      %3878 = vst.msk [vmem:[%s227 + $0x58] sm:$0xff] %vm2451, %v3822
      %3879 = vst.msk [vmem:[%s227 + $0x60] sm:$0xff] %vm2451, %v3829
      %3880 = vst.msk [vmem:[%s227 + $0x68] sm:$0xff] %vm2451, %v3836
      %3881 = vst.msk [vmem:[%s227 + $0x70] sm:$0xff] %vm2451, %v3843
      %3882 = vst.msk [vmem:[%s227 + $0x78] sm:$0xff] %vm2451, %v3850
      %s3883 = smul.u32 16, %s15
      %p3884 = scmp.lt.s32.totalorder %s3883, 31
      %s3885 = scalar_select %p3884, %s3883, 31
      %s3886 = smul.addr %s3885, 8
      %s3887 = scalar_lea.vmem %s4, %s3886
      // Predicated region
      $region37: #{transition_down_forward.1} parent=35 // pred_check
        %p3888 = pneg %p122
      $region38: #{transition_down_forward.1} parent=35 // pred_check_branch
        %3890 = sbr.rel (%p3888) target = $region40
      $region39: #{transition_down_forward.1} parent=35 // pred_region
        %s3891 = smul.u32 16, %s15
      $region40: #{transition_down_forward.1} parent=35 // pred_fallthru
        _
    $region36: #{transition_down_forward.1} parent=5 // pred_fallthru
      _
    %p3892 = scmp.le.s32.totalorder 2, %s10
    // Predicated region
    $region41: #{transition_down_forward.1} parent=5 // pred_check
      %p3893 = pneg %p3892
    $region42: #{transition_down_forward.1} parent=5 // pred_check_branch
      %3895 = sbr.rel (%p3893) target = $region44
    $region43: #{transition_down_forward.1} parent=5 // pred_region
      %s3896 = ssub.s32 %s10, 2
      // Predicated region
      $region45: #{transition_down_forward.1} parent=43 // pred_check
        %p3897 = pneg %p128
      $region46: #{transition_down_forward.1} parent=43 // pred_check_branch
        %3899 = sbr.rel (%p3897) target = $region48
      $region47: #{transition_down_forward.1} parent=43 // pred_region
        %s3900 = smul.u32 16, %s16
        %p3901 = scmp.lt.s32.totalorder %s3900, 31
        %s3902 = scalar_select %p3901, %s3900, 31
        %s3903 = smul.addr %s3902, 8
        %s3904 = scalar_lea.vmem %s4, %s3903
      $region48: #{transition_down_forward.1} parent=43 // pred_fallthru
        _
    $region44: #{transition_down_forward.1} parent=5 // pred_fallthru
      _
  $region6: #{transition_down_forward.1} parent=0 // loop_footer
    %s14 = sadd.s32 1, %s10
  $region7: #{transition_down_forward.1} parent=0 // loop_footer_branch
    %9 = sbr.rel target = $region3
  $region8: #{transition_down_forward.1} parent=0 // loop_exit
    _

</llo_original>
